<compile_context>
chip_gen: v6e
topology: v6e:2x2x1
jax: 0.10.0
libtpu: 0.0.40
codegen_flags: <defaults>
</compile_context>

<pallas_src>
import functools

import jax
import jax.numpy as jnp
from jax import lax
from jax.experimental import pallas as pl
from jax.experimental.pallas import tpu as pltpu


def _round_up(x, m):
    return ((x + m - 1) // m) * m


def ss_tcn_kernel(*refs, num_layers, T, pad, pad_c, t_sub, apply_input_conv):
    """One batch element: x (Din, T) -> logits (C, T); all convs as MXU matmuls."""
    if apply_input_conv:
        (x_ref, mask_ref, w_in_ref, b_in_ref, wd_ref, bd_ref, w1_ref, b1_ref,
         w_out_ref, b_out_ref, o_ref, h_scr, h_res) = refs
    else:  # input 1x1 conv hoisted to XLA; x_ref already holds (F, T) features
        (x_ref, mask_ref, wd_ref, bd_ref, w1_ref, b1_ref,
         w_out_ref, b_out_ref, o_ref, h_scr, h_res) = refs
        w_in_ref = b_in_ref = None

    f32 = jnp.float32
    cdt = h_scr.dtype            # matmul operand dtype (f32 or bf16)
    Fm = h_scr.shape[0]
    n_sub = T // t_sub

    # Zero ONLY the halo columns the +/-d taps can reach (2*pad columns total)
    # -- unconditionally per grid step; see header note on megacore safety.
    h_scr[:, pad_c - pad:pad_c] = jnp.zeros((Fm, pad), cdt)
    h_scr[:, pad_c + T:pad_c + T + pad] = jnp.zeros((Fm, pad), cdt)

    # Input 1x1 conv (or passthrough when hoisted): writes both the f32
    # residual scratch and the cdt tap slab, sub-tiled along T.
    for s in range(n_sub):
        t0 = s * t_sub
        xb = x_ref[0, :, pl.ds(t0, t_sub)]
        if apply_input_conv:
            h0 = jnp.dot(w_in_ref[...], xb, preferred_element_type=f32) + b_in_ref[...]
            hc = h0.astype(cdt)
        else:
            hc = xb                         # already cdt (cast in the wrapper)
            h0 = xb.astype(f32)
        h_res[:, pl.ds(t0, t_sub)] = h0
        h_scr[:, pl.ds(pad_c + t0, t_sub)] = hc

    # Dilated residual layers, statically unrolled (dilation = 2**i).
    for i in range(num_layers):
        d = 2 ** i
        if i > 0:
            # Refresh the centre slab in one lane-aligned (pad_c % 128 == 0),
            # unmasked F x T store. Must complete before any tap reads of this
            # layer because +/-d reads cross sub-tile boundaries.
            h_scr[:, pl.ds(pad_c, T)] = h_res[...].astype(cdt)
        for s in range(n_sub):
            t0 = s * t_sub
            h_c = h_scr[:, pl.ds(pad_c + t0, t_sub)]         # h[t]
            h_m = h_scr[:, pl.ds(pad_c + t0 - d, t_sub)]     # h[t - d] (zero-padded)
            h_p = h_scr[:, pl.ds(pad_c + t0 + d, t_sub)]     # h[t + d] (zero-padded)
            # Dilated conv as three accumulated dots: no (3F, T) temp.
            z = jnp.dot(wd_ref[i, 1], h_c, preferred_element_type=f32)
            z = z + jnp.dot(wd_ref[i, 0], h_m, preferred_element_type=f32)
            z = z + jnp.dot(wd_ref[i, 2], h_p, preferred_element_type=f32)
            z = jnp.maximum(z + bd_ref[i], 0.0)              # + bias, ReLU
            z = jnp.dot(w1_ref[i], z.astype(cdt), preferred_element_type=f32) + b1_ref[i]
            # TODO(synk): nn.Dropout() treated as identity (eval-mode); train-
            # mode stochastic dropout could use pltpu.prng_random_bits.
            h_res[:, pl.ds(t0, t_sub)] = h_res[:, pl.ds(t0, t_sub)] + z   # residual (f32)

    # Output 1x1 conv + mask; stores are lane-dense along T.
    for s in range(n_sub):
        t0 = s * t_sub
        hb = h_res[:, pl.ds(t0, t_sub)].astype(cdt)
        ob = jnp.dot(w_out_ref[...], hb, preferred_element_type=f32) + b_out_ref[...]
        mb = mask_ref[0, :, pl.ds(t0, t_sub)]                # (1, t_sub) f32
        o_ref[0, :, pl.ds(t0, t_sub)] = (ob * mb).astype(o_ref.dtype)


def ss_tcn_forward(x_nct, mask_nct, kp, *, num_layers, t_sub=None,
                   hoist_input_conv=None):
    """x_nct: (B, dim, T), mask_nct: (B, num_classes, T) -> (B, num_classes, T)."""
    B, D, T = x_nct.shape
    F = kp["w_in"].shape[0]
    C = kp["w_out"].shape[0]
    cdt = jnp.dtype(kp["w_in"].dtype)
    f32 = jnp.float32

    if hoist_input_conv is None:
        # The (1, D, T) input block dominates VMEM only when D >> F; hoisting
        # the input 1x1 conv frees that space (crucial under v7x's 64 MiB) at
        # ~2*F*T extra HBM traffic.
        hoist_input_conv = D > 2 * F

    pad = 2 ** (num_layers - 1)              # max dilation == in-kernel halo
    pad_c = max(128, _round_up(pad, 128))    # lane-aligned centre-slab offset
    Tp = _round_up(pad_c + T + pad, 128)

    if t_sub is None:
        t_sub = T
        for cand in (512, 256, 128):
            if T % cand == 0:
                t_sub = cand
                break
    assert T % t_sub == 0, "t_sub must divide T"

    m = mask_nct[:, 0:1, :].astype(f32)      # only mask row 0 is ever used

    if hoist_input_conv:
        # Input 1x1 conv as a plain XLA matmul: (F, D) @ (B, D, T) -> (B, F, T).
        x_in = (jnp.einsum("fd,bdt->bft", kp["w_in"], x_nct.astype(cdt),
                           preferred_element_type=f32,
                           precision=lax.Precision.HIGHEST)
                + kp["b_in"][None]).astype(cdt)
        d_in = F
    else:
        x_in = x_nct.astype(cdt)             # bf16 path: halves the input DMA
        d_in = D

    kernel = functools.partial(
        ss_tcn_kernel, num_layers=num_layers, T=T, pad=pad, pad_c=pad_c,
        t_sub=t_sub, apply_input_conv=not hoist_input_conv)

    weights = [kp["wd"], kp["bd"], kp["w1"], kp["b1"], kp["w_out"], kp["b_out"]]
    if not hoist_input_conv:
        weights = [kp["w_in"], kp["b_in"]] + weights

    # Advisory cost estimate so XLA can schedule surrounding ops sensibly.
    flops = 2 * B * T * (num_layers * 4 * F * F + C * F)
    if not hoist_input_conv:
        flops += 2 * B * T * F * D
    bytes_accessed = (x_in.size * x_in.dtype.itemsize + m.size * 4
                      + sum(int(w.size) * w.dtype.itemsize for w in weights)
                      + B * C * T * 4)
    cost = pl.CostEstimate(flops=flops, transcendentals=0,
                           bytes_accessed=bytes_accessed)

    # Generation-aware VMEM budget (≈96 MiB on v5e/v6e, ≈48 MiB on v7x).
    try:
        phys_vmem = int(pltpu.get_tpu_info().vmem_capacity_bytes)
    except Exception:
        phys_vmem = 64 * 1024 * 1024         # conservative (v7x per-core size)
    vmem_cap = (phys_vmem * 3) // 4

    def run(single_buffer_weights):
        def wspec(arr):
            shape = arr.shape
            n = len(shape)
            kwargs = {}
            if single_buffer_weights:
                # Weights are grid-invariant: one resident copy is enough.
                kwargs["pipeline_mode"] = pl.Buffered(1)
            return pl.BlockSpec(shape, lambda b, _n=n: (0,) * _n, **kwargs)

        in_specs = [pl.BlockSpec((1, d_in, T), lambda b: (b, 0, 0)),
                    pl.BlockSpec((1, 1, T), lambda b: (b, 0, 0))]
        in_specs += [wspec(w) for w in weights]

        wbytes = sum(int(w.size) * w.dtype.itemsize for w in weights)
        wbytes *= 1 if single_buffer_weights else 2
        io = 2 * (d_in * T * x_in.dtype.itemsize + T * 4 + C * T * 4)
        scr = F * Tp * cdt.itemsize + F * T * 4
        work = 8 * F * t_sub * 4             # per-sub-tile live values headroom
        need = wbytes + io + scr + work
        vmem_limit = int(min(vmem_cap, max(2 * need, 16 * 1024 * 1024)))

        return pl.pallas_call(
            kernel,
            out_shape=jax.ShapeDtypeStruct((B, C, T), jnp.float32),
            grid=(B,),
            in_specs=in_specs,
            out_specs=pl.BlockSpec((1, C, T), lambda b: (b, 0, 0)),
            scratch_shapes=[pltpu.VMEM((F, Tp), cdt),      # padded tap slab
                            pltpu.VMEM((F, T), jnp.float32)],  # f32 residual
            compiler_params=pltpu.CompilerParams(
                dimension_semantics=("parallel",),
                vmem_limit_bytes=vmem_limit),
            cost_estimate=cost,
        )(x_in, m, *weights)

    try:
        return run(True)
    except Exception:
        # pipeline_mode=pl.Buffered(1) unsupported in this jax version -> fall
        # back to default (double-buffered) weight blocks.
        return run(False)


# ---------------- deterministic parameter init (PyTorch Conv1d shapes) --------
def init_params(key, num_layers, num_f_maps, dim, num_classes,
                matmul_dtype=jnp.float32):
    keys = jax.random.split(key, 4 + 4 * num_layers)
    s = 0.1
    w_in_t = jax.random.normal(keys[0], (num_f_maps, dim, 1), jnp.float32) * s
    b_in_t = jax.random.normal(keys[1], (num_f_maps,), jnp.float32) * s
    w_out_t = jax.random.normal(keys[2], (num_classes, num_f_maps, 1), jnp.float32) * s
    b_out_t = jax.random.normal(keys[3], (num_classes,), jnp.float32) * s
    wd_t, bd_t, w1_t, b1_t = [], [], [], []
    for i in range(num_layers):
        k = keys[4 + 4 * i: 8 + 4 * i]
        wd_t.append(jax.random.normal(k[0], (num_f_maps, num_f_maps, 3), jnp.float32) * s)
        bd_t.append(jax.random.normal(k[1], (num_f_maps,), jnp.float32) * s)
        w1_t.append(jax.random.normal(k[2], (num_f_maps, num_f_maps, 1), jnp.float32) * s)
        b1_t.append(jax.random.normal(k[3], (num_f_maps,), jnp.float32) * s)
    wd_s = jnp.stack(wd_t)     # (L, F, F, 3)
    bd_s = jnp.stack(bd_t)     # (L, F)
    w1_s = jnp.stack(w1_t)     # (L, F, F, 1)
    b1_s = jnp.stack(b1_t)     # (L, F)
    torch_p = dict(w_in=w_in_t, b_in=b_in_t, wd=wd_s, bd=bd_s, w1=w1_s, b1=b1_s,
                   w_out=w_out_t, b_out=b_out_t)

    # Kernel layout: left-multiply (Cout, Cin) weights, (Cout, 1) biases, and
    # the dilated conv taps pre-split along a leading axis:
    #   wd[l, k] : (F, F) with k in {0: tap(t-d), 1: tap(t), 2: tap(t+d)}.
    kern_p = dict(
        w_in=w_in_t[:, :, 0].astype(matmul_dtype),                   # (F, D)
        b_in=b_in_t[:, None],                                        # (F, 1)
        wd=jnp.transpose(wd_s, (0, 3, 1, 2)).astype(matmul_dtype),   # (L, 3, F, F)
        bd=bd_s[:, :, None],                                         # (L, F, 1)
        w1=w1_s[:, :, :, 0].astype(matmul_dtype),                    # (L, F, F)
        b1=b1_s[:, :, None],                                         # (L, F, 1)
        w_out=w_out_t[:, :, 0].astype(matmul_dtype),                 # (C, F)
        b_out=b_out_t[:, None],                                      # (C, 1)
    )
    return torch_p, kern_p


# ---------------- pure-JAX reference (mirrors the PyTorch forward) ------------
def _conv1d_ref(x, w, b, dilation=1, padding=0):
    y = lax.conv_general_dilated(
        x, w, window_strides=(1,), padding=[(padding, padding)],
        rhs_dilation=(dilation,), dimension_numbers=('NCH', 'OIH', 'NCH'),
        precision=lax.Precision.HIGHEST)
    return y + b[None, :, None]


def ss_tcn_ref(x, mask, tp, num_layers):
    out = _conv1d_ref(x, tp["w_in"], tp["b_in"])
    for i in range(num_layers):
        d = 2 ** i
        h = jax.nn.relu(_conv1d_ref(out, tp["wd"][i], tp["bd"][i], dilation=d, padding=d))
        h = _conv1d_ref(h, tp["w1"][i], tp["b1"][i])
        out = out + h
    return _conv1d_ref(out, tp["w_out"], tp["b_out"]) * mask[:, 0:1, :]


if __name__ == "__main__":
    def check(name, out, ref, atol, rtol):
        err = float(jnp.max(jnp.abs(out - ref)))
        assert jnp.allclose(out, ref, atol=atol, rtol=rtol), f"{name}: max abs err {err}"

    keys = jax.random.split(jax.random.PRNGKey(0), 6)

    # Case 1: tiny "module-like" shapes; input conv kept in-kernel (D < 2F).
    num_layers, F, D, C, B, T = 3, 32, 8, 6, 2, 16
    x = jax.random.normal(keys[0], (B, D, T), jnp.float32)
    mask = (jax.random.uniform(keys[1], (B, C, T)) > 0.2).astype(jnp.float32)
    torch_p, kern_f32 = init_params(keys[2], num_layers, F, D, C, jnp.float32)
    _, kern_bf16 = init_params(keys[2], num_layers, F, D, C, jnp.bfloat16)
    ref = ss_tcn_ref(x, mask, torch_p, num_layers)
    out = jax.block_until_ready(ss_tcn_forward(x, mask, kern_f32, num_layers=num_layers))
    check("case1 f32", out, ref, 1e-4, 1e-4)
    out = jax.block_until_ready(ss_tcn_forward(x, mask, kern_bf16, num_layers=num_layers))
    check("case1 bf16", out, ref, 5e-2, 5e-2)

    # Case 2: longer sequence exercising T sub-tiling (t_sub=128) and the
    # hoisted-input-conv path (D > 2F).
    num_layers, F, D, C, B, T = 4, 32, 80, 10, 2, 256
    x = jax.random.normal(keys[3], (B, D, T), jnp.float32)
    mask = (jax.random.uniform(keys[4], (B, C, T)) > 0.2).astype(jnp.float32)
    torch_p, kern_f32 = init_params(keys[5], num_layers, F, D, C, jnp.float32)
    _, kern_bf16 = init_params(keys[5], num_layers, F, D, C, jnp.bfloat16)
    ref = ss_tcn_ref(x, mask, torch_p, num_layers)
    out = jax.block_until_ready(
        ss_tcn_forward(x, mask, kern_f32, num_layers=num_layers, t_sub=128))
    check("case2 f32", out, ref, 2e-4, 2e-4)
    out = jax.block_until_ready(
        ss_tcn_forward(x, mask, kern_bf16, num_layers=num_layers, t_sub=128))
    check("case2 bf16", out, ref, 5e-2, 5e-2)

    print("KERNEL_OK")
</pallas_src>

<mosaic_0001>
module attributes {stable_mosaic.version = 11 : i64} {
  func.func @ss_tcn_kernel(%arg0: i32, %arg1: memref<1x8x16xf32, #tpu.memory_space<vmem>>, %arg2: memref<1x1x16xf32, #tpu.memory_space<vmem>>, %arg3: memref<32x8xf32, #tpu.memory_space<vmem>>, %arg4: memref<32x1xf32, #tpu.memory_space<vmem>>, %arg5: memref<3x3x32x32xf32, #tpu.memory_space<vmem>>, %arg6: memref<3x32x1xf32, #tpu.memory_space<vmem>>, %arg7: memref<3x32x32xf32, #tpu.memory_space<vmem>>, %arg8: memref<3x32x1xf32, #tpu.memory_space<vmem>>, %arg9: memref<6x32xf32, #tpu.memory_space<vmem>>, %arg10: memref<6x1xf32, #tpu.memory_space<vmem>>, %arg11: memref<1x6x16xf32, #tpu.memory_space<vmem>>, %arg12: memref<32x256xf32, #tpu.memory_space<vmem>>, %arg13: memref<32x16xf32, #tpu.memory_space<vmem>>) attributes {dimension_semantics = [#tpu.dimension_semantics<parallel>], iteration_bounds = array<i64: 2>, scalar_prefetch = 0 : i64, scratch_operands = 2 : i64, tpu.core_type = #tpu.core_type<tc>, window_params = [{transform_indices = @transform_0, window_bounds = array<i64: 1, 8, 16>}, {transform_indices = @transform_1, window_bounds = array<i64: 1, 1, 16>}, {pipeline_mode = #tpu.pipeline_mode<synchronous>, transform_indices = @transform_2, window_bounds = array<i64: 32, 8>}, {pipeline_mode = #tpu.pipeline_mode<synchronous>, transform_indices = @transform_3, window_bounds = array<i64: 32, 1>}, {pipeline_mode = #tpu.pipeline_mode<synchronous>, transform_indices = @transform_4, window_bounds = array<i64: 3, 3, 32, 32>}, {pipeline_mode = #tpu.pipeline_mode<synchronous>, transform_indices = @transform_5, window_bounds = array<i64: 3, 32, 1>}, {pipeline_mode = #tpu.pipeline_mode<synchronous>, transform_indices = @transform_6, window_bounds = array<i64: 3, 32, 32>}, {pipeline_mode = #tpu.pipeline_mode<synchronous>, transform_indices = @transform_7, window_bounds = array<i64: 3, 32, 1>}, {pipeline_mode = #tpu.pipeline_mode<synchronous>, transform_indices = @transform_8, window_bounds = array<i64: 6, 32>}, {pipeline_mode = #tpu.pipeline_mode<synchronous>, transform_indices = @transform_9, window_bounds = array<i64: 6, 1>}, {transform_indices = @transform_10, window_bounds = array<i64: 1, 6, 16>}]} {
    %cst = arith.constant 0.000000e+00 : f32
    %0 = vector.broadcast %cst : f32 to vector<32x4xf32>
    %c0 = arith.constant 0 : index
    %c124 = arith.constant 124 : index
    %1 = vector.load %arg12[%c0, %c124] : memref<32x256xf32, #tpu.memory_space<vmem>>, vector<32x4xf32>
    tpu.vector_store %arg12[%c0, %c124], %0 {strides = array<i32>} : memref<32x256xf32, #tpu.memory_space<vmem>>, vector<32x4xf32>,
    %cst_0 = arith.constant 0.000000e+00 : f32
    %2 = vector.broadcast %cst_0 : f32 to vector<32x4xf32>
    %c0_1 = arith.constant 0 : index
    %c144 = arith.constant 144 : index
    %3 = vector.load %arg12[%c0_1, %c144] : memref<32x256xf32, #tpu.memory_space<vmem>>, vector<32x4xf32>
    tpu.vector_store %arg12[%c0_1, %c144], %2 {strides = array<i32>} : memref<32x256xf32, #tpu.memory_space<vmem>>, vector<32x4xf32>,
    %c0_2 = arith.constant 0 : index
    %c0_3 = arith.constant 0 : index
    %c0_4 = arith.constant 0 : index
    %4 = vector.load %arg1[%c0_2, %c0_3, %c0_4] : memref<1x8x16xf32, #tpu.memory_space<vmem>>, vector<1x8x16xf32>
    %5 = vector.shape_cast %4 : vector<1x8x16xf32> to vector<8x16xf32>
    %c0_5 = arith.constant 0 : index
    %c0_6 = arith.constant 0 : index
    %6 = vector.load %arg3[%c0_5, %c0_6] : memref<32x8xf32, #tpu.memory_space<vmem>>, vector<32x8xf32>
    %cst_7 = arith.constant dense<0.000000e+00> : vector<32x16xf32>
    %7 = tpu.matmul %6, %5, %cst_7 {dimension_numbers = #tpu.dot_dimension_numbers<[1], [0], [0], [1], [0, 0, 1, 1], [], []>} : vector<32x8xf32>, vector<8x16xf32>, vector<32x16xf32> -> vector<32x16xf32>
    %c0_8 = arith.constant 0 : index
    %c0_9 = arith.constant 0 : index
    %8 = vector.load %arg4[%c0_8, %c0_9] : memref<32x1xf32, #tpu.memory_space<vmem>>, vector<32x1xf32>
    %9 = vector.broadcast %8 : vector<32x1xf32> to vector<32x16xf32>
    %10 = arith.addf %7, %9 : vector<32x16xf32>
    %c0_10 = arith.constant 0 : index
    %c0_11 = arith.constant 0 : index
    %11 = vector.load %arg13[%c0_10, %c0_11] : memref<32x16xf32, #tpu.memory_space<vmem>>, vector<32x16xf32>
    tpu.vector_store %arg13[%c0_10, %c0_11], %10 {strides = array<i32>} : memref<32x16xf32, #tpu.memory_space<vmem>>, vector<32x16xf32>,
    %c0_12 = arith.constant 0 : index
    %c128 = arith.constant 128 : index
    %12 = vector.load %arg12[%c0_12, %c128] : memref<32x256xf32, #tpu.memory_space<vmem>>, vector<32x16xf32>
    tpu.vector_store %arg12[%c0_12, %c128], %10 {strides = array<i32>} : memref<32x256xf32, #tpu.memory_space<vmem>>, vector<32x16xf32>,
    %c0_13 = arith.constant 0 : index
    %c128_14 = arith.constant 128 : index
    %13 = vector.load %arg12[%c0_13, %c128_14] : memref<32x256xf32, #tpu.memory_space<vmem>>, vector<32x16xf32>
    %c0_15 = arith.constant 0 : index
    %c127 = arith.constant 127 : index
    %14 = vector.load %arg12[%c0_15, %c127] : memref<32x256xf32, #tpu.memory_space<vmem>>, vector<32x16xf32>
    %c0_16 = arith.constant 0 : index
    %c129 = arith.constant 129 : index
    %15 = vector.load %arg12[%c0_16, %c129] : memref<32x256xf32, #tpu.memory_space<vmem>>, vector<32x16xf32>
    %c0_17 = arith.constant 0 : index
    %c1 = arith.constant 1 : index
    %c0_18 = arith.constant 0 : index
    %c0_19 = arith.constant 0 : index
    %16 = vector.load %arg5[%c0_17, %c1, %c0_18, %c0_19] : memref<3x3x32x32xf32, #tpu.memory_space<vmem>>, vector<1x1x32x32xf32>
    %17 = vector.shape_cast %16 : vector<1x1x32x32xf32> to vector<32x32xf32>
    %cst_20 = arith.constant dense<0.000000e+00> : vector<32x16xf32>
    %18 = tpu.matmul %17, %13, %cst_20 {dimension_numbers = #tpu.dot_dimension_numbers<[1], [0], [0], [1], [0, 0, 1, 1], [], []>} : vector<32x32xf32>, vector<32x16xf32>, vector<32x16xf32> -> vector<32x16xf32>
    %c0_21 = arith.constant 0 : index
    %c0_22 = arith.constant 0 : index
    %c0_23 = arith.constant 0 : index
    %c0_24 = arith.constant 0 : index
    %19 = vector.load %arg5[%c0_21, %c0_22, %c0_23, %c0_24] : memref<3x3x32x32xf32, #tpu.memory_space<vmem>>, vector<1x1x32x32xf32>
    %20 = vector.shape_cast %19 : vector<1x1x32x32xf32> to vector<32x32xf32>
    %cst_25 = arith.constant dense<0.000000e+00> : vector<32x16xf32>
    %21 = tpu.matmul %20, %14, %cst_25 {dimension_numbers = #tpu.dot_dimension_numbers<[1], [0], [0], [1], [0, 0, 1, 1], [], []>} : vector<32x32xf32>, vector<32x16xf32>, vector<32x16xf32> -> vector<32x16xf32>
    %22 = arith.addf %18, %21 : vector<32x16xf32>
    %c0_26 = arith.constant 0 : index
    %c2 = arith.constant 2 : index
    %c0_27 = arith.constant 0 : index
    %c0_28 = arith.constant 0 : index
    %23 = vector.load %arg5[%c0_26, %c2, %c0_27, %c0_28] : memref<3x3x32x32xf32, #tpu.memory_space<vmem>>, vector<1x1x32x32xf32>
    %24 = vector.shape_cast %23 : vector<1x1x32x32xf32> to vector<32x32xf32>
    %cst_29 = arith.constant dense<0.000000e+00> : vector<32x16xf32>
    %25 = tpu.matmul %24, %15, %cst_29 {dimension_numbers = #tpu.dot_dimension_numbers<[1], [0], [0], [1], [0, 0, 1, 1], [], []>} : vector<32x32xf32>, vector<32x16xf32>, vector<32x16xf32> -> vector<32x16xf32>
    %26 = arith.addf %22, %25 : vector<32x16xf32>
    %c0_30 = arith.constant 0 : index
    %c0_31 = arith.constant 0 : index
    %c0_32 = arith.constant 0 : index
    %27 = vector.load %arg6[%c0_30, %c0_31, %c0_32] : memref<3x32x1xf32, #tpu.memory_space<vmem>>, vector<1x32x1xf32>
    %28 = vector.shape_cast %27 : vector<1x32x1xf32> to vector<32x1xf32>
    %29 = vector.broadcast %28 : vector<32x1xf32> to vector<32x16xf32>
    %30 = arith.addf %26, %29 : vector<32x16xf32>
    %cst_33 = arith.constant 0.000000e+00 : f32
    %31 = vector.broadcast %cst_33 : f32 to vector<32x16xf32>
    %32 = arith.maximumf %30, %31 : vector<32x16xf32>
    %c0_34 = arith.constant 0 : index
    %c0_35 = arith.constant 0 : index
    %c0_36 = arith.constant 0 : index
    %33 = vector.load %arg7[%c0_34, %c0_35, %c0_36] : memref<3x32x32xf32, #tpu.memory_space<vmem>>, vector<1x32x32xf32>
    %34 = vector.shape_cast %33 : vector<1x32x32xf32> to vector<32x32xf32>
    %cst_37 = arith.constant dense<0.000000e+00> : vector<32x16xf32>
    %35 = tpu.matmul %34, %32, %cst_37 {dimension_numbers = #tpu.dot_dimension_numbers<[1], [0], [0], [1], [0, 0, 1, 1], [], []>} : vector<32x32xf32>, vector<32x16xf32>, vector<32x16xf32> -> vector<32x16xf32>
    %c0_38 = arith.constant 0 : index
    %c0_39 = arith.constant 0 : index
    %c0_40 = arith.constant 0 : index
    %36 = vector.load %arg8[%c0_38, %c0_39, %c0_40] : memref<3x32x1xf32, #tpu.memory_space<vmem>>, vector<1x32x1xf32>
    %37 = vector.shape_cast %36 : vector<1x32x1xf32> to vector<32x1xf32>
    %38 = vector.broadcast %37 : vector<32x1xf32> to vector<32x16xf32>
    %39 = arith.addf %35, %38 : vector<32x16xf32>
    %c0_41 = arith.constant 0 : index
    %c0_42 = arith.constant 0 : index
    %40 = vector.load %arg13[%c0_41, %c0_42] : memref<32x16xf32, #tpu.memory_space<vmem>>, vector<32x16xf32>
    %41 = arith.addf %40, %39 : vector<32x16xf32>
    %c0_43 = arith.constant 0 : index
    %c0_44 = arith.constant 0 : index
    %42 = vector.load %arg13[%c0_43, %c0_44] : memref<32x16xf32, #tpu.memory_space<vmem>>, vector<32x16xf32>
    tpu.vector_store %arg13[%c0_43, %c0_44], %41 {strides = array<i32>} : memref<32x16xf32, #tpu.memory_space<vmem>>, vector<32x16xf32>,
    %c0_45 = arith.constant 0 : index
    %c0_46 = arith.constant 0 : index
    %43 = vector.load %arg13[%c0_45, %c0_46] : memref<32x16xf32, #tpu.memory_space<vmem>>, vector<32x16xf32>
    %c0_47 = arith.constant 0 : index
    %c128_48 = arith.constant 128 : index
    %44 = vector.load %arg12[%c0_47, %c128_48] : memref<32x256xf32, #tpu.memory_space<vmem>>, vector<32x16xf32>
    tpu.vector_store %arg12[%c0_47, %c128_48], %43 {strides = array<i32>} : memref<32x256xf32, #tpu.memory_space<vmem>>, vector<32x16xf32>,
    %c0_49 = arith.constant 0 : index
    %c128_50 = arith.constant 128 : index
    %45 = vector.load %arg12[%c0_49, %c128_50] : memref<32x256xf32, #tpu.memory_space<vmem>>, vector<32x16xf32>
    %c0_51 = arith.constant 0 : index
    %c126 = arith.constant 126 : index
    %46 = vector.load %arg12[%c0_51, %c126] : memref<32x256xf32, #tpu.memory_space<vmem>>, vector<32x16xf32>
    %c0_52 = arith.constant 0 : index
    %c130 = arith.constant 130 : index
    %47 = vector.load %arg12[%c0_52, %c130] : memref<32x256xf32, #tpu.memory_space<vmem>>, vector<32x16xf32>
    %c1_53 = arith.constant 1 : index
    %c1_54 = arith.constant 1 : index
    %c0_55 = arith.constant 0 : index
    %c0_56 = arith.constant 0 : index
    %48 = vector.load %arg5[%c1_53, %c1_54, %c0_55, %c0_56] : memref<3x3x32x32xf32, #tpu.memory_space<vmem>>, vector<1x1x32x32xf32>
    %49 = vector.shape_cast %48 : vector<1x1x32x32xf32> to vector<32x32xf32>
    %cst_57 = arith.constant dense<0.000000e+00> : vector<32x16xf32>
    %50 = tpu.matmul %49, %45, %cst_57 {dimension_numbers = #tpu.dot_dimension_numbers<[1], [0], [0], [1], [0, 0, 1, 1], [], []>} : vector<32x32xf32>, vector<32x16xf32>, vector<32x16xf32> -> vector<32x16xf32>
    %c1_58 = arith.constant 1 : index
    %c0_59 = arith.constant 0 : index
    %c0_60 = arith.constant 0 : index
    %c0_61 = arith.constant 0 : index
    %51 = vector.load %arg5[%c1_58, %c0_59, %c0_60, %c0_61] : memref<3x3x32x32xf32, #tpu.memory_space<vmem>>, vector<1x1x32x32xf32>
    %52 = vector.shape_cast %51 : vector<1x1x32x32xf32> to vector<32x32xf32>
    %cst_62 = arith.constant dense<0.000000e+00> : vector<32x16xf32>
    %53 = tpu.matmul %52, %46, %cst_62 {dimension_numbers = #tpu.dot_dimension_numbers<[1], [0], [0], [1], [0, 0, 1, 1], [], []>} : vector<32x32xf32>, vector<32x16xf32>, vector<32x16xf32> -> vector<32x16xf32>
    %54 = arith.addf %50, %53 : vector<32x16xf32>
    %c1_63 = arith.constant 1 : index
    %c2_64 = arith.constant 2 : index
    %c0_65 = arith.constant 0 : index
    %c0_66 = arith.constant 0 : index
    %55 = vector.load %arg5[%c1_63, %c2_64, %c0_65, %c0_66] : memref<3x3x32x32xf32, #tpu.memory_space<vmem>>, vector<1x1x32x32xf32>
    %56 = vector.shape_cast %55 : vector<1x1x32x32xf32> to vector<32x32xf32>
    %cst_67 = arith.constant dense<0.000000e+00> : vector<32x16xf32>
    %57 = tpu.matmul %56, %47, %cst_67 {dimension_numbers = #tpu.dot_dimension_numbers<[1], [0], [0], [1], [0, 0, 1, 1], [], []>} : vector<32x32xf32>, vector<32x16xf32>, vector<32x16xf32> -> vector<32x16xf32>
    %58 = arith.addf %54, %57 : vector<32x16xf32>
    %c1_68 = arith.constant 1 : index
    %c0_69 = arith.constant 0 : index
    %c0_70 = arith.constant 0 : index
    %59 = vector.load %arg6[%c1_68, %c0_69, %c0_70] : memref<3x32x1xf32, #tpu.memory_space<vmem>>, vector<1x32x1xf32>
    %60 = vector.shape_cast %59 : vector<1x32x1xf32> to vector<32x1xf32>
    %61 = vector.broadcast %60 : vector<32x1xf32> to vector<32x16xf32>
    %62 = arith.addf %58, %61 : vector<32x16xf32>
    %cst_71 = arith.constant 0.000000e+00 : f32
    %63 = vector.broadcast %cst_71 : f32 to vector<32x16xf32>
    %64 = arith.maximumf %62, %63 : vector<32x16xf32>
    %c1_72 = arith.constant 1 : index
    %c0_73 = arith.constant 0 : index
    %c0_74 = arith.constant 0 : index
    %65 = vector.load %arg7[%c1_72, %c0_73, %c0_74] : memref<3x32x32xf32, #tpu.memory_space<vmem>>, vector<1x32x32xf32>
    %66 = vector.shape_cast %65 : vector<1x32x32xf32> to vector<32x32xf32>
    %cst_75 = arith.constant dense<0.000000e+00> : vector<32x16xf32>
    %67 = tpu.matmul %66, %64, %cst_75 {dimension_numbers = #tpu.dot_dimension_numbers<[1], [0], [0], [1], [0, 0, 1, 1], [], []>} : vector<32x32xf32>, vector<32x16xf32>, vector<32x16xf32> -> vector<32x16xf32>
    %c1_76 = arith.constant 1 : index
    %c0_77 = arith.constant 0 : index
    %c0_78 = arith.constant 0 : index
    %68 = vector.load %arg8[%c1_76, %c0_77, %c0_78] : memref<3x32x1xf32, #tpu.memory_space<vmem>>, vector<1x32x1xf32>
    %69 = vector.shape_cast %68 : vector<1x32x1xf32> to vector<32x1xf32>
    %70 = vector.broadcast %69 : vector<32x1xf32> to vector<32x16xf32>
    %71 = arith.addf %67, %70 : vector<32x16xf32>
    %c0_79 = arith.constant 0 : index
    %c0_80 = arith.constant 0 : index
    %72 = vector.load %arg13[%c0_79, %c0_80] : memref<32x16xf32, #tpu.memory_space<vmem>>, vector<32x16xf32>
    %73 = arith.addf %72, %71 : vector<32x16xf32>
    %c0_81 = arith.constant 0 : index
    %c0_82 = arith.constant 0 : index
    %74 = vector.load %arg13[%c0_81, %c0_82] : memref<32x16xf32, #tpu.memory_space<vmem>>, vector<32x16xf32>
    tpu.vector_store %arg13[%c0_81, %c0_82], %73 {strides = array<i32>} : memref<32x16xf32, #tpu.memory_space<vmem>>, vector<32x16xf32>,
    %c0_83 = arith.constant 0 : index
    %c0_84 = arith.constant 0 : index
    %75 = vector.load %arg13[%c0_83, %c0_84] : memref<32x16xf32, #tpu.memory_space<vmem>>, vector<32x16xf32>
    %c0_85 = arith.constant 0 : index
    %c128_86 = arith.constant 128 : index
    %76 = vector.load %arg12[%c0_85, %c128_86] : memref<32x256xf32, #tpu.memory_space<vmem>>, vector<32x16xf32>
    tpu.vector_store %arg12[%c0_85, %c128_86], %75 {strides = array<i32>} : memref<32x256xf32, #tpu.memory_space<vmem>>, vector<32x16xf32>,
    %c0_87 = arith.constant 0 : index
    %c128_88 = arith.constant 128 : index
    %77 = vector.load %arg12[%c0_87, %c128_88] : memref<32x256xf32, #tpu.memory_space<vmem>>, vector<32x16xf32>
    %c0_89 = arith.constant 0 : index
    %c124_90 = arith.constant 124 : index
    %78 = vector.load %arg12[%c0_89, %c124_90] : memref<32x256xf32, #tpu.memory_space<vmem>>, vector<32x16xf32>
    %c0_91 = arith.constant 0 : index
    %c132 = arith.constant 132 : index
    %79 = vector.load %arg12[%c0_91, %c132] : memref<32x256xf32, #tpu.memory_space<vmem>>, vector<32x16xf32>
    %c2_92 = arith.constant 2 : index
    %c1_93 = arith.constant 1 : index
    %c0_94 = arith.constant 0 : index
    %c0_95 = arith.constant 0 : index
    %80 = vector.load %arg5[%c2_92, %c1_93, %c0_94, %c0_95] : memref<3x3x32x32xf32, #tpu.memory_space<vmem>>, vector<1x1x32x32xf32>
    %81 = vector.shape_cast %80 : vector<1x1x32x32xf32> to vector<32x32xf32>
    %cst_96 = arith.constant dense<0.000000e+00> : vector<32x16xf32>
    %82 = tpu.matmul %81, %77, %cst_96 {dimension_numbers = #tpu.dot_dimension_numbers<[1], [0], [0], [1], [0, 0, 1, 1], [], []>} : vector<32x32xf32>, vector<32x16xf32>, vector<32x16xf32> -> vector<32x16xf32>
    %c2_97 = arith.constant 2 : index
    %c0_98 = arith.constant 0 : index
    %c0_99 = arith.constant 0 : index
    %c0_100 = arith.constant 0 : index
    %83 = vector.load %arg5[%c2_97, %c0_98, %c0_99, %c0_100] : memref<3x3x32x32xf32, #tpu.memory_space<vmem>>, vector<1x1x32x32xf32>
    %84 = vector.shape_cast %83 : vector<1x1x32x32xf32> to vector<32x32xf32>
    %cst_101 = arith.constant dense<0.000000e+00> : vector<32x16xf32>
    %85 = tpu.matmul %84, %78, %cst_101 {dimension_numbers = #tpu.dot_dimension_numbers<[1], [0], [0], [1], [0, 0, 1, 1], [], []>} : vector<32x32xf32>, vector<32x16xf32>, vector<32x16xf32> -> vector<32x16xf32>
    %86 = arith.addf %82, %85 : vector<32x16xf32>
    %c2_102 = arith.constant 2 : index
    %c2_103 = arith.constant 2 : index
    %c0_104 = arith.constant 0 : index
    %c0_105 = arith.constant 0 : index
    %87 = vector.load %arg5[%c2_102, %c2_103, %c0_104, %c0_105] : memref<3x3x32x32xf32, #tpu.memory_space<vmem>>, vector<1x1x32x32xf32>
    %88 = vector.shape_cast %87 : vector<1x1x32x32xf32> to vector<32x32xf32>
    %cst_106 = arith.constant dense<0.000000e+00> : vector<32x16xf32>
    %89 = tpu.matmul %88, %79, %cst_106 {dimension_numbers = #tpu.dot_dimension_numbers<[1], [0], [0], [1], [0, 0, 1, 1], [], []>} : vector<32x32xf32>, vector<32x16xf32>, vector<32x16xf32> -> vector<32x16xf32>
    %90 = arith.addf %86, %89 : vector<32x16xf32>
    %c2_107 = arith.constant 2 : index
    %c0_108 = arith.constant 0 : index
    %c0_109 = arith.constant 0 : index
    %91 = vector.load %arg6[%c2_107, %c0_108, %c0_109] : memref<3x32x1xf32, #tpu.memory_space<vmem>>, vector<1x32x1xf32>
    %92 = vector.shape_cast %91 : vector<1x32x1xf32> to vector<32x1xf32>
    %93 = vector.broadcast %92 : vector<32x1xf32> to vector<32x16xf32>
    %94 = arith.addf %90, %93 : vector<32x16xf32>
    %cst_110 = arith.constant 0.000000e+00 : f32
    %95 = vector.broadcast %cst_110 : f32 to vector<32x16xf32>
    %96 = arith.maximumf %94, %95 : vector<32x16xf32>
    %c2_111 = arith.constant 2 : index
    %c0_112 = arith.constant 0 : index
    %c0_113 = arith.constant 0 : index
    %97 = vector.load %arg7[%c2_111, %c0_112, %c0_113] : memref<3x32x32xf32, #tpu.memory_space<vmem>>, vector<1x32x32xf32>
    %98 = vector.shape_cast %97 : vector<1x32x32xf32> to vector<32x32xf32>
    %cst_114 = arith.constant dense<0.000000e+00> : vector<32x16xf32>
    %99 = tpu.matmul %98, %96, %cst_114 {dimension_numbers = #tpu.dot_dimension_numbers<[1], [0], [0], [1], [0, 0, 1, 1], [], []>} : vector<32x32xf32>, vector<32x16xf32>, vector<32x16xf32> -> vector<32x16xf32>
    %c2_115 = arith.constant 2 : index
    %c0_116 = arith.constant 0 : index
    %c0_117 = arith.constant 0 : index
    %100 = vector.load %arg8[%c2_115, %c0_116, %c0_117] : memref<3x32x1xf32, #tpu.memory_space<vmem>>, vector<1x32x1xf32>
    %101 = vector.shape_cast %100 : vector<1x32x1xf32> to vector<32x1xf32>
    %102 = vector.broadcast %101 : vector<32x1xf32> to vector<32x16xf32>
    %103 = arith.addf %99, %102 : vector<32x16xf32>
    %c0_118 = arith.constant 0 : index
    %c0_119 = arith.constant 0 : index
    %104 = vector.load %arg13[%c0_118, %c0_119] : memref<32x16xf32, #tpu.memory_space<vmem>>, vector<32x16xf32>
    %105 = arith.addf %104, %103 : vector<32x16xf32>
    %c0_120 = arith.constant 0 : index
    %c0_121 = arith.constant 0 : index
    %106 = vector.load %arg13[%c0_120, %c0_121] : memref<32x16xf32, #tpu.memory_space<vmem>>, vector<32x16xf32>
    tpu.vector_store %arg13[%c0_120, %c0_121], %105 {strides = array<i32>} : memref<32x16xf32, #tpu.memory_space<vmem>>, vector<32x16xf32>,
    %c0_122 = arith.constant 0 : index
    %c0_123 = arith.constant 0 : index
    %107 = vector.load %arg13[%c0_122, %c0_123] : memref<32x16xf32, #tpu.memory_space<vmem>>, vector<32x16xf32>
    %c0_124 = arith.constant 0 : index
    %c0_125 = arith.constant 0 : index
    %108 = vector.load %arg9[%c0_124, %c0_125] : memref<6x32xf32, #tpu.memory_space<vmem>>, vector<6x32xf32>
    %cst_126 = arith.constant dense<0.000000e+00> : vector<6x16xf32>
    %109 = tpu.matmul %108, %107, %cst_126 {dimension_numbers = #tpu.dot_dimension_numbers<[1], [0], [0], [1], [0, 0, 1, 1], [], []>} : vector<6x32xf32>, vector<32x16xf32>, vector<6x16xf32> -> vector<6x16xf32>
    %c0_127 = arith.constant 0 : index
    %c0_128 = arith.constant 0 : index
    %110 = vector.load %arg10[%c0_127, %c0_128] : memref<6x1xf32, #tpu.memory_space<vmem>>, vector<6x1xf32>
    %111 = vector.broadcast %110 : vector<6x1xf32> to vector<6x16xf32>
    %112 = arith.addf %109, %111 : vector<6x16xf32>
    %c0_129 = arith.constant 0 : index
    %c0_130 = arith.constant 0 : index
    %c0_131 = arith.constant 0 : index
    %113 = vector.load %arg2[%c0_129, %c0_130, %c0_131] : memref<1x1x16xf32, #tpu.memory_space<vmem>>, vector<1x1x16xf32>
    %114 = vector.shape_cast %113 : vector<1x1x16xf32> to vector<1x16xf32>
    %115 = vector.broadcast %114 : vector<1x16xf32> to vector<6x16xf32>
    %116 = arith.mulf %112, %115 : vector<6x16xf32>
    %c0_132 = arith.constant 0 : index
    %c0_133 = arith.constant 0 : index
    %c0_134 = arith.constant 0 : index
    %117 = vector.load %arg11[%c0_132, %c0_133, %c0_134] : memref<1x6x16xf32, #tpu.memory_space<vmem>>, vector<1x6x16xf32>
    %118 = vector.shape_cast %117 : vector<1x6x16xf32> to vector<6x16xf32>
    %119 = vector.shape_cast %116 : vector<6x16xf32> to vector<1x6x16xf32>
    tpu.vector_store %arg11[%c0_132, %c0_133, %c0_134], %119 {strides = array<i32>} : memref<1x6x16xf32, #tpu.memory_space<vmem>>, vector<1x6x16xf32>,
    return
  }
  func.func @transform_0(%arg0: i32) -> (i32, i32, i32) {
    %c0_i32 = arith.constant 0 : i32
    %c0_i32_0 = arith.constant 0 : i32
    %c0_i32_1 = arith.constant 0 : i32
    return %arg0, %c0_i32, %c0_i32_0 : i32, i32, i32
  }
  func.func @transform_1(%arg0: i32) -> (i32, i32, i32) {
    %c0_i32 = arith.constant 0 : i32
    %c0_i32_0 = arith.constant 0 : i32
    %c0_i32_1 = arith.constant 0 : i32
    return %arg0, %c0_i32, %c0_i32_0 : i32, i32, i32
  }
  func.func @transform_2(%arg0: i32) -> (i32, i32) {
    %c0_i32 = arith.constant 0 : i32
    %c0_i32_0 = arith.constant 0 : i32
    %c0_i32_1 = arith.constant 0 : i32
    return %c0_i32, %c0_i32_0 : i32, i32
  }
  func.func @transform_3(%arg0: i32) -> (i32, i32) {
    %c0_i32 = arith.constant 0 : i32
    %c0_i32_0 = arith.constant 0 : i32
    %c0_i32_1 = arith.constant 0 : i32
    return %c0_i32, %c0_i32_0 : i32, i32
  }
  func.func @transform_4(%arg0: i32) -> (i32, i32, i32, i32) {
    %c0_i32 = arith.constant 0 : i32
    %c0_i32_0 = arith.constant 0 : i32
    %c0_i32_1 = arith.constant 0 : i32
    %c0_i32_2 = arith.constant 0 : i32
    %c0_i32_3 = arith.constant 0 : i32
    return %c0_i32, %c0_i32_0, %c0_i32_1, %c0_i32_2 : i32, i32, i32, i32
  }
  func.func @transform_5(%arg0: i32) -> (i32, i32, i32) {
    %c0_i32 = arith.constant 0 : i32
    %c0_i32_0 = arith.constant 0 : i32
    %c0_i32_1 = arith.constant 0 : i32
    %c0_i32_2 = arith.constant 0 : i32
    return %c0_i32, %c0_i32_0, %c0_i32_1 : i32, i32, i32
  }
  func.func @transform_6(%arg0: i32) -> (i32, i32, i32) {
    %c0_i32 = arith.constant 0 : i32
    %c0_i32_0 = arith.constant 0 : i32
    %c0_i32_1 = arith.constant 0 : i32
    %c0_i32_2 = arith.constant 0 : i32
    return %c0_i32, %c0_i32_0, %c0_i32_1 : i32, i32, i32
  }
  func.func @transform_7(%arg0: i32) -> (i32, i32, i32) {
    %c0_i32 = arith.constant 0 : i32
    %c0_i32_0 = arith.constant 0 : i32
    %c0_i32_1 = arith.constant 0 : i32
    %c0_i32_2 = arith.constant 0 : i32
    return %c0_i32, %c0_i32_0, %c0_i32_1 : i32, i32, i32
  }
  func.func @transform_8(%arg0: i32) -> (i32, i32) {
    %c0_i32 = arith.constant 0 : i32
    %c0_i32_0 = arith.constant 0 : i32
    %c0_i32_1 = arith.constant 0 : i32
    return %c0_i32, %c0_i32_0 : i32, i32
  }
  func.func @transform_9(%arg0: i32) -> (i32, i32) {
    %c0_i32 = arith.constant 0 : i32
    %c0_i32_0 = arith.constant 0 : i32
    %c0_i32_1 = arith.constant 0 : i32
    return %c0_i32, %c0_i32_0 : i32, i32
  }
  func.func @transform_10(%arg0: i32) -> (i32, i32, i32) {
    %c0_i32 = arith.constant 0 : i32
    %c0_i32_0 = arith.constant 0 : i32
    %c0_i32_1 = arith.constant 0 : i32
    return %arg0, %c0_i32, %c0_i32_0 : i32, i32, i32
  }
}

module attributes {stable_mosaic.version = 11 : i64} {
  func.func @ss_tcn_kernel(%arg0: i32, %arg1: memref<1x8x16xf32, #tpu.memory_space<vmem>>, %arg2: memref<1x1x16xf32, #tpu.memory_space<vmem>>, %arg3: memref<32x8xf32, #tpu.memory_space<vmem>>, %arg4: memref<32x1xf32, #tpu.memory_space<vmem>>, %arg5: memref<3x3x32x32xf32, #tpu.memory_space<vmem>>, %arg6: memref<3x32x1xf32, #tpu.memory_space<vmem>>, %arg7: memref<3x32x32xf32, #tpu.memory_space<vmem>>, %arg8: memref<3x32x1xf32, #tpu.memory_space<vmem>>, %arg9: memref<6x32xf32, #tpu.memory_space<vmem>>, %arg10: memref<6x1xf32, #tpu.memory_space<vmem>>, %arg11: memref<1x6x16xf32, #tpu.memory_space<vmem>>, %arg12: memref<32x256xf32, #tpu.memory_space<vmem>>, %arg13: memref<32x16xf32, #tpu.memory_space<vmem>>) attributes {dimension_semantics = [#tpu.dimension_semantics<parallel>], iteration_bounds = array<i64: 2>, scalar_prefetch = 0 : i64, scratch_operands = 2 : i64, tpu.core_type = #tpu.core_type<tc>, window_params = [{transform_indices = @transform_0, window_bounds = array<i64: 1, 8, 16>}, {transform_indices = @transform_1, window_bounds = array<i64: 1, 1, 16>}, {pipeline_mode = #tpu.pipeline_mode<synchronous>, transform_indices = @transform_2, window_bounds = array<i64: 32, 8>}, {pipeline_mode = #tpu.pipeline_mode<synchronous>, transform_indices = @transform_3, window_bounds = array<i64: 32, 1>}, {pipeline_mode = #tpu.pipeline_mode<synchronous>, transform_indices = @transform_4, window_bounds = array<i64: 3, 3, 32, 32>}, {pipeline_mode = #tpu.pipeline_mode<synchronous>, transform_indices = @transform_5, window_bounds = array<i64: 3, 32, 1>}, {pipeline_mode = #tpu.pipeline_mode<synchronous>, transform_indices = @transform_6, window_bounds = array<i64: 3, 32, 32>}, {pipeline_mode = #tpu.pipeline_mode<synchronous>, transform_indices = @transform_7, window_bounds = array<i64: 3, 32, 1>}, {pipeline_mode = #tpu.pipeline_mode<synchronous>, transform_indices = @transform_8, window_bounds = array<i64: 6, 32>}, {pipeline_mode = #tpu.pipeline_mode<synchronous>, transform_indices = @transform_9, window_bounds = array<i64: 6, 1>}, {transform_indices = @transform_10, window_bounds = array<i64: 1, 6, 16>}]} {
    %cst = arith.constant 0.000000e+00 : f32
    %0 = vector.broadcast %cst : f32 to vector<32x4xf32>
    %c0 = arith.constant 0 : index
    %c124 = arith.constant 124 : index
    %1 = vector.load %arg12[%c0, %c124] : memref<32x256xf32, #tpu.memory_space<vmem>>, vector<32x4xf32>
    tpu.vector_store %arg12[%c0, %c124], %0 {strides = array<i32>} : memref<32x256xf32, #tpu.memory_space<vmem>>, vector<32x4xf32>,
    %cst_0 = arith.constant 0.000000e+00 : f32
    %2 = vector.broadcast %cst_0 : f32 to vector<32x4xf32>
    %c0_1 = arith.constant 0 : index
    %c144 = arith.constant 144 : index
    %3 = vector.load %arg12[%c0_1, %c144] : memref<32x256xf32, #tpu.memory_space<vmem>>, vector<32x4xf32>
    tpu.vector_store %arg12[%c0_1, %c144], %2 {strides = array<i32>} : memref<32x256xf32, #tpu.memory_space<vmem>>, vector<32x4xf32>,
    %c0_2 = arith.constant 0 : index
    %c0_3 = arith.constant 0 : index
    %c0_4 = arith.constant 0 : index
    %4 = vector.load %arg1[%c0_2, %c0_3, %c0_4] : memref<1x8x16xf32, #tpu.memory_space<vmem>>, vector<1x8x16xf32>
    %5 = vector.shape_cast %4 : vector<1x8x16xf32> to vector<8x16xf32>
    %c0_5 = arith.constant 0 : index
    %c0_6 = arith.constant 0 : index
    %6 = vector.load %arg3[%c0_5, %c0_6] : memref<32x8xf32, #tpu.memory_space<vmem>>, vector<32x8xf32>
    %cst_7 = arith.constant dense<0.000000e+00> : vector<32x16xf32>
    %7 = tpu.matmul %6, %5, %cst_7 {dimension_numbers = #tpu.dot_dimension_numbers<[1], [0], [0], [1], [0, 0, 1, 1], [], []>} : vector<32x8xf32>, vector<8x16xf32>, vector<32x16xf32> -> vector<32x16xf32>
    %c0_8 = arith.constant 0 : index
    %c0_9 = arith.constant 0 : index
    %8 = vector.load %arg4[%c0_8, %c0_9] : memref<32x1xf32, #tpu.memory_space<vmem>>, vector<32x1xf32>
    %9 = vector.broadcast %8 : vector<32x1xf32> to vector<32x16xf32>
    %10 = arith.addf %7, %9 : vector<32x16xf32>
    %c0_10 = arith.constant 0 : index
    %c0_11 = arith.constant 0 : index
    %11 = vector.load %arg13[%c0_10, %c0_11] : memref<32x16xf32, #tpu.memory_space<vmem>>, vector<32x16xf32>
    tpu.vector_store %arg13[%c0_10, %c0_11], %10 {strides = array<i32>} : memref<32x16xf32, #tpu.memory_space<vmem>>, vector<32x16xf32>,
    %c0_12 = arith.constant 0 : index
    %c128 = arith.constant 128 : index
    %12 = vector.load %arg12[%c0_12, %c128] : memref<32x256xf32, #tpu.memory_space<vmem>>, vector<32x16xf32>
    tpu.vector_store %arg12[%c0_12, %c128], %10 {strides = array<i32>} : memref<32x256xf32, #tpu.memory_space<vmem>>, vector<32x16xf32>,
    %c0_13 = arith.constant 0 : index
    %c128_14 = arith.constant 128 : index
    %13 = vector.load %arg12[%c0_13, %c128_14] : memref<32x256xf32, #tpu.memory_space<vmem>>, vector<32x16xf32>
    %c0_15 = arith.constant 0 : index
    %c127 = arith.constant 127 : index
    %14 = vector.load %arg12[%c0_15, %c127] : memref<32x256xf32, #tpu.memory_space<vmem>>, vector<32x16xf32>
    %c0_16 = arith.constant 0 : index
    %c129 = arith.constant 129 : index
    %15 = vector.load %arg12[%c0_16, %c129] : memref<32x256xf32, #tpu.memory_space<vmem>>, vector<32x16xf32>
    %c0_17 = arith.constant 0 : index
    %c1 = arith.constant 1 : index
    %c0_18 = arith.constant 0 : index
    %c0_19 = arith.constant 0 : index
    %16 = vector.load %arg5[%c0_17, %c1, %c0_18, %c0_19] : memref<3x3x32x32xf32, #tpu.memory_space<vmem>>, vector<1x1x32x32xf32>
    %17 = vector.shape_cast %16 : vector<1x1x32x32xf32> to vector<32x32xf32>
    %cst_20 = arith.constant dense<0.000000e+00> : vector<32x16xf32>
    %18 = tpu.matmul %17, %13, %cst_20 {dimension_numbers = #tpu.dot_dimension_numbers<[1], [0], [0], [1], [0, 0, 1, 1], [], []>} : vector<32x32xf32>, vector<32x16xf32>, vector<32x16xf32> -> vector<32x16xf32>
    %c0_21 = arith.constant 0 : index
    %c0_22 = arith.constant 0 : index
    %c0_23 = arith.constant 0 : index
    %c0_24 = arith.constant 0 : index
    %19 = vector.load %arg5[%c0_21, %c0_22, %c0_23, %c0_24] : memref<3x3x32x32xf32, #tpu.memory_space<vmem>>, vector<1x1x32x32xf32>
    %20 = vector.shape_cast %19 : vector<1x1x32x32xf32> to vector<32x32xf32>
    %cst_25 = arith.constant dense<0.000000e+00> : vector<32x16xf32>
    %21 = tpu.matmul %20, %14, %cst_25 {dimension_numbers = #tpu.dot_dimension_numbers<[1], [0], [0], [1], [0, 0, 1, 1], [], []>} : vector<32x32xf32>, vector<32x16xf32>, vector<32x16xf32> -> vector<32x16xf32>
    %22 = arith.addf %18, %21 : vector<32x16xf32>
    %c0_26 = arith.constant 0 : index
    %c2 = arith.constant 2 : index
    %c0_27 = arith.constant 0 : index
    %c0_28 = arith.constant 0 : index
    %23 = vector.load %arg5[%c0_26, %c2, %c0_27, %c0_28] : memref<3x3x32x32xf32, #tpu.memory_space<vmem>>, vector<1x1x32x32xf32>
    %24 = vector.shape_cast %23 : vector<1x1x32x32xf32> to vector<32x32xf32>
    %cst_29 = arith.constant dense<0.000000e+00> : vector<32x16xf32>
    %25 = tpu.matmul %24, %15, %cst_29 {dimension_numbers = #tpu.dot_dimension_numbers<[1], [0], [0], [1], [0, 0, 1, 1], [], []>} : vector<32x32xf32>, vector<32x16xf32>, vector<32x16xf32> -> vector<32x16xf32>
    %26 = arith.addf %22, %25 : vector<32x16xf32>
    %c0_30 = arith.constant 0 : index
    %c0_31 = arith.constant 0 : index
    %c0_32 = arith.constant 0 : index
    %27 = vector.load %arg6[%c0_30, %c0_31, %c0_32] : memref<3x32x1xf32, #tpu.memory_space<vmem>>, vector<1x32x1xf32>
    %28 = vector.shape_cast %27 : vector<1x32x1xf32> to vector<32x1xf32>
    %29 = vector.broadcast %28 : vector<32x1xf32> to vector<32x16xf32>
    %30 = arith.addf %26, %29 : vector<32x16xf32>
    %cst_33 = arith.constant 0.000000e+00 : f32
    %31 = vector.broadcast %cst_33 : f32 to vector<32x16xf32>
    %32 = arith.maximumf %30, %31 : vector<32x16xf32>
    %c0_34 = arith.constant 0 : index
    %c0_35 = arith.constant 0 : index
    %c0_36 = arith.constant 0 : index
    %33 = vector.load %arg7[%c0_34, %c0_35, %c0_36] : memref<3x32x32xf32, #tpu.memory_space<vmem>>, vector<1x32x32xf32>
    %34 = vector.shape_cast %33 : vector<1x32x32xf32> to vector<32x32xf32>
    %cst_37 = arith.constant dense<0.000000e+00> : vector<32x16xf32>
    %35 = tpu.matmul %34, %32, %cst_37 {dimension_numbers = #tpu.dot_dimension_numbers<[1], [0], [0], [1], [0, 0, 1, 1], [], []>} : vector<32x32xf32>, vector<32x16xf32>, vector<32x16xf32> -> vector<32x16xf32>
    %c0_38 = arith.constant 0 : index
    %c0_39 = arith.constant 0 : index
    %c0_40 = arith.constant 0 : index
    %36 = vector.load %arg8[%c0_38, %c0_39, %c0_40] : memref<3x32x1xf32, #tpu.memory_space<vmem>>, vector<1x32x1xf32>
    %37 = vector.shape_cast %36 : vector<1x32x1xf32> to vector<32x1xf32>
    %38 = vector.broadcast %37 : vector<32x1xf32> to vector<32x16xf32>
    %39 = arith.addf %35, %38 : vector<32x16xf32>
    %c0_41 = arith.constant 0 : index
    %c0_42 = arith.constant 0 : index
    %40 = vector.load %arg13[%c0_41, %c0_42] : memref<32x16xf32, #tpu.memory_space<vmem>>, vector<32x16xf32>
    %41 = arith.addf %40, %39 : vector<32x16xf32>
    %c0_43 = arith.constant 0 : index
    %c0_44 = arith.constant 0 : index
    %42 = vector.load %arg13[%c0_43, %c0_44] : memref<32x16xf32, #tpu.memory_space<vmem>>, vector<32x16xf32>
    tpu.vector_store %arg13[%c0_43, %c0_44], %41 {strides = array<i32>} : memref<32x16xf32, #tpu.memory_space<vmem>>, vector<32x16xf32>,
    %c0_45 = arith.constant 0 : index
    %c0_46 = arith.constant 0 : index
    %43 = vector.load %arg13[%c0_45, %c0_46] : memref<32x16xf32, #tpu.memory_space<vmem>>, vector<32x16xf32>
    %c0_47 = arith.constant 0 : index
    %c128_48 = arith.constant 128 : index
    %44 = vector.load %arg12[%c0_47, %c128_48] : memref<32x256xf32, #tpu.memory_space<vmem>>, vector<32x16xf32>
    tpu.vector_store %arg12[%c0_47, %c128_48], %43 {strides = array<i32>} : memref<32x256xf32, #tpu.memory_space<vmem>>, vector<32x16xf32>,
    %c0_49 = arith.constant 0 : index
    %c128_50 = arith.constant 128 : index
    %45 = vector.load %arg12[%c0_49, %c128_50] : memref<32x256xf32, #tpu.memory_space<vmem>>, vector<32x16xf32>
    %c0_51 = arith.constant 0 : index
    %c126 = arith.constant 126 : index
    %46 = vector.load %arg12[%c0_51, %c126] : memref<32x256xf32, #tpu.memory_space<vmem>>, vector<32x16xf32>
    %c0_52 = arith.constant 0 : index
    %c130 = arith.constant 130 : index
    %47 = vector.load %arg12[%c0_52, %c130] : memref<32x256xf32, #tpu.memory_space<vmem>>, vector<32x16xf32>
    %c1_53 = arith.constant 1 : index
    %c1_54 = arith.constant 1 : index
    %c0_55 = arith.constant 0 : index
    %c0_56 = arith.constant 0 : index
    %48 = vector.load %arg5[%c1_53, %c1_54, %c0_55, %c0_56] : memref<3x3x32x32xf32, #tpu.memory_space<vmem>>, vector<1x1x32x32xf32>
    %49 = vector.shape_cast %48 : vector<1x1x32x32xf32> to vector<32x32xf32>
    %cst_57 = arith.constant dense<0.000000e+00> : vector<32x16xf32>
    %50 = tpu.matmul %49, %45, %cst_57 {dimension_numbers = #tpu.dot_dimension_numbers<[1], [0], [0], [1], [0, 0, 1, 1], [], []>} : vector<32x32xf32>, vector<32x16xf32>, vector<32x16xf32> -> vector<32x16xf32>
    %c1_58 = arith.constant 1 : index
    %c0_59 = arith.constant 0 : index
    %c0_60 = arith.constant 0 : index
    %c0_61 = arith.constant 0 : index
    %51 = vector.load %arg5[%c1_58, %c0_59, %c0_60, %c0_61] : memref<3x3x32x32xf32, #tpu.memory_space<vmem>>, vector<1x1x32x32xf32>
    %52 = vector.shape_cast %51 : vector<1x1x32x32xf32> to vector<32x32xf32>
    %cst_62 = arith.constant dense<0.000000e+00> : vector<32x16xf32>
    %53 = tpu.matmul %52, %46, %cst_62 {dimension_numbers = #tpu.dot_dimension_numbers<[1], [0], [0], [1], [0, 0, 1, 1], [], []>} : vector<32x32xf32>, vector<32x16xf32>, vector<32x16xf32> -> vector<32x16xf32>
    %54 = arith.addf %50, %53 : vector<32x16xf32>
    %c1_63 = arith.constant 1 : index
    %c2_64 = arith.constant 2 : index
    %c0_65 = arith.constant 0 : index
    %c0_66 = arith.constant 0 : index
    %55 = vector.load %arg5[%c1_63, %c2_64, %c0_65, %c0_66] : memref<3x3x32x32xf32, #tpu.memory_space<vmem>>, vector<1x1x32x32xf32>
    %56 = vector.shape_cast %55 : vector<1x1x32x32xf32> to vector<32x32xf32>
    %cst_67 = arith.constant dense<0.000000e+00> : vector<32x16xf32>
    %57 = tpu.matmul %56, %47, %cst_67 {dimension_numbers = #tpu.dot_dimension_numbers<[1], [0], [0], [1], [0, 0, 1, 1], [], []>} : vector<32x32xf32>, vector<32x16xf32>, vector<32x16xf32> -> vector<32x16xf32>
    %58 = arith.addf %54, %57 : vector<32x16xf32>
    %c1_68 = arith.constant 1 : index
    %c0_69 = arith.constant 0 : index
    %c0_70 = arith.constant 0 : index
    %59 = vector.load %arg6[%c1_68, %c0_69, %c0_70] : memref<3x32x1xf32, #tpu.memory_space<vmem>>, vector<1x32x1xf32>
    %60 = vector.shape_cast %59 : vector<1x32x1xf32> to vector<32x1xf32>
    %61 = vector.broadcast %60 : vector<32x1xf32> to vector<32x16xf32>
    %62 = arith.addf %58, %61 : vector<32x16xf32>
    %cst_71 = arith.constant 0.000000e+00 : f32
    %63 = vector.broadcast %cst_71 : f32 to vector<32x16xf32>
    %64 = arith.maximumf %62, %63 : vector<32x16xf32>
    %c1_72 = arith.constant 1 : index
    %c0_73 = arith.constant 0 : index
    %c0_74 = arith.constant 0 : index
    %65 = vector.load %arg7[%c1_72, %c0_73, %c0_74] : memref<3x32x32xf32, #tpu.memory_space<vmem>>, vector<1x32x32xf32>
    %66 = vector.shape_cast %65 : vector<1x32x32xf32> to vector<32x32xf32>
    %cst_75 = arith.constant dense<0.000000e+00> : vector<32x16xf32>
    %67 = tpu.matmul %66, %64, %cst_75 {dimension_numbers = #tpu.dot_dimension_numbers<[1], [0], [0], [1], [0, 0, 1, 1], [], []>} : vector<32x32xf32>, vector<32x16xf32>, vector<32x16xf32> -> vector<32x16xf32>
    %c1_76 = arith.constant 1 : index
    %c0_77 = arith.constant 0 : index
    %c0_78 = arith.constant 0 : index
    %68 = vector.load %arg8[%c1_76, %c0_77, %c0_78] : memref<3x32x1xf32, #tpu.memory_space<vmem>>, vector<1x32x1xf32>
    %69 = vector.shape_cast %68 : vector<1x32x1xf32> to vector<32x1xf32>
    %70 = vector.broadcast %69 : vector<32x1xf32> to vector<32x16xf32>
    %71 = arith.addf %67, %70 : vector<32x16xf32>
    %c0_79 = arith.constant 0 : index
    %c0_80 = arith.constant 0 : index
    %72 = vector.load %arg13[%c0_79, %c0_80] : memref<32x16xf32, #tpu.memory_space<vmem>>, vector<32x16xf32>
    %73 = arith.addf %72, %71 : vector<32x16xf32>
    %c0_81 = arith.constant 0 : index
    %c0_82 = arith.constant 0 : index
    %74 = vector.load %arg13[%c0_81, %c0_82] : memref<32x16xf32, #tpu.memory_space<vmem>>, vector<32x16xf32>
    tpu.vector_store %arg13[%c0_81, %c0_82], %73 {strides = array<i32>} : memref<32x16xf32, #tpu.memory_space<vmem>>, vector<32x16xf32>,
    %c0_83 = arith.constant 0 : index
    %c0_84 = arith.constant 0 : index
    %75 = vector.load %arg13[%c0_83, %c0_84] : memref<32x16xf32, #tpu.memory_space<vmem>>, vector<32x16xf32>
    %c0_85 = arith.constant 0 : index
    %c128_86 = arith.constant 128 : index
    %76 = vector.load %arg12[%c0_85, %c128_86] : memref<32x256xf32, #tpu.memory_space<vmem>>, vector<32x16xf32>
    tpu.vector_store %arg12[%c0_85, %c128_86], %75 {strides = array<i32>} : memref<32x256xf32, #tpu.memory_space<vmem>>, vector<32x16xf32>,
    %c0_87 = arith.constant 0 : index
    %c128_88 = arith.constant 128 : index
    %77 = vector.load %arg12[%c0_87, %c128_88] : memref<32x256xf32, #tpu.memory_space<vmem>>, vector<32x16xf32>
    %c0_89 = arith.constant 0 : index
    %c124_90 = arith.constant 124 : index
    %78 = vector.load %arg12[%c0_89, %c124_90] : memref<32x256xf32, #tpu.memory_space<vmem>>, vector<32x16xf32>
    %c0_91 = arith.constant 0 : index
    %c132 = arith.constant 132 : index
    %79 = vector.load %arg12[%c0_91, %c132] : memref<32x256xf32, #tpu.memory_space<vmem>>, vector<32x16xf32>
    %c2_92 = arith.constant 2 : index
    %c1_93 = arith.constant 1 : index
    %c0_94 = arith.constant 0 : index
    %c0_95 = arith.constant 0 : index
    %80 = vector.load %arg5[%c2_92, %c1_93, %c0_94, %c0_95] : memref<3x3x32x32xf32, #tpu.memory_space<vmem>>, vector<1x1x32x32xf32>
    %81 = vector.shape_cast %80 : vector<1x1x32x32xf32> to vector<32x32xf32>
    %cst_96 = arith.constant dense<0.000000e+00> : vector<32x16xf32>
    %82 = tpu.matmul %81, %77, %cst_96 {dimension_numbers = #tpu.dot_dimension_numbers<[1], [0], [0], [1], [0, 0, 1, 1], [], []>} : vector<32x32xf32>, vector<32x16xf32>, vector<32x16xf32> -> vector<32x16xf32>
    %c2_97 = arith.constant 2 : index
    %c0_98 = arith.constant 0 : index
    %c0_99 = arith.constant 0 : index
    %c0_100 = arith.constant 0 : index
    %83 = vector.load %arg5[%c2_97, %c0_98, %c0_99, %c0_100] : memref<3x3x32x32xf32, #tpu.memory_space<vmem>>, vector<1x1x32x32xf32>
    %84 = vector.shape_cast %83 : vector<1x1x32x32xf32> to vector<32x32xf32>
    %cst_101 = arith.constant dense<0.000000e+00> : vector<32x16xf32>
    %85 = tpu.matmul %84, %78, %cst_101 {dimension_numbers = #tpu.dot_dimension_numbers<[1], [0], [0], [1], [0, 0, 1, 1], [], []>} : vector<32x32xf32>, vector<32x16xf32>, vector<32x16xf32> -> vector<32x16xf32>
    %86 = arith.addf %82, %85 : vector<32x16xf32>
    %c2_102 = arith.constant 2 : index
    %c2_103 = arith.constant 2 : index
    %c0_104 = arith.constant 0 : index
    %c0_105 = arith.constant 0 : index
    %87 = vector.load %arg5[%c2_102, %c2_103, %c0_104, %c0_105] : memref<3x3x32x32xf32, #tpu.memory_space<vmem>>, vector<1x1x32x32xf32>
    %88 = vector.shape_cast %87 : vector<1x1x32x32xf32> to vector<32x32xf32>
    %cst_106 = arith.constant dense<0.000000e+00> : vector<32x16xf32>
    %89 = tpu.matmul %88, %79, %cst_106 {dimension_numbers = #tpu.dot_dimension_numbers<[1], [0], [0], [1], [0, 0, 1, 1], [], []>} : vector<32x32xf32>, vector<32x16xf32>, vector<32x16xf32> -> vector<32x16xf32>
    %90 = arith.addf %86, %89 : vector<32x16xf32>
    %c2_107 = arith.constant 2 : index
    %c0_108 = arith.constant 0 : index
    %c0_109 = arith.constant 0 : index
    %91 = vector.load %arg6[%c2_107, %c0_108, %c0_109] : memref<3x32x1xf32, #tpu.memory_space<vmem>>, vector<1x32x1xf32>
    %92 = vector.shape_cast %91 : vector<1x32x1xf32> to vector<32x1xf32>
    %93 = vector.broadcast %92 : vector<32x1xf32> to vector<32x16xf32>
    %94 = arith.addf %90, %93 : vector<32x16xf32>
    %cst_110 = arith.constant 0.000000e+00 : f32
    %95 = vector.broadcast %cst_110 : f32 to vector<32x16xf32>
    %96 = arith.maximumf %94, %95 : vector<32x16xf32>
    %c2_111 = arith.constant 2 : index
    %c0_112 = arith.constant 0 : index
    %c0_113 = arith.constant 0 : index
    %97 = vector.load %arg7[%c2_111, %c0_112, %c0_113] : memref<3x32x32xf32, #tpu.memory_space<vmem>>, vector<1x32x32xf32>
    %98 = vector.shape_cast %97 : vector<1x32x32xf32> to vector<32x32xf32>
    %cst_114 = arith.constant dense<0.000000e+00> : vector<32x16xf32>
    %99 = tpu.matmul %98, %96, %cst_114 {dimension_numbers = #tpu.dot_dimension_numbers<[1], [0], [0], [1], [0, 0, 1, 1], [], []>} : vector<32x32xf32>, vector<32x16xf32>, vector<32x16xf32> -> vector<32x16xf32>
    %c2_115 = arith.constant 2 : index
    %c0_116 = arith.constant 0 : index
    %c0_117 = arith.constant 0 : index
    %100 = vector.load %arg8[%c2_115, %c0_116, %c0_117] : memref<3x32x1xf32, #tpu.memory_space<vmem>>, vector<1x32x1xf32>
    %101 = vector.shape_cast %100 : vector<1x32x1xf32> to vector<32x1xf32>
    %102 = vector.broadcast %101 : vector<32x1xf32> to vector<32x16xf32>
    %103 = arith.addf %99, %102 : vector<32x16xf32>
    %c0_118 = arith.constant 0 : index
    %c0_119 = arith.constant 0 : index
    %104 = vector.load %arg13[%c0_118, %c0_119] : memref<32x16xf32, #tpu.memory_space<vmem>>, vector<32x16xf32>
    %105 = arith.addf %104, %103 : vector<32x16xf32>
    %c0_120 = arith.constant 0 : index
    %c0_121 = arith.constant 0 : index
    %106 = vector.load %arg13[%c0_120, %c0_121] : memref<32x16xf32, #tpu.memory_space<vmem>>, vector<32x16xf32>
    tpu.vector_store %arg13[%c0_120, %c0_121], %105 {strides = array<i32>} : memref<32x16xf32, #tpu.memory_space<vmem>>, vector<32x16xf32>,
    %c0_122 = arith.constant 0 : index
    %c0_123 = arith.constant 0 : index
    %107 = vector.load %arg13[%c0_122, %c0_123] : memref<32x16xf32, #tpu.memory_space<vmem>>, vector<32x16xf32>
    %c0_124 = arith.constant 0 : index
    %c0_125 = arith.constant 0 : index
    %108 = vector.load %arg9[%c0_124, %c0_125] : memref<6x32xf32, #tpu.memory_space<vmem>>, vector<6x32xf32>
    %cst_126 = arith.constant dense<0.000000e+00> : vector<6x16xf32>
    %109 = tpu.matmul %108, %107, %cst_126 {dimension_numbers = #tpu.dot_dimension_numbers<[1], [0], [0], [1], [0, 0, 1, 1], [], []>} : vector<6x32xf32>, vector<32x16xf32>, vector<6x16xf32> -> vector<6x16xf32>
    %c0_127 = arith.constant 0 : index
    %c0_128 = arith.constant 0 : index
    %110 = vector.load %arg10[%c0_127, %c0_128] : memref<6x1xf32, #tpu.memory_space<vmem>>, vector<6x1xf32>
    %111 = vector.broadcast %110 : vector<6x1xf32> to vector<6x16xf32>
    %112 = arith.addf %109, %111 : vector<6x16xf32>
    %c0_129 = arith.constant 0 : index
    %c0_130 = arith.constant 0 : index
    %c0_131 = arith.constant 0 : index
    %113 = vector.load %arg2[%c0_129, %c0_130, %c0_131] : memref<1x1x16xf32, #tpu.memory_space<vmem>>, vector<1x1x16xf32>
    %114 = vector.shape_cast %113 : vector<1x1x16xf32> to vector<1x16xf32>
    %115 = vector.broadcast %114 : vector<1x16xf32> to vector<6x16xf32>
    %116 = arith.mulf %112, %115 : vector<6x16xf32>
    %c0_132 = arith.constant 0 : index
    %c0_133 = arith.constant 0 : index
    %c0_134 = arith.constant 0 : index
    %117 = vector.load %arg11[%c0_132, %c0_133, %c0_134] : memref<1x6x16xf32, #tpu.memory_space<vmem>>, vector<1x6x16xf32>
    %118 = vector.shape_cast %117 : vector<1x6x16xf32> to vector<6x16xf32>
    %119 = vector.shape_cast %116 : vector<6x16xf32> to vector<1x6x16xf32>
    tpu.vector_store %arg11[%c0_132, %c0_133, %c0_134], %119 {strides = array<i32>} : memref<1x6x16xf32, #tpu.memory_space<vmem>>, vector<1x6x16xf32>,
    return
  }
  func.func @transform_0(%arg0: i32) -> (i32, i32, i32) {
    %c0_i32 = arith.constant 0 : i32
    %c0_i32_0 = arith.constant 0 : i32
    %c0_i32_1 = arith.constant 0 : i32
    return %arg0, %c0_i32, %c0_i32_0 : i32, i32, i32
  }
  func.func @transform_1(%arg0: i32) -> (i32, i32, i32) {
    %c0_i32 = arith.constant 0 : i32
    %c0_i32_0 = arith.constant 0 : i32
    %c0_i32_1 = arith.constant 0 : i32
    return %arg0, %c0_i32, %c0_i32_0 : i32, i32, i32
  }
  func.func @transform_2(%arg0: i32) -> (i32, i32) {
    %c0_i32 = arith.constant 0 : i32
    %c0_i32_0 = arith.constant 0 : i32
    %c0_i32_1 = arith.constant 0 : i32
    return %c0_i32, %c0_i32_0 : i32, i32
  }
  func.func @transform_3(%arg0: i32) -> (i32, i32) {
    %c0_i32 = arith.constant 0 : i32
    %c0_i32_0 = arith.constant 0 : i32
    %c0_i32_1 = arith.constant 0 : i32
    return %c0_i32, %c0_i32_0 : i32, i32
  }
  func.func @transform_4(%arg0: i32) -> (i32, i32, i32, i32) {
    %c0_i32 = arith.constant 0 : i32
    %c0_i32_0 = arith.constant 0 : i32
    %c0_i32_1 = arith.constant 0 : i32
    %c0_i32_2 = arith.constant 0 : i32
    %c0_i32_3 = arith.constant 0 : i32
    return %c0_i32, %c0_i32_0, %c0_i32_1, %c0_i32_2 : i32, i32, i32, i32
  }
  func.func @transform_5(%arg0: i32) -> (i32, i32, i32) {
    %c0_i32 = arith.constant 0 : i32
    %c0_i32_0 = arith.constant 0 : i32
    %c0_i32_1 = arith.constant 0 : i32
    %c0_i32_2 = arith.constant 0 : i32
    return %c0_i32, %c0_i32_0, %c0_i32_1 : i32, i32, i32
  }
  func.func @transform_6(%arg0: i32) -> (i32, i32, i32) {
    %c0_i32 = arith.constant 0 : i32
    %c0_i32_0 = arith.constant 0 : i32
    %c0_i32_1 = arith.constant 0 : i32
    %c0_i32_2 = arith.constant 0 : i32
    return %c0_i32, %c0_i32_0, %c0_i32_1 : i32, i32, i32
  }
  func.func @transform_7(%arg0: i32) -> (i32, i32, i32) {
    %c0_i32 = arith.constant 0 : i32
    %c0_i32_0 = arith.constant 0 : i32
    %c0_i32_1 = arith.constant 0 : i32
    %c0_i32_2 = arith.constant 0 : i32
    return %c0_i32, %c0_i32_0, %c0_i32_1 : i32, i32, i32
  }
  func.func @transform_8(%arg0: i32) -> (i32, i32) {
    %c0_i32 = arith.constant 0 : i32
    %c0_i32_0 = arith.constant 0 : i32
    %c0_i32_1 = arith.constant 0 : i32
    return %c0_i32, %c0_i32_0 : i32, i32
  }
  func.func @transform_9(%arg0: i32) -> (i32, i32) {
    %c0_i32 = arith.constant 0 : i32
    %c0_i32_0 = arith.constant 0 : i32
    %c0_i32_1 = arith.constant 0 : i32
    return %c0_i32, %c0_i32_0 : i32, i32
  }
  func.func @transform_10(%arg0: i32) -> (i32, i32, i32) {
    %c0_i32 = arith.constant 0 : i32
    %c0_i32_0 = arith.constant 0 : i32
    %c0_i32_1 = arith.constant 0 : i32
    return %arg0, %c0_i32, %c0_i32_0 : i32, i32, i32
  }
}

</mosaic_0001>

<llo_original>
// kernel: tpu_custom_call.1
$region0: #{tpu_custom_call.1}
  #allocation0 [shape = 'u32[]', space=smem, size = 0x4, offset = 0x4, fixed_abs, tag = 'smem constant byte address 0x4 - core index']
  #allocation1 [shape = 'u32[144,128]{1,0:T(1,128)}', space=vmem, size = 0x12000, scoped, tag = 'internal scratch']
  #allocation2 [shape = 'f32[32,256]{1,0:T(8,128)}', space=vmem, size = 0x8000, scoped, tag = 'scratch operand']
  #allocation3 [shape = 'f32[32,16]{1,0:T(8,128)}', space=vmem, size = 0x4000, scoped, tag = 'scratch operand']
  %s0 = inlined_call_operand.vmem [shape: f32[2,8,16], index: 0, kind: input, shape index: {}]
  %s1 = inlined_call_operand.vmem [shape: f32[2,1,16], index: 1, kind: input, shape index: {}]
  %s2 = inlined_call_operand.vmem [shape: f32[32,8], index: 2, kind: input, shape index: {}]
  %s3 = inlined_call_operand.vmem [shape: f32[32,1], index: 3, kind: input, shape index: {}]
  %s4 = inlined_call_operand.hbm [shape: f32[3,3,32,32], index: 4, kind: input, shape index: {}]
  %s5 = inlined_call_operand.vmem [shape: f32[3,32,1], index: 5, kind: input, shape index: {}]
  %s6 = inlined_call_operand.vmem [shape: f32[3,32,32], index: 6, kind: input, shape index: {}]
  %s7 = inlined_call_operand.vmem [shape: f32[3,32,1], index: 7, kind: input, shape index: {}]
  %s8 = inlined_call_operand.vmem [shape: f32[6,32], index: 8, kind: input, shape index: {}]
  %s9 = inlined_call_operand.vmem [shape: f32[6,1], index: 9, kind: input, shape index: {}]
  %s10 = inlined_call_operand.vmem [shape: f32[2,6,16], index: 10, kind: output, shape index: {}]
  %s11 = sld [smem:[#allocation0]]
  $region77: #{tpu_custom_call.1} parent=0
    _
  %s13 = ssub.s32 1, %s11
  %s14 = scalar_select 0, %s13, %s11
  $region1: #{tpu_custom_call.1} parent=0
    #allocation4 [shape = 'u8[147456]{0}', space=vmem, size = 0x24000, scoped, tag = 'input window, operand 4, single buffered']
    #allocation5 [shape = 's32[2]{0}', space=sflag, size = 0x8, scoped, tag = 'scoped memory for tpu_custom_call.1']
    %15 = vsyncpa [#allocation5], 0
    loop: start=0, step=1, limit=4
    $region2: #{tpu_custom_call.1} parent=1 // loop_pre_header
      _
    $region3: #{tpu_custom_call.1} parent=1 // loop_header
      %s17 = sphi 0, %s21
      %p18 = scmp.ge.s32.totalorder %s17, 4
      %s27 = sphi 0, %s29
      %s30 = sphi 0, %s27
      %s31 = sphi 0, %s30
      %s47 = sphi 0, %s31
      %s53 = sphi 0, %s55
      %s56 = sphi 0, %s53
      %s57 = sphi 0, %s56
      %s73 = sphi 0, %s57
      %s77 = sphi 0, %s77
      %s79 = sphi 0, %s77
      %s80 = sphi 0, %s79
      %s94 = sphi 0, %s80
      %s98 = sphi 0, %s98
      %s100 = sphi 0, %s98
      %s101 = sphi 0, %s100
      %s115 = sphi 0, %s101
      %s119 = sphi 0, %s119
      %s121 = sphi 0, %s119
      %s122 = sphi 0, %s121
      %s136 = sphi 0, %s122
      %s140 = sphi 0, %s140
      %s142 = sphi 0, %s140
      %s143 = sphi 0, %s142
      %s157 = sphi 0, %s143
      %s161 = sphi 0, %s161
      %s163 = sphi 0, %s161
      %s164 = sphi 0, %s163
      %s178 = sphi 0, %s164
      %s182 = sphi 0, %s182
      %s184 = sphi 0, %s182
      %s185 = sphi 0, %s184
      %s199 = sphi 0, %s185
      %s203 = sphi 0, %s203
      %s205 = sphi 0, %s203
      %s206 = sphi 0, %s205
      %s220 = sphi 0, %s206
      %s224 = sphi 0, %s224
      %s226 = sphi 0, %s224
      %s227 = sphi 0, %s226
      %s241 = sphi 0, %s227
      %s247 = sphi 0, %s249
      %s250 = sphi 0, %s247
      %s251 = sphi 0, %s250
      %s267 = sphi 0, %s251
    $region4: #{tpu_custom_call.1} parent=1 // loop_header_branch
      %20 = sbr.rel (%p18) target = $region8
    $region5: #{tpu_custom_call.1} parent=1 // loop_body
      %s22 = ssub.s32 %s17, 1
      %s23 = ssub.s32 %s17, 2
      %s24 = sadd.s32 %s17, 1
      %s25 = ssub.s32 %s17, %s24
      %p26 = scmp.eq.s32.totalorder %s25, 0
      %s28 = sadd.s32 %s27, 1
      %s29 = scalar_select %p26, %s27, %s28
      %p32 = pneg %p26
      %p33 = scmp.eq.s32.totalorder %s17, 1
      %p34 = por %p32, %p33
      %p35 = scmp.ne.s32.totalorder %s27, %s30
      %p36 = scmp.eq.s32.totalorder %s17, 0
      %p37 = por %p35, %p36
      %p38 = scmp.ne.s32.totalorder %s27, %s30
      %p39 = scmp.eq.s32.totalorder %s22, 1
      %p40 = por %p38, %p39
      %p41 = scmp.ne.s32.totalorder %s30, %s31
      %p42 = scmp.eq.s32.totalorder %s22, 0
      %p43 = por %p41, %p42
      %p44 = scmp.ne.s32.totalorder %s30, %s31
      %p45 = scmp.eq.s32.totalorder %s23, 1
      %p46 = por %p44, %p45
      %p48 = scmp.ne.s32.totalorder %s31, %s47
      %p49 = scmp.eq.s32.totalorder %s23, 0
      %p50 = por %p48, %p49
      %s51 = ssub.s32 %s17, %s24
      %p52 = scmp.eq.s32.totalorder %s51, 0
      %s54 = sadd.s32 %s53, 1
      %s55 = scalar_select %p52, %s53, %s54
      %p58 = pneg %p52
      %p59 = scmp.eq.s32.totalorder %s17, 1
      %p60 = por %p58, %p59
      %p61 = scmp.ne.s32.totalorder %s53, %s56
      %p62 = scmp.eq.s32.totalorder %s17, 0
      %p63 = por %p61, %p62
      %p64 = scmp.ne.s32.totalorder %s53, %s56
      %p65 = scmp.eq.s32.totalorder %s22, 1
      %p66 = por %p64, %p65
      %p67 = scmp.ne.s32.totalorder %s56, %s57
      %p68 = scmp.eq.s32.totalorder %s22, 0
      %p69 = por %p67, %p68
      %p70 = scmp.ne.s32.totalorder %s56, %s57
      %p71 = scmp.eq.s32.totalorder %s23, 1
      %p72 = por %p70, %p71
      %p74 = scmp.ne.s32.totalorder %s57, %s73
      %p75 = scmp.eq.s32.totalorder %s23, 0
      %p76 = por %p74, %p75
      %s78 = sadd.s32 %s77, 1
      %p81 = scmp.eq.s32.totalorder %s17, 1
      %p82 = scmp.ne.s32.totalorder %s77, %s79
      %p83 = scmp.eq.s32.totalorder %s17, 0
      %p84 = por %p82, %p83
      %p85 = scmp.ne.s32.totalorder %s77, %s79
      %p86 = scmp.eq.s32.totalorder %s22, 1
      %p87 = por %p85, %p86
      %p88 = scmp.ne.s32.totalorder %s79, %s80
      %p89 = scmp.eq.s32.totalorder %s22, 0
      %p90 = por %p88, %p89
      %p91 = scmp.ne.s32.totalorder %s79, %s80
      %p92 = scmp.eq.s32.totalorder %s23, 1
      %p93 = por %p91, %p92
      %p95 = scmp.ne.s32.totalorder %s80, %s94
      %p96 = scmp.eq.s32.totalorder %s23, 0
      %p97 = por %p95, %p96
      %s99 = sadd.s32 %s98, 1
      %p102 = scmp.eq.s32.totalorder %s17, 1
      %p103 = scmp.ne.s32.totalorder %s98, %s100
      %p104 = scmp.eq.s32.totalorder %s17, 0
      %p105 = por %p103, %p104
      %p106 = scmp.ne.s32.totalorder %s98, %s100
      %p107 = scmp.eq.s32.totalorder %s22, 1
      %p108 = por %p106, %p107
      %p109 = scmp.ne.s32.totalorder %s100, %s101
      %p110 = scmp.eq.s32.totalorder %s22, 0
      %p111 = por %p109, %p110
      %p112 = scmp.ne.s32.totalorder %s100, %s101
      %p113 = scmp.eq.s32.totalorder %s23, 1
      %p114 = por %p112, %p113
      %p116 = scmp.ne.s32.totalorder %s101, %s115
      %p117 = scmp.eq.s32.totalorder %s23, 0
      %p118 = por %p116, %p117
      %s120 = sadd.s32 %s119, 1
      %p123 = scmp.eq.s32.totalorder %s17, 1
      %p124 = scmp.ne.s32.totalorder %s119, %s121
      %p125 = scmp.eq.s32.totalorder %s17, 0
      %p126 = por %p124, %p125
      %p127 = scmp.ne.s32.totalorder %s119, %s121
      %p128 = scmp.eq.s32.totalorder %s22, 1
      %p129 = por %p127, %p128
      %p130 = scmp.ne.s32.totalorder %s121, %s122
      %p131 = scmp.eq.s32.totalorder %s22, 0
      %p132 = por %p130, %p131
      %p133 = scmp.ne.s32.totalorder %s121, %s122
      %p134 = scmp.eq.s32.totalorder %s23, 1
      %p135 = por %p133, %p134
      %p137 = scmp.ne.s32.totalorder %s122, %s136
      %p138 = scmp.eq.s32.totalorder %s23, 0
      %p139 = por %p137, %p138
      %s141 = sadd.s32 %s140, 1
      %p144 = scmp.eq.s32.totalorder %s17, 1
      %p145 = scmp.ne.s32.totalorder %s140, %s142
      %p146 = scmp.eq.s32.totalorder %s17, 0
      %p147 = por %p145, %p146
      %p148 = scmp.ne.s32.totalorder %s140, %s142
      %p149 = scmp.eq.s32.totalorder %s22, 1
      %p150 = por %p148, %p149
      %p151 = scmp.ne.s32.totalorder %s142, %s143
      %p152 = scmp.eq.s32.totalorder %s22, 0
      %p153 = por %p151, %p152
      %p154 = scmp.ne.s32.totalorder %s142, %s143
      %p155 = scmp.eq.s32.totalorder %s23, 1
      %p156 = por %p154, %p155
      %p158 = scmp.ne.s32.totalorder %s143, %s157
      %p159 = scmp.eq.s32.totalorder %s23, 0
      %p160 = por %p158, %p159
      %s162 = sadd.s32 %s161, 1
      %p165 = scmp.eq.s32.totalorder %s17, 1
      %p166 = scmp.ne.s32.totalorder %s161, %s163
      %p167 = scmp.eq.s32.totalorder %s17, 0
      %p168 = por %p166, %p167
      %p169 = scmp.ne.s32.totalorder %s161, %s163
      %p170 = scmp.eq.s32.totalorder %s22, 1
      %p171 = por %p169, %p170
      %p172 = scmp.ne.s32.totalorder %s163, %s164
      %p173 = scmp.eq.s32.totalorder %s22, 0
      %p174 = por %p172, %p173
      %p175 = scmp.ne.s32.totalorder %s163, %s164
      %p176 = scmp.eq.s32.totalorder %s23, 1
      %p177 = por %p175, %p176
      %p179 = scmp.ne.s32.totalorder %s164, %s178
      %p180 = scmp.eq.s32.totalorder %s23, 0
      %p181 = por %p179, %p180
      %s183 = sadd.s32 %s182, 1
      %p186 = scmp.eq.s32.totalorder %s17, 1
      %p187 = scmp.ne.s32.totalorder %s182, %s184
      %p188 = scmp.eq.s32.totalorder %s17, 0
      %p189 = por %p187, %p188
      %p190 = scmp.ne.s32.totalorder %s182, %s184
      %p191 = scmp.eq.s32.totalorder %s22, 1
      %p192 = por %p190, %p191
      %p193 = scmp.ne.s32.totalorder %s184, %s185
      %p194 = scmp.eq.s32.totalorder %s22, 0
      %p195 = por %p193, %p194
      %p196 = scmp.ne.s32.totalorder %s184, %s185
      %p197 = scmp.eq.s32.totalorder %s23, 1
      %p198 = por %p196, %p197
      %p200 = scmp.ne.s32.totalorder %s185, %s199
      %p201 = scmp.eq.s32.totalorder %s23, 0
      %p202 = por %p200, %p201
      %s204 = sadd.s32 %s203, 1
      %p207 = scmp.eq.s32.totalorder %s17, 1
      %p208 = scmp.ne.s32.totalorder %s203, %s205
      %p209 = scmp.eq.s32.totalorder %s17, 0
      %p210 = por %p208, %p209
      %p211 = scmp.ne.s32.totalorder %s203, %s205
      %p212 = scmp.eq.s32.totalorder %s22, 1
      %p213 = por %p211, %p212
      %p214 = scmp.ne.s32.totalorder %s205, %s206
      %p215 = scmp.eq.s32.totalorder %s22, 0
      %p216 = por %p214, %p215
      %p217 = scmp.ne.s32.totalorder %s205, %s206
      %p218 = scmp.eq.s32.totalorder %s23, 1
      %p219 = por %p217, %p218
      %p221 = scmp.ne.s32.totalorder %s206, %s220
      %p222 = scmp.eq.s32.totalorder %s23, 0
      %p223 = por %p221, %p222
      %s225 = sadd.s32 %s224, 1
      %p228 = scmp.eq.s32.totalorder %s17, 1
      %p229 = scmp.ne.s32.totalorder %s224, %s226
      %p230 = scmp.eq.s32.totalorder %s17, 0
      %p231 = por %p229, %p230
      %p232 = scmp.ne.s32.totalorder %s224, %s226
      %p233 = scmp.eq.s32.totalorder %s22, 1
      %p234 = por %p232, %p233
      %p235 = scmp.ne.s32.totalorder %s226, %s227
      %p236 = scmp.eq.s32.totalorder %s22, 0
      %p237 = por %p235, %p236
      %p238 = scmp.ne.s32.totalorder %s226, %s227
      %p239 = scmp.eq.s32.totalorder %s23, 1
      %p240 = por %p238, %p239
      %p242 = scmp.ne.s32.totalorder %s227, %s241
      %p243 = scmp.eq.s32.totalorder %s23, 0
      %p244 = por %p242, %p243
      %s245 = ssub.s32 %s17, %s24
      %p246 = scmp.eq.s32.totalorder %s245, 0
      %s248 = sadd.s32 %s247, 1
      %s249 = scalar_select %p246, %s247, %s248
      %p252 = pneg %p246
      %p253 = scmp.eq.s32.totalorder %s17, 1
      %p254 = por %p252, %p253
      %p255 = scmp.ne.s32.totalorder %s247, %s250
      %p256 = scmp.eq.s32.totalorder %s17, 0
      %p257 = por %p255, %p256
      %p258 = scmp.ne.s32.totalorder %s247, %s250
      %p259 = scmp.eq.s32.totalorder %s22, 1
      %p260 = por %p258, %p259
      %p261 = scmp.ne.s32.totalorder %s250, %s251
      %p262 = scmp.eq.s32.totalorder %s22, 0
      %p263 = por %p261, %p262
      %p264 = scmp.ne.s32.totalorder %s250, %s251
      %p265 = scmp.eq.s32.totalorder %s23, 1
      %p266 = por %p264, %p265
      %p268 = scmp.ne.s32.totalorder %s251, %s267
      %p269 = scmp.eq.s32.totalorder %s23, 0
      %p270 = por %p268, %p269
      %p271 = scmp.le.s32.totalorder 1, %s17
      %p272 = scmp.lt.s32.totalorder %s17, 3
      %p273 = pnand %p271, %p272
      %p274 = pneg %p273
      // Predicated region
      $region9: #{tpu_custom_call.1} parent=5 // pred_check
        _
      $region10: #{tpu_custom_call.1} parent=5 // pred_check_branch
        %276 = sbr.rel (%p273) target = $region12
      $region11: #{tpu_custom_call.1} parent=5 // pred_region
        %s277 = ssub.s32 %s17, 1
        // Predicated region
        $region13: #{tpu_custom_call.1} parent=11 // pred_check
          %p278 = pneg %p90
        $region14: #{tpu_custom_call.1} parent=11 // pred_check_branch
          %280 = sbr.rel (%p278) target = $region16
        $region15: #{tpu_custom_call.1} parent=11 // pred_region
          _
        $region16: #{tpu_custom_call.1} parent=11 // pred_fallthru
          _
        // Predicated region
        $region17: #{tpu_custom_call.1} parent=11 // pred_check
          %p281 = pneg %p111
        $region18: #{tpu_custom_call.1} parent=11 // pred_check_branch
          %283 = sbr.rel (%p281) target = $region20
        $region19: #{tpu_custom_call.1} parent=11 // pred_region
          _
        $region20: #{tpu_custom_call.1} parent=11 // pred_fallthru
          _
        // Predicated region
        $region21: #{tpu_custom_call.1} parent=11 // pred_check
          %p284 = pneg %p132
        $region22: #{tpu_custom_call.1} parent=11 // pred_check_branch
          %286 = sbr.rel (%p284) target = $region24
        $region23: #{tpu_custom_call.1} parent=11 // pred_region
          %s288 = ssub.s32 4608, 4608
          %289 = vsyncadd [#allocation5], %s288
          %s290 = sshll.u32 [#allocation4], 4
          %s291 = int_to_ptr.vmem [resolvable:$true] %s290
          %296 = dma.hbm_to_vmem [thread:$0]  %s4, 4608, %s291, [#allocation5], 128, 128, 8
        $region24: #{tpu_custom_call.1} parent=11 // pred_fallthru
          _
        // Predicated region
        $region25: #{tpu_custom_call.1} parent=11 // pred_check
          %p297 = pneg %p153
        $region26: #{tpu_custom_call.1} parent=11 // pred_check_branch
          %299 = sbr.rel (%p297) target = $region28
        $region27: #{tpu_custom_call.1} parent=11 // pred_region
          _
        $region28: #{tpu_custom_call.1} parent=11 // pred_fallthru
          _
        // Predicated region
        $region29: #{tpu_custom_call.1} parent=11 // pred_check
          %p300 = pneg %p174
        $region30: #{tpu_custom_call.1} parent=11 // pred_check_branch
          %302 = sbr.rel (%p300) target = $region32
        $region31: #{tpu_custom_call.1} parent=11 // pred_region
          _
        $region32: #{tpu_custom_call.1} parent=11 // pred_fallthru
          _
        // Predicated region
        $region33: #{tpu_custom_call.1} parent=11 // pred_check
          %p303 = pneg %p195
        $region34: #{tpu_custom_call.1} parent=11 // pred_check_branch
          %305 = sbr.rel (%p303) target = $region36
        $region35: #{tpu_custom_call.1} parent=11 // pred_region
          _
        $region36: #{tpu_custom_call.1} parent=11 // pred_fallthru
          _
        // Predicated region
        $region37: #{tpu_custom_call.1} parent=11 // pred_check
          %p306 = pneg %p216
        $region38: #{tpu_custom_call.1} parent=11 // pred_check_branch
          %308 = sbr.rel (%p306) target = $region40
        $region39: #{tpu_custom_call.1} parent=11 // pred_region
          _
        $region40: #{tpu_custom_call.1} parent=11 // pred_fallthru
          _
        // Predicated region
        $region41: #{tpu_custom_call.1} parent=11 // pred_check
          %p309 = pneg %p237
        $region42: #{tpu_custom_call.1} parent=11 // pred_check_branch
          %311 = sbr.rel (%p309) target = $region44
        $region43: #{tpu_custom_call.1} parent=11 // pred_region
          _
        $region44: #{tpu_custom_call.1} parent=11 // pred_fallthru
          _
      $region12: #{tpu_custom_call.1} parent=5 // pred_fallthru
        _
      %p312 = scmp.lt.s32.totalorder %s17, 2
      // Predicated region
      $region45: #{tpu_custom_call.1} parent=5 // pred_check
        %p313 = pneg %p312
      $region46: #{tpu_custom_call.1} parent=5 // pred_check_branch
        %315 = sbr.rel (%p313) target = $region48
      $region47: #{tpu_custom_call.1} parent=5 // pred_region
        // Predicated region
        $region49: #{tpu_custom_call.1} parent=47 // pred_check
          %p316 = pneg %p37
        $region50: #{tpu_custom_call.1} parent=47 // pred_check_branch
          %318 = sbr.rel (%p316) target = $region52
        $region51: #{tpu_custom_call.1} parent=47 // pred_region
          %p319 = scmp.lt.s32.totalorder %s17, 1
          %s320 = scalar_select %p319, %s17, 1
          %s321 = smul.addr %s320, 8
          %s322 = scalar_lea.vmem %s0, %s321
        $region52: #{tpu_custom_call.1} parent=47 // pred_fallthru
          _
        // Predicated region
        $region53: #{tpu_custom_call.1} parent=47 // pred_check
          %p323 = pneg %p63
        $region54: #{tpu_custom_call.1} parent=47 // pred_check_branch
          %325 = sbr.rel (%p323) target = $region56
        $region55: #{tpu_custom_call.1} parent=47 // pred_region
          %p326 = scmp.lt.s32.totalorder %s17, 1
          %s327 = scalar_select %p326, %s17, 1
          %s328 = scalar_lea.vmem %s1, %s327
        $region56: #{tpu_custom_call.1} parent=47 // pred_fallthru
          _
      $region48: #{tpu_custom_call.1} parent=5 // pred_fallthru
        _
      %p329 = scmp.le.s32.totalorder 1, %s17
      %p330 = scmp.lt.s32.totalorder %s17, 3
      %p331 = pnand %p329, %p330
      %p332 = pneg %p331
      // Predicated region
      $region57: #{tpu_custom_call.1} parent=5 // pred_check
        _
      $region58: #{tpu_custom_call.1} parent=5 // pred_check_branch
        %334 = sbr.rel (%p331) target = $region60
      $region59: #{tpu_custom_call.1} parent=5 // pred_region
        %s335 = ssub.s32 %s17, 1
        // Predicated region
        $region61: #{tpu_custom_call.1} parent=59 // pred_check
          %p336 = pneg %p132
        $region62: #{tpu_custom_call.1} parent=59 // pred_check_branch
          %338 = sbr.rel (%p336) target = $region64
        $region63: #{tpu_custom_call.1} parent=59 // pred_region
          %339 = dma.done [#allocation5], 4608
        $region64: #{tpu_custom_call.1} parent=59 // pred_fallthru
          _
        %p340 = scmp.lt.s32.totalorder %s22, 1
        %s341 = scalar_select %p340, %s22, 1
        %s342 = smul.addr %s341, 8
        %s343 = scalar_lea.vmem %s0, %s342
        %p344 = pneg %p43
        %p345 = pneg %p40
        %p346 = scmp.lt.s32.totalorder %s22, 1
        %s347 = scalar_select %p346, %s22, 1
        %s348 = scalar_lea.vmem %s1, %s347
        %p349 = pneg %p69
        %p350 = pneg %p66
        %p351 = pneg %p90
        %p352 = pneg %p87
        %p353 = pneg %p111
        %p354 = pneg %p108
        %p355 = pneg %p132
        %p356 = pneg %p129
        %p357 = pneg %p153
        %p358 = pneg %p150
        %p359 = pneg %p174
        %p360 = pneg %p171
        %p361 = pneg %p195
        %p362 = pneg %p192
        %p363 = pneg %p216
        %p364 = pneg %p213
        %p365 = pneg %p237
        %p366 = pneg %p234
        %p367 = pneg %p263
        %p368 = pneg %p260
        %p369 = scmp.lt.s32.totalorder %s22, 1
        %s370 = scalar_select %p369, %s22, 1
        %s371 = smul.addr %s370, 8
        %s372 = scalar_lea.vmem %s10, %s371
        %p373 = scmp.lt.s32.totalorder %s22, 1
        %s374 = scalar_select %p373, %s22, 1
        %s375 = smul.addr %s374, 8
        %s376 = scalar_lea.vmem %s0, %s375
        %p377 = scmp.lt.s32.totalorder %s22, 1
        %s378 = scalar_select %p377, %s22, 1
        %s379 = scalar_lea.vmem %s1, %s378
        %p380 = scmp.lt.s32.totalorder %s22, 1
        %s381 = scalar_select %p380, %s22, 1
        %s382 = smul.addr %s381, 8
        %s383 = scalar_lea.vmem %s10, %s382
        %vm384 = vcmask 1048544
        %385 = vst.msk [vmem:[#allocation2] sm:$0xff] %vm384, 0.0
        %386 = vst.msk [vmem:[#allocation2 + $0x10] sm:$0xff] %vm384, 0.0
        %387 = vst.msk [vmem:[#allocation2 + $0x20] sm:$0xff] %vm384, 0.0
        %388 = vst.msk [vmem:[#allocation2 + $0x30] sm:$0xff] %vm384, 0.0
        %vm389 = vcmask 162944
        %390 = vst.msk [vmem:[#allocation2 + $0x8] sm:$0xff] %vm389, 0.0
        %391 = vst.msk [vmem:[#allocation2 + $0x18] sm:$0xff] %vm389, 0.0
        %392 = vst.msk [vmem:[#allocation2 + $0x28] sm:$0xff] %vm389, 0.0
        %393 = vst.msk [vmem:[#allocation2 + $0x38] sm:$0xff] %vm389, 0.0
        %v394 = vld [vmem:[%s376] sm:$0xff]
        %v395 = vld [vmem:[%s2] sm:$0xff]
        %v396 = vld [vmem:[%s2 + $0x8] sm:$0xff]
        %v397 = vld [vmem:[%s2 + $0x10] sm:$0xff]
        %v398 = vld [vmem:[%s2 + $0x18] sm:$0xff]
        %v399 = vld [vmem:[%s3] sm:$0xff]
        %v400 = vld [vmem:[%s3 + $0x8] sm:$0xff]
        %v401 = vld [vmem:[%s3 + $0x10] sm:$0xff]
        %v402 = vld [vmem:[%s3 + $0x18] sm:$0xff]
        %404 = vset.pattern.permute.xlu0 0
        %405 = vperm.xlu0 %404, %v399
        %v406 = vpop.permute.xlu0 %405
        %409 = vset.pattern.permute.xlu0 0
        %410 = vperm.xlu0 %409, %v400
        %v411 = vpop.permute.xlu0 %410
        %414 = vset.pattern.permute.xlu0 0
        %415 = vperm.xlu0 %414, %v401
        %v416 = vpop.permute.xlu0 %415
        %419 = vset.pattern.permute.xlu0 0
        %420 = vperm.xlu0 %419, %v402
        %v421 = vpop.permute.xlu0 %420
        %vm423 = vcmask 64512
        %v425 = vsel %vm423, %v395, 0
        %v428 = vsel %vm423, %v396, 0
        %v431 = vsel %vm423, %v397, 0
        %v434 = vsel %vm423, %v398, 0
        %436 = vmatprep.subr.mxu0 0.0
        %437 = vmatpush1.msra.mxu0 0.0
        %438 = vmatprep.subr.mxu0 0.0
        %439 = vmatpush1.msra.mxu0 0.0
        %440 = vmatprep.subr.mxu0 0.0
        %441 = vmatpush1.msra.mxu0 0.0
        %442 = vmatprep.subr.mxu0 0.0
        %443 = vmatpush1.msra.mxu0 0.0
        %444 = vmatprep.subr.mxu0 0.0
        %445 = vmatpush1.msra.mxu0 0.0
        %446 = vmatprep.subr.mxu0 0.0
        %447 = vmatpush1.msra.mxu0 0.0
        %448 = vmatprep.subr.mxu0 0.0
        %449 = vmatpush1.msra.mxu0 0.0
        %450 = vmatprep.subr.mxu0 0.0
        %451 = vmatpush1.msra.mxu0 0.0
        %452 = vmatprep.subr.mxu0 0.0
        %453 = vmatpush1.msra.mxu0 0.0
        %454 = vmatprep.subr.mxu0 0.0
        %455 = vmatpush1.msra.mxu0 0.0
        %456 = vmatprep.subr.mxu0 0.0
        %457 = vmatpush1.msra.mxu0 0.0
        %458 = vmatprep.subr.mxu0 0.0
        %459 = vmatpush1.msra.mxu0 0.0
        %460 = vmatprep.subr.mxu0 0.0
        %461 = vmatpush1.msra.mxu0 0.0
        %462 = vmatprep.subr.mxu0 0.0
        %463 = vmatpush1.msra.mxu0 0.0
        %464 = vmatprep.subr.mxu0 0.0
        %465 = vmatpush1.msra.mxu0 0.0
        %466 = vmatprep.subr.mxu0 0.0
        %467 = vmatpush1.msra.mxu0 %v394
        %468 = vmatprep.subr.mxu0 0.0
        %469 = vmatpush2.msra.mxu0 0.0
        %470 = vmatprep.subr.mxu0 0.0
        %471 = vmatpush2.msra.mxu0 0.0
        %472 = vmatprep.subr.mxu0 0.0
        %473 = vmatpush2.msra.mxu0 0.0
        %474 = vmatprep.subr.mxu0 0.0
        %475 = vmatpush2.msra.mxu0 0.0
        %476 = vmatprep.subr.mxu0 0.0
        %477 = vmatpush2.msra.mxu0 0.0
        %478 = vmatprep.subr.mxu0 0.0
        %479 = vmatpush2.msra.mxu0 0.0
        %480 = vmatprep.subr.mxu0 0.0
        %481 = vmatpush2.msra.mxu0 0.0
        %482 = vmatprep.subr.mxu0 0.0
        %483 = vmatpush2.msra.mxu0 0.0
        %484 = vmatprep.subr.mxu0 0.0
        %485 = vmatpush2.msra.mxu0 0.0
        %486 = vmatprep.subr.mxu0 0.0
        %487 = vmatpush2.msra.mxu0 0.0
        %488 = vmatprep.subr.mxu0 0.0
        %489 = vmatpush2.msra.mxu0 0.0
        %490 = vmatprep.subr.mxu0 0.0
        %491 = vmatpush2.msra.mxu0 0.0
        %492 = vmatprep.subr.mxu0 0.0
        %493 = vmatpush2.msra.mxu0 0.0
        %494 = vmatprep.subr.mxu0 0.0
        %495 = vmatpush2.msra.mxu0 0.0
        %496 = vmatprep.subr.mxu0 0.0
        %497 = vmatpush2.msra.mxu0 0.0
        %498 = vmatprep.subr.mxu0 0.0
        %499 = vmatpush2.msra.mxu0 0.0
        %500 = vmatprep.mubr.f32.mxu0 0.0
        %501 = vmatmul.mubr.f32.gmra.mxu0 %v425
        %v502 = vpop.f32.mrf.mxu0
        %v503 = vadd.f32 %v406, %v502
        %v504 = vpop.f32.mrf.mxu0
        %505 = vmatprep.mubr.f32.mxu0 0.0
        %506 = vmatmul.mubr.f32.gmra.mxu0 %v428
        %v507 = vpop.f32.mrf.mxu0
        %v508 = vadd.f32 %v411, %v507
        %v509 = vpop.f32.mrf.mxu0
        %510 = vmatprep.mubr.f32.mxu0 0.0
        %511 = vmatmul.mubr.f32.gmra.mxu0 %v431
        %v512 = vpop.f32.mrf.mxu0
        %v513 = vadd.f32 %v416, %v512
        %v514 = vpop.f32.mrf.mxu0
        %515 = vmatprep.mubr.f32.mxu0 0.0
        %516 = vmatmul.mubr.f32.gmra.mxu0 %v434
        %v517 = vpop.f32.mrf.mxu0
        %v518 = vadd.f32 %v421, %v517
        %v519 = vpop.f32.mrf.mxu0
        %520 = vdwg.mxu0
        %vm521 = vcmask 130048
        %522 = vst.msk [vmem:[#allocation3] sm:$0xff] %vm521, %v503
        %523 = vst.msk [vmem:[#allocation3 + $0x8] sm:$0xff] %vm521, %v508
        %524 = vst.msk [vmem:[#allocation3 + $0x10] sm:$0xff] %vm521, %v513
        %525 = vst.msk [vmem:[#allocation3 + $0x18] sm:$0xff] %vm521, %v518
        %526 = vst.msk [vmem:[#allocation2 + $0x8] sm:$0xff] %vm521, %v503
        %527 = vst.msk [vmem:[#allocation2 + $0x18] sm:$0xff] %vm521, %v508
        %528 = vst.msk [vmem:[#allocation2 + $0x28] sm:$0xff] %vm521, %v513
        %529 = vst.msk [vmem:[#allocation2 + $0x38] sm:$0xff] %vm521, %v518
        %v530 = vld [vmem:[#allocation2 + $0x8] sm:$0xff]
        %v531 = vld [vmem:[#allocation2 + $0x18] sm:$0xff]
        %v532 = vld [vmem:[#allocation2 + $0x28] sm:$0xff]
        %v533 = vld [vmem:[#allocation2 + $0x38] sm:$0xff]
        %v534 = vld [vmem:[#allocation2] sm:$0xff]
        %v535 = vld [vmem:[#allocation2 + $0x10] sm:$0xff]
        %v536 = vld [vmem:[#allocation2 + $0x20] sm:$0xff]
        %v537 = vld [vmem:[#allocation2 + $0x30] sm:$0xff]
        %s538 = scalar_lea.vmem [#allocation4], 32
        %v539 = vld [vmem:[%s538] sm:$0xff]
        %v540 = vld [vmem:[%s538 + $0x8] sm:$0xff]
        %v541 = vld [vmem:[%s538 + $0x10] sm:$0xff]
        %v542 = vld [vmem:[%s538 + $0x18] sm:$0xff]
        %v543 = vld [vmem:[#allocation4] sm:$0xff]
        %v544 = vld [vmem:[#allocation4 + $0x8] sm:$0xff]
        %v545 = vld [vmem:[#allocation4 + $0x10] sm:$0xff]
        %v546 = vld [vmem:[#allocation4 + $0x18] sm:$0xff]
        %555 = vrot.lane.b32.xlu0 %v534, 1
        %v556 = vpop.permute.xlu0 %555
        %557 = vrot.lane.b32.xlu0 %v530, 1
        %v558 = vpop.permute.xlu0 %557
        %559 = vrot.lane.b32.xlu0 %v535, 1
        %v560 = vpop.permute.xlu0 %559
        %561 = vrot.lane.b32.xlu0 %v531, 1
        %v562 = vpop.permute.xlu0 %561
        %563 = vrot.lane.b32.xlu0 %v536, 1
        %v564 = vpop.permute.xlu0 %563
        %565 = vrot.lane.b32.xlu0 %v532, 1
        %v566 = vpop.permute.xlu0 %565
        %567 = vrot.lane.b32.xlu0 %v537, 1
        %v568 = vpop.permute.xlu0 %567
        %569 = vrot.lane.b32.xlu0 %v533, 1
        %v570 = vpop.permute.xlu0 %569
        %vm571 = vcmask 7168
        %v572 = vsel %vm571, %v556, %v558
        %v573 = vsel %vm571, %v560, %v562
        %v574 = vsel %vm571, %v564, %v566
        %v575 = vsel %vm571, %v568, %v570
        %vm580 = vcmask 261120
        %v582 = vsel %vm580, %v543, 0
        %v585 = vsel %vm580, %v544, 0
        %v588 = vsel %vm580, %v545, 0
        %v591 = vsel %vm580, %v546, 0
        %593 = vmatprep.subr.mxu0 0.0
        %594 = vmatpush1.msra.mxu0 0.0
        %595 = vmatprep.subr.mxu0 0.0
        %596 = vmatpush1.msra.mxu0 0.0
        %597 = vmatprep.subr.mxu0 0.0
        %598 = vmatpush1.msra.mxu0 0.0
        %599 = vmatprep.subr.mxu0 0.0
        %600 = vmatpush1.msra.mxu0 0.0
        %601 = vmatprep.subr.mxu0 0.0
        %602 = vmatpush1.msra.mxu0 0.0
        %603 = vmatprep.subr.mxu0 0.0
        %604 = vmatpush1.msra.mxu0 0.0
        %605 = vmatprep.subr.mxu0 0.0
        %606 = vmatpush1.msra.mxu0 0.0
        %607 = vmatprep.subr.mxu0 0.0
        %608 = vmatpush1.msra.mxu0 0.0
        %609 = vmatprep.subr.mxu0 0.0
        %610 = vmatpush1.msra.mxu0 0.0
        %611 = vmatprep.subr.mxu0 0.0
        %612 = vmatpush1.msra.mxu0 0.0
        %613 = vmatprep.subr.mxu0 0.0
        %614 = vmatpush1.msra.mxu0 0.0
        %615 = vmatprep.subr.mxu0 0.0
        %616 = vmatpush1.msra.mxu0 0.0
        %617 = vmatprep.subr.mxu0 0.0
        %618 = vmatpush1.msra.mxu0 %v575
        %619 = vmatprep.subr.mxu0 0.0
        %620 = vmatpush1.msra.mxu0 %v574
        %621 = vmatprep.subr.mxu0 0.0
        %622 = vmatpush1.msra.mxu0 %v573
        %623 = vmatprep.subr.mxu0 0.0
        %624 = vmatpush1.msra.mxu0 %v572
        %625 = vmatprep.subr.mxu0 0.0
        %626 = vmatpush2.msra.mxu0 0.0
        %627 = vmatprep.subr.mxu0 0.0
        %628 = vmatpush2.msra.mxu0 0.0
        %629 = vmatprep.subr.mxu0 0.0
        %630 = vmatpush2.msra.mxu0 0.0
        %631 = vmatprep.subr.mxu0 0.0
        %632 = vmatpush2.msra.mxu0 0.0
        %633 = vmatprep.subr.mxu0 0.0
        %634 = vmatpush2.msra.mxu0 0.0
        %635 = vmatprep.subr.mxu0 0.0
        %636 = vmatpush2.msra.mxu0 0.0
        %637 = vmatprep.subr.mxu0 0.0
        %638 = vmatpush2.msra.mxu0 0.0
        %639 = vmatprep.subr.mxu0 0.0
        %640 = vmatpush2.msra.mxu0 0.0
        %641 = vmatprep.subr.mxu0 0.0
        %642 = vmatpush2.msra.mxu0 0.0
        %643 = vmatprep.subr.mxu0 0.0
        %644 = vmatpush2.msra.mxu0 0.0
        %645 = vmatprep.subr.mxu0 0.0
        %646 = vmatpush2.msra.mxu0 0.0
        %647 = vmatprep.subr.mxu0 0.0
        %648 = vmatpush2.msra.mxu0 0.0
        %649 = vmatprep.subr.mxu0 0.0
        %650 = vmatpush2.msra.mxu0 0.0
        %651 = vmatprep.subr.mxu0 0.0
        %652 = vmatpush2.msra.mxu0 0.0
        %653 = vmatprep.subr.mxu0 0.0
        %654 = vmatpush2.msra.mxu0 0.0
        %655 = vmatprep.subr.mxu0 0.0
        %656 = vmatpush2.msra.mxu0 0.0
        %657 = vmatprep.mubr.f32.mxu0 0.0
        %658 = vmatmul.mubr.f32.gmra.mxu0 %v582
        %v659 = vpop.f32.mrf.mxu0
        %v660 = vadd.f32 0.0, %v659
        %v661 = vpop.f32.mrf.mxu0
        %662 = vmatprep.mubr.f32.mxu0 0.0
        %663 = vmatmul.mubr.f32.gmra.mxu0 %v585
        %v664 = vpop.f32.mrf.mxu0
        %v665 = vadd.f32 0.0, %v664
        %v666 = vpop.f32.mrf.mxu0
        %667 = vmatprep.mubr.f32.mxu0 0.0
        %668 = vmatmul.mubr.f32.gmra.mxu0 %v588
        %v669 = vpop.f32.mrf.mxu0
        %v670 = vadd.f32 0.0, %v669
        %v671 = vpop.f32.mrf.mxu0
        %672 = vmatprep.mubr.f32.mxu0 0.0
        %673 = vmatmul.mubr.f32.gmra.mxu0 %v591
        %v674 = vpop.f32.mrf.mxu0
        %v675 = vadd.f32 0.0, %v674
        %v676 = vpop.f32.mrf.mxu0
        %677 = vdwg.mxu0
        %v679 = vsel %vm580, %v539, 0
        %v682 = vsel %vm580, %v540, 0
        %v685 = vsel %vm580, %v541, 0
        %v688 = vsel %vm580, %v542, 0
        %690 = vmatprep.subr.mxu0 0.0
        %691 = vmatpush1.msra.mxu0 0.0
        %692 = vmatprep.subr.mxu0 0.0
        %693 = vmatpush1.msra.mxu0 0.0
        %694 = vmatprep.subr.mxu0 0.0
        %695 = vmatpush1.msra.mxu0 0.0
        %696 = vmatprep.subr.mxu0 0.0
        %697 = vmatpush1.msra.mxu0 0.0
        %698 = vmatprep.subr.mxu0 0.0
        %699 = vmatpush1.msra.mxu0 0.0
        %700 = vmatprep.subr.mxu0 0.0
        %701 = vmatpush1.msra.mxu0 0.0
        %702 = vmatprep.subr.mxu0 0.0
        %703 = vmatpush1.msra.mxu0 0.0
        %704 = vmatprep.subr.mxu0 0.0
        %705 = vmatpush1.msra.mxu0 0.0
        %706 = vmatprep.subr.mxu0 0.0
        %707 = vmatpush1.msra.mxu0 0.0
        %708 = vmatprep.subr.mxu0 0.0
        %709 = vmatpush1.msra.mxu0 0.0
        %710 = vmatprep.subr.mxu0 0.0
        %711 = vmatpush1.msra.mxu0 0.0
        %712 = vmatprep.subr.mxu0 0.0
        %713 = vmatpush1.msra.mxu0 0.0
        %714 = vmatprep.subr.mxu0 0.0
        %715 = vmatpush1.msra.mxu0 %v533
        %716 = vmatprep.subr.mxu0 0.0
        %717 = vmatpush1.msra.mxu0 %v532
        %718 = vmatprep.subr.mxu0 0.0
        %719 = vmatpush1.msra.mxu0 %v531
        %720 = vmatprep.subr.mxu0 0.0
        %721 = vmatpush1.msra.mxu0 %v530
        %722 = vmatprep.subr.mxu0 0.0
        %723 = vmatpush2.msra.mxu0 0.0
        %724 = vmatprep.subr.mxu0 0.0
        %725 = vmatpush2.msra.mxu0 0.0
        %726 = vmatprep.subr.mxu0 0.0
        %727 = vmatpush2.msra.mxu0 0.0
        %728 = vmatprep.subr.mxu0 0.0
        %729 = vmatpush2.msra.mxu0 0.0
        %730 = vmatprep.subr.mxu0 0.0
        %731 = vmatpush2.msra.mxu0 0.0
        %732 = vmatprep.subr.mxu0 0.0
        %733 = vmatpush2.msra.mxu0 0.0
        %734 = vmatprep.subr.mxu0 0.0
        %735 = vmatpush2.msra.mxu0 0.0
        %736 = vmatprep.subr.mxu0 0.0
        %737 = vmatpush2.msra.mxu0 0.0
        %738 = vmatprep.subr.mxu0 0.0
        %739 = vmatpush2.msra.mxu0 0.0
        %740 = vmatprep.subr.mxu0 0.0
        %741 = vmatpush2.msra.mxu0 0.0
        %742 = vmatprep.subr.mxu0 0.0
        %743 = vmatpush2.msra.mxu0 0.0
        %744 = vmatprep.subr.mxu0 0.0
        %745 = vmatpush2.msra.mxu0 0.0
        %746 = vmatprep.subr.mxu0 0.0
        %747 = vmatpush2.msra.mxu0 0.0
        %748 = vmatprep.subr.mxu0 0.0
        %749 = vmatpush2.msra.mxu0 0.0
        %750 = vmatprep.subr.mxu0 0.0
        %751 = vmatpush2.msra.mxu0 0.0
        %752 = vmatprep.subr.mxu0 0.0
        %753 = vmatpush2.msra.mxu0 0.0
        %754 = vmatprep.mubr.f32.mxu0 0.0
        %755 = vmatmul.mubr.f32.gmra.mxu0 %v679
        %v756 = vpop.f32.mrf.mxu0
        %v757 = vadd.f32 %v660, %v756
        %v758 = vpop.f32.mrf.mxu0
        %759 = vmatprep.mubr.f32.mxu0 0.0
        %760 = vmatmul.mubr.f32.gmra.mxu0 %v682
        %v761 = vpop.f32.mrf.mxu0
        %v762 = vadd.f32 %v665, %v761
        %v763 = vpop.f32.mrf.mxu0
        %764 = vmatprep.mubr.f32.mxu0 0.0
        %765 = vmatmul.mubr.f32.gmra.mxu0 %v685
        %v766 = vpop.f32.mrf.mxu0
        %v767 = vadd.f32 %v670, %v766
        %v768 = vpop.f32.mrf.mxu0
        %769 = vmatprep.mubr.f32.mxu0 0.0
        %770 = vmatmul.mubr.f32.gmra.mxu0 %v688
        %v771 = vpop.f32.mrf.mxu0
        %v772 = vadd.f32 %v675, %v771
        %v773 = vpop.f32.mrf.mxu0
        %774 = vdwg.mxu0
        %s775 = scalar_lea.vmem [#allocation4], 64
        %v776 = vld [vmem:[%s775] sm:$0xff]
        %v777 = vld [vmem:[%s775 + $0x8] sm:$0xff]
        %v778 = vld [vmem:[%s775 + $0x10] sm:$0xff]
        %v779 = vld [vmem:[%s775 + $0x18] sm:$0xff]
        %780 = vrot.lane.b32.xlu0 %v530, 127
        %v781 = vpop.permute.xlu0 %780
        %782 = vrot.lane.b32.xlu0 %v531, 127
        %v783 = vpop.permute.xlu0 %782
        %784 = vrot.lane.b32.xlu0 %v532, 127
        %v785 = vpop.permute.xlu0 %784
        %786 = vrot.lane.b32.xlu0 %v533, 127
        %v787 = vpop.permute.xlu0 %786
        %v793 = vsel %vm580, %v776, 0
        %v796 = vsel %vm580, %v777, 0
        %v799 = vsel %vm580, %v778, 0
        %v802 = vsel %vm580, %v779, 0
        %804 = vmatprep.subr.mxu0 0.0
        %805 = vmatpush1.msra.mxu0 0.0
        %806 = vmatprep.subr.mxu0 0.0
        %807 = vmatpush1.msra.mxu0 0.0
        %808 = vmatprep.subr.mxu0 0.0
        %809 = vmatpush1.msra.mxu0 0.0
        %810 = vmatprep.subr.mxu0 0.0
        %811 = vmatpush1.msra.mxu0 0.0
        %812 = vmatprep.subr.mxu0 0.0
        %813 = vmatpush1.msra.mxu0 0.0
        %814 = vmatprep.subr.mxu0 0.0
        %815 = vmatpush1.msra.mxu0 0.0
        %816 = vmatprep.subr.mxu0 0.0
        %817 = vmatpush1.msra.mxu0 0.0
        %818 = vmatprep.subr.mxu0 0.0
        %819 = vmatpush1.msra.mxu0 0.0
        %820 = vmatprep.subr.mxu0 0.0
        %821 = vmatpush1.msra.mxu0 0.0
        %822 = vmatprep.subr.mxu0 0.0
        %823 = vmatpush1.msra.mxu0 0.0
        %824 = vmatprep.subr.mxu0 0.0
        %825 = vmatpush1.msra.mxu0 0.0
        %826 = vmatprep.subr.mxu0 0.0
        %827 = vmatpush1.msra.mxu0 0.0
        %828 = vmatprep.subr.mxu0 0.0
        %829 = vmatpush1.msra.mxu0 %v787
        %830 = vmatprep.subr.mxu0 0.0
        %831 = vmatpush1.msra.mxu0 %v785
        %832 = vmatprep.subr.mxu0 0.0
        %833 = vmatpush1.msra.mxu0 %v783
        %834 = vmatprep.subr.mxu0 0.0
        %835 = vmatpush1.msra.mxu0 %v781
        %836 = vmatprep.subr.mxu0 0.0
        %837 = vmatpush2.msra.mxu0 0.0
        %838 = vmatprep.subr.mxu0 0.0
        %839 = vmatpush2.msra.mxu0 0.0
        %840 = vmatprep.subr.mxu0 0.0
        %841 = vmatpush2.msra.mxu0 0.0
        %842 = vmatprep.subr.mxu0 0.0
        %843 = vmatpush2.msra.mxu0 0.0
        %844 = vmatprep.subr.mxu0 0.0
        %845 = vmatpush2.msra.mxu0 0.0
        %846 = vmatprep.subr.mxu0 0.0
        %847 = vmatpush2.msra.mxu0 0.0
        %848 = vmatprep.subr.mxu0 0.0
        %849 = vmatpush2.msra.mxu0 0.0
        %850 = vmatprep.subr.mxu0 0.0
        %851 = vmatpush2.msra.mxu0 0.0
        %852 = vmatprep.subr.mxu0 0.0
        %853 = vmatpush2.msra.mxu0 0.0
        %854 = vmatprep.subr.mxu0 0.0
        %855 = vmatpush2.msra.mxu0 0.0
        %856 = vmatprep.subr.mxu0 0.0
        %857 = vmatpush2.msra.mxu0 0.0
        %858 = vmatprep.subr.mxu0 0.0
        %859 = vmatpush2.msra.mxu0 0.0
        %860 = vmatprep.subr.mxu0 0.0
        %861 = vmatpush2.msra.mxu0 0.0
        %862 = vmatprep.subr.mxu0 0.0
        %863 = vmatpush2.msra.mxu0 0.0
        %864 = vmatprep.subr.mxu0 0.0
        %865 = vmatpush2.msra.mxu0 0.0
        %866 = vmatprep.subr.mxu0 0.0
        %867 = vmatpush2.msra.mxu0 0.0
        %868 = vmatprep.mubr.f32.mxu0 0.0
        %869 = vmatmul.mubr.f32.gmra.mxu0 %v793
        %v870 = vpop.f32.mrf.mxu0
        %v871 = vadd.f32 0.0, %v870
        %v872 = vpop.f32.mrf.mxu0
        %873 = vmatprep.mubr.f32.mxu0 0.0
        %874 = vmatmul.mubr.f32.gmra.mxu0 %v796
        %v875 = vpop.f32.mrf.mxu0
        %v876 = vadd.f32 0.0, %v875
        %v877 = vpop.f32.mrf.mxu0
        %878 = vmatprep.mubr.f32.mxu0 0.0
        %879 = vmatmul.mubr.f32.gmra.mxu0 %v799
        %v880 = vpop.f32.mrf.mxu0
        %v881 = vadd.f32 0.0, %v880
        %v882 = vpop.f32.mrf.mxu0
        %883 = vmatprep.mubr.f32.mxu0 0.0
        %884 = vmatmul.mubr.f32.gmra.mxu0 %v802
        %v885 = vpop.f32.mrf.mxu0
        %v886 = vadd.f32 0.0, %v885
        %v887 = vpop.f32.mrf.mxu0
        %888 = vdwg.mxu0
        %v889 = vadd.f32 %v757, %v871
        %v890 = vadd.f32 %v762, %v876
        %v891 = vadd.f32 %v767, %v881
        %v892 = vadd.f32 %v772, %v886
        %v893 = vld [vmem:[%s5] sm:$0xff]
        %v894 = vld [vmem:[%s5 + $0x8] sm:$0xff]
        %v895 = vld [vmem:[%s5 + $0x10] sm:$0xff]
        %v896 = vld [vmem:[%s5 + $0x18] sm:$0xff]
        %898 = vset.pattern.permute.xlu0 0
        %899 = vperm.xlu0 %898, %v893
        %v900 = vpop.permute.xlu0 %899
        %903 = vset.pattern.permute.xlu0 0
        %904 = vperm.xlu0 %903, %v894
        %v905 = vpop.permute.xlu0 %904
        %908 = vset.pattern.permute.xlu0 0
        %909 = vperm.xlu0 %908, %v895
        %v910 = vpop.permute.xlu0 %909
        %913 = vset.pattern.permute.xlu0 0
        %914 = vperm.xlu0 %913, %v896
        %v915 = vpop.permute.xlu0 %914
        %v917 = vadd.f32 %v889, %v900
        %v918 = vadd.f32 %v890, %v905
        %v919 = vadd.f32 %v891, %v910
        %v920 = vadd.f32 %v892, %v915
        %v921 = vmax.f32 %v917, 0.0
        %v922 = vmax.f32 %v918, 0.0
        %v923 = vmax.f32 %v919, 0.0
        %v924 = vmax.f32 %v920, 0.0
        %v925 = vld [vmem:[%s6] sm:$0xff]
        %v926 = vld [vmem:[%s6 + $0x8] sm:$0xff]
        %v927 = vld [vmem:[%s6 + $0x10] sm:$0xff]
        %v928 = vld [vmem:[%s6 + $0x18] sm:$0xff]
        %v929 = vld [vmem:[%s7] sm:$0xff]
        %v930 = vld [vmem:[%s7 + $0x8] sm:$0xff]
        %v931 = vld [vmem:[%s7 + $0x10] sm:$0xff]
        %v932 = vld [vmem:[%s7 + $0x18] sm:$0xff]
        %934 = vset.pattern.permute.xlu0 0
        %935 = vperm.xlu0 %934, %v929
        %v936 = vpop.permute.xlu0 %935
        %939 = vset.pattern.permute.xlu0 0
        %940 = vperm.xlu0 %939, %v930
        %v941 = vpop.permute.xlu0 %940
        %944 = vset.pattern.permute.xlu0 0
        %945 = vperm.xlu0 %944, %v931
        %v946 = vpop.permute.xlu0 %945
        %949 = vset.pattern.permute.xlu0 0
        %950 = vperm.xlu0 %949, %v932
        %v951 = vpop.permute.xlu0 %950
        %v954 = vsel %vm580, %v925, 0
        %v957 = vsel %vm580, %v926, 0
        %v960 = vsel %vm580, %v927, 0
        %v963 = vsel %vm580, %v928, 0
        %965 = vmatprep.subr.mxu0 0.0
        %966 = vmatpush1.msra.mxu0 0.0
        %967 = vmatprep.subr.mxu0 0.0
        %968 = vmatpush1.msra.mxu0 0.0
        %969 = vmatprep.subr.mxu0 0.0
        %970 = vmatpush1.msra.mxu0 0.0
        %971 = vmatprep.subr.mxu0 0.0
        %972 = vmatpush1.msra.mxu0 0.0
        %973 = vmatprep.subr.mxu0 0.0
        %974 = vmatpush1.msra.mxu0 0.0
        %975 = vmatprep.subr.mxu0 0.0
        %976 = vmatpush1.msra.mxu0 0.0
        %977 = vmatprep.subr.mxu0 0.0
        %978 = vmatpush1.msra.mxu0 0.0
        %979 = vmatprep.subr.mxu0 0.0
        %980 = vmatpush1.msra.mxu0 0.0
        %981 = vmatprep.subr.mxu0 0.0
        %982 = vmatpush1.msra.mxu0 0.0
        %983 = vmatprep.subr.mxu0 0.0
        %984 = vmatpush1.msra.mxu0 0.0
        %985 = vmatprep.subr.mxu0 0.0
        %986 = vmatpush1.msra.mxu0 0.0
        %987 = vmatprep.subr.mxu0 0.0
        %988 = vmatpush1.msra.mxu0 0.0
        %989 = vmatprep.subr.mxu0 0.0
        %990 = vmatpush1.msra.mxu0 %v924
        %991 = vmatprep.subr.mxu0 0.0
        %992 = vmatpush1.msra.mxu0 %v923
        %993 = vmatprep.subr.mxu0 0.0
        %994 = vmatpush1.msra.mxu0 %v922
        %995 = vmatprep.subr.mxu0 0.0
        %996 = vmatpush1.msra.mxu0 %v921
        %997 = vmatprep.subr.mxu0 0.0
        %998 = vmatpush2.msra.mxu0 0.0
        %999 = vmatprep.subr.mxu0 0.0
        %1000 = vmatpush2.msra.mxu0 0.0
        %1001 = vmatprep.subr.mxu0 0.0
        %1002 = vmatpush2.msra.mxu0 0.0
        %1003 = vmatprep.subr.mxu0 0.0
        %1004 = vmatpush2.msra.mxu0 0.0
        %1005 = vmatprep.subr.mxu0 0.0
        %1006 = vmatpush2.msra.mxu0 0.0
        %1007 = vmatprep.subr.mxu0 0.0
        %1008 = vmatpush2.msra.mxu0 0.0
        %1009 = vmatprep.subr.mxu0 0.0
        %1010 = vmatpush2.msra.mxu0 0.0
        %1011 = vmatprep.subr.mxu0 0.0
        %1012 = vmatpush2.msra.mxu0 0.0
        %1013 = vmatprep.subr.mxu0 0.0
        %1014 = vmatpush2.msra.mxu0 0.0
        %1015 = vmatprep.subr.mxu0 0.0
        %1016 = vmatpush2.msra.mxu0 0.0
        %1017 = vmatprep.subr.mxu0 0.0
        %1018 = vmatpush2.msra.mxu0 0.0
        %1019 = vmatprep.subr.mxu0 0.0
        %1020 = vmatpush2.msra.mxu0 0.0
        %1021 = vmatprep.subr.mxu0 0.0
        %1022 = vmatpush2.msra.mxu0 0.0
        %1023 = vmatprep.subr.mxu0 0.0
        %1024 = vmatpush2.msra.mxu0 0.0
        %1025 = vmatprep.subr.mxu0 0.0
        %1026 = vmatpush2.msra.mxu0 0.0
        %1027 = vmatprep.subr.mxu0 0.0
        %1028 = vmatpush2.msra.mxu0 0.0
        %1029 = vmatprep.mubr.f32.mxu0 0.0
        %1030 = vmatmul.mubr.f32.gmra.mxu0 %v954
        %v1031 = vpop.f32.mrf.mxu0
        %v1032 = vadd.f32 %v936, %v1031
        %v1033 = vpop.f32.mrf.mxu0
        %1034 = vmatprep.mubr.f32.mxu0 0.0
        %1035 = vmatmul.mubr.f32.gmra.mxu0 %v957
        %v1036 = vpop.f32.mrf.mxu0
        %v1037 = vadd.f32 %v941, %v1036
        %v1038 = vpop.f32.mrf.mxu0
        %1039 = vmatprep.mubr.f32.mxu0 0.0
        %1040 = vmatmul.mubr.f32.gmra.mxu0 %v960
        %v1041 = vpop.f32.mrf.mxu0
        %v1042 = vadd.f32 %v946, %v1041
        %v1043 = vpop.f32.mrf.mxu0
        %1044 = vmatprep.mubr.f32.mxu0 0.0
        %1045 = vmatmul.mubr.f32.gmra.mxu0 %v963
        %v1046 = vpop.f32.mrf.mxu0
        %v1047 = vadd.f32 %v951, %v1046
        %v1048 = vpop.f32.mrf.mxu0
        %1049 = vdwg.mxu0
        %v1050 = vld [vmem:[#allocation3] sm:$0xff]
        %v1051 = vld [vmem:[#allocation3 + $0x8] sm:$0xff]
        %v1052 = vld [vmem:[#allocation3 + $0x10] sm:$0xff]
        %v1053 = vld [vmem:[#allocation3 + $0x18] sm:$0xff]
        %v1054 = vadd.f32 %v1050, %v1032
        %v1055 = vadd.f32 %v1051, %v1037
        %v1056 = vadd.f32 %v1052, %v1042
        %v1057 = vadd.f32 %v1053, %v1047
        %1058 = vst.msk [vmem:[#allocation3] sm:$0xff] %vm521, %v1054
        %1059 = vst.msk [vmem:[#allocation3 + $0x8] sm:$0xff] %vm521, %v1055
        %1060 = vst.msk [vmem:[#allocation3 + $0x10] sm:$0xff] %vm521, %v1056
        %1061 = vst.msk [vmem:[#allocation3 + $0x18] sm:$0xff] %vm521, %v1057
        %v1062 = vld [vmem:[#allocation3] sm:$0xff]
        %v1063 = vld [vmem:[#allocation3 + $0x8] sm:$0xff]
        %v1064 = vld [vmem:[#allocation3 + $0x10] sm:$0xff]
        %v1065 = vld [vmem:[#allocation3 + $0x18] sm:$0xff]
        %1066 = vst.msk [vmem:[#allocation2 + $0x8] sm:$0xff] %vm521, %v1062
        %1067 = vst.msk [vmem:[#allocation2 + $0x18] sm:$0xff] %vm521, %v1063
        %1068 = vst.msk [vmem:[#allocation2 + $0x28] sm:$0xff] %vm521, %v1064
        %1069 = vst.msk [vmem:[#allocation2 + $0x38] sm:$0xff] %vm521, %v1065
        %v1070 = vld [vmem:[#allocation2 + $0x8] sm:$0xff]
        %v1071 = vld [vmem:[#allocation2 + $0x18] sm:$0xff]
        %v1072 = vld [vmem:[#allocation2 + $0x28] sm:$0xff]
        %v1073 = vld [vmem:[#allocation2 + $0x38] sm:$0xff]
        %v1074 = vld [vmem:[#allocation2] sm:$0xff]
        %v1075 = vld [vmem:[#allocation2 + $0x10] sm:$0xff]
        %v1076 = vld [vmem:[#allocation2 + $0x20] sm:$0xff]
        %v1077 = vld [vmem:[#allocation2 + $0x30] sm:$0xff]
        %s1078 = scalar_lea.vmem [#allocation4], 128
        %v1079 = vld [vmem:[%s1078] sm:$0xff]
        %v1080 = vld [vmem:[%s1078 + $0x8] sm:$0xff]
        %v1081 = vld [vmem:[%s1078 + $0x10] sm:$0xff]
        %v1082 = vld [vmem:[%s1078 + $0x18] sm:$0xff]
        %s1083 = scalar_lea.vmem [#allocation4], 96
        %v1084 = vld [vmem:[%s1083] sm:$0xff]
        %v1085 = vld [vmem:[%s1083 + $0x8] sm:$0xff]
        %v1086 = vld [vmem:[%s1083 + $0x10] sm:$0xff]
        %v1087 = vld [vmem:[%s1083 + $0x18] sm:$0xff]
        %1096 = vrot.lane.b32.xlu0 %v1074, 2
        %v1097 = vpop.permute.xlu0 %1096
        %1098 = vrot.lane.b32.xlu0 %v1070, 2
        %v1099 = vpop.permute.xlu0 %1098
        %1100 = vrot.lane.b32.xlu0 %v1075, 2
        %v1101 = vpop.permute.xlu0 %1100
        %1102 = vrot.lane.b32.xlu0 %v1071, 2
        %v1103 = vpop.permute.xlu0 %1102
        %1104 = vrot.lane.b32.xlu0 %v1076, 2
        %v1105 = vpop.permute.xlu0 %1104
        %1106 = vrot.lane.b32.xlu0 %v1072, 2
        %v1107 = vpop.permute.xlu0 %1106
        %1108 = vrot.lane.b32.xlu0 %v1077, 2
        %v1109 = vpop.permute.xlu0 %1108
        %1110 = vrot.lane.b32.xlu0 %v1073, 2
        %v1111 = vpop.permute.xlu0 %1110
        %vm1112 = vcmask 15360
        %v1113 = vsel %vm1112, %v1097, %v1099
        %v1114 = vsel %vm1112, %v1101, %v1103
        %v1115 = vsel %vm1112, %v1105, %v1107
        %v1116 = vsel %vm1112, %v1109, %v1111
        %v1122 = vsel %vm580, %v1084, 0
        %v1125 = vsel %vm580, %v1085, 0
        %v1128 = vsel %vm580, %v1086, 0
        %v1131 = vsel %vm580, %v1087, 0
        %1133 = vmatprep.subr.mxu0 0.0
        %1134 = vmatpush1.msra.mxu0 0.0
        %1135 = vmatprep.subr.mxu0 0.0
        %1136 = vmatpush1.msra.mxu0 0.0
        %1137 = vmatprep.subr.mxu0 0.0
        %1138 = vmatpush1.msra.mxu0 0.0
        %1139 = vmatprep.subr.mxu0 0.0
        %1140 = vmatpush1.msra.mxu0 0.0
        %1141 = vmatprep.subr.mxu0 0.0
        %1142 = vmatpush1.msra.mxu0 0.0
        %1143 = vmatprep.subr.mxu0 0.0
        %1144 = vmatpush1.msra.mxu0 0.0
        %1145 = vmatprep.subr.mxu0 0.0
        %1146 = vmatpush1.msra.mxu0 0.0
        %1147 = vmatprep.subr.mxu0 0.0
        %1148 = vmatpush1.msra.mxu0 0.0
        %1149 = vmatprep.subr.mxu0 0.0
        %1150 = vmatpush1.msra.mxu0 0.0
        %1151 = vmatprep.subr.mxu0 0.0
        %1152 = vmatpush1.msra.mxu0 0.0
        %1153 = vmatprep.subr.mxu0 0.0
        %1154 = vmatpush1.msra.mxu0 0.0
        %1155 = vmatprep.subr.mxu0 0.0
        %1156 = vmatpush1.msra.mxu0 0.0
        %1157 = vmatprep.subr.mxu0 0.0
        %1158 = vmatpush1.msra.mxu0 %v1116
        %1159 = vmatprep.subr.mxu0 0.0
        %1160 = vmatpush1.msra.mxu0 %v1115
        %1161 = vmatprep.subr.mxu0 0.0
        %1162 = vmatpush1.msra.mxu0 %v1114
        %1163 = vmatprep.subr.mxu0 0.0
        %1164 = vmatpush1.msra.mxu0 %v1113
        %1165 = vmatprep.subr.mxu0 0.0
        %1166 = vmatpush2.msra.mxu0 0.0
        %1167 = vmatprep.subr.mxu0 0.0
        %1168 = vmatpush2.msra.mxu0 0.0
        %1169 = vmatprep.subr.mxu0 0.0
        %1170 = vmatpush2.msra.mxu0 0.0
        %1171 = vmatprep.subr.mxu0 0.0
        %1172 = vmatpush2.msra.mxu0 0.0
        %1173 = vmatprep.subr.mxu0 0.0
        %1174 = vmatpush2.msra.mxu0 0.0
        %1175 = vmatprep.subr.mxu0 0.0
        %1176 = vmatpush2.msra.mxu0 0.0
        %1177 = vmatprep.subr.mxu0 0.0
        %1178 = vmatpush2.msra.mxu0 0.0
        %1179 = vmatprep.subr.mxu0 0.0
        %1180 = vmatpush2.msra.mxu0 0.0
        %1181 = vmatprep.subr.mxu0 0.0
        %1182 = vmatpush2.msra.mxu0 0.0
        %1183 = vmatprep.subr.mxu0 0.0
        %1184 = vmatpush2.msra.mxu0 0.0
        %1185 = vmatprep.subr.mxu0 0.0
        %1186 = vmatpush2.msra.mxu0 0.0
        %1187 = vmatprep.subr.mxu0 0.0
        %1188 = vmatpush2.msra.mxu0 0.0
        %1189 = vmatprep.subr.mxu0 0.0
        %1190 = vmatpush2.msra.mxu0 0.0
        %1191 = vmatprep.subr.mxu0 0.0
        %1192 = vmatpush2.msra.mxu0 0.0
        %1193 = vmatprep.subr.mxu0 0.0
        %1194 = vmatpush2.msra.mxu0 0.0
        %1195 = vmatprep.subr.mxu0 0.0
        %1196 = vmatpush2.msra.mxu0 0.0
        %1197 = vmatprep.mubr.f32.mxu0 0.0
        %1198 = vmatmul.mubr.f32.gmra.mxu0 %v1122
        %v1199 = vpop.f32.mrf.mxu0
        %v1200 = vadd.f32 0.0, %v1199
        %v1201 = vpop.f32.mrf.mxu0
        %1202 = vmatprep.mubr.f32.mxu0 0.0
        %1203 = vmatmul.mubr.f32.gmra.mxu0 %v1125
        %v1204 = vpop.f32.mrf.mxu0
        %v1205 = vadd.f32 0.0, %v1204
        %v1206 = vpop.f32.mrf.mxu0
        %1207 = vmatprep.mubr.f32.mxu0 0.0
        %1208 = vmatmul.mubr.f32.gmra.mxu0 %v1128
        %v1209 = vpop.f32.mrf.mxu0
        %v1210 = vadd.f32 0.0, %v1209
        %v1211 = vpop.f32.mrf.mxu0
        %1212 = vmatprep.mubr.f32.mxu0 0.0
        %1213 = vmatmul.mubr.f32.gmra.mxu0 %v1131
        %v1214 = vpop.f32.mrf.mxu0
        %v1215 = vadd.f32 0.0, %v1214
        %v1216 = vpop.f32.mrf.mxu0
        %1217 = vdwg.mxu0
        %v1219 = vsel %vm580, %v1079, 0
        %v1222 = vsel %vm580, %v1080, 0
        %v1225 = vsel %vm580, %v1081, 0
        %v1228 = vsel %vm580, %v1082, 0
        %1230 = vmatprep.subr.mxu0 0.0
        %1231 = vmatpush1.msra.mxu0 0.0
        %1232 = vmatprep.subr.mxu0 0.0
        %1233 = vmatpush1.msra.mxu0 0.0
        %1234 = vmatprep.subr.mxu0 0.0
        %1235 = vmatpush1.msra.mxu0 0.0
        %1236 = vmatprep.subr.mxu0 0.0
        %1237 = vmatpush1.msra.mxu0 0.0
        %1238 = vmatprep.subr.mxu0 0.0
        %1239 = vmatpush1.msra.mxu0 0.0
        %1240 = vmatprep.subr.mxu0 0.0
        %1241 = vmatpush1.msra.mxu0 0.0
        %1242 = vmatprep.subr.mxu0 0.0
        %1243 = vmatpush1.msra.mxu0 0.0
        %1244 = vmatprep.subr.mxu0 0.0
        %1245 = vmatpush1.msra.mxu0 0.0
        %1246 = vmatprep.subr.mxu0 0.0
        %1247 = vmatpush1.msra.mxu0 0.0
        %1248 = vmatprep.subr.mxu0 0.0
        %1249 = vmatpush1.msra.mxu0 0.0
        %1250 = vmatprep.subr.mxu0 0.0
        %1251 = vmatpush1.msra.mxu0 0.0
        %1252 = vmatprep.subr.mxu0 0.0
        %1253 = vmatpush1.msra.mxu0 0.0
        %1254 = vmatprep.subr.mxu0 0.0
        %1255 = vmatpush1.msra.mxu0 %v1073
        %1256 = vmatprep.subr.mxu0 0.0
        %1257 = vmatpush1.msra.mxu0 %v1072
        %1258 = vmatprep.subr.mxu0 0.0
        %1259 = vmatpush1.msra.mxu0 %v1071
        %1260 = vmatprep.subr.mxu0 0.0
        %1261 = vmatpush1.msra.mxu0 %v1070
        %1262 = vmatprep.subr.mxu0 0.0
        %1263 = vmatpush2.msra.mxu0 0.0
        %1264 = vmatprep.subr.mxu0 0.0
        %1265 = vmatpush2.msra.mxu0 0.0
        %1266 = vmatprep.subr.mxu0 0.0
        %1267 = vmatpush2.msra.mxu0 0.0
        %1268 = vmatprep.subr.mxu0 0.0
        %1269 = vmatpush2.msra.mxu0 0.0
        %1270 = vmatprep.subr.mxu0 0.0
        %1271 = vmatpush2.msra.mxu0 0.0
        %1272 = vmatprep.subr.mxu0 0.0
        %1273 = vmatpush2.msra.mxu0 0.0
        %1274 = vmatprep.subr.mxu0 0.0
        %1275 = vmatpush2.msra.mxu0 0.0
        %1276 = vmatprep.subr.mxu0 0.0
        %1277 = vmatpush2.msra.mxu0 0.0
        %1278 = vmatprep.subr.mxu0 0.0
        %1279 = vmatpush2.msra.mxu0 0.0
        %1280 = vmatprep.subr.mxu0 0.0
        %1281 = vmatpush2.msra.mxu0 0.0
        %1282 = vmatprep.subr.mxu0 0.0
        %1283 = vmatpush2.msra.mxu0 0.0
        %1284 = vmatprep.subr.mxu0 0.0
        %1285 = vmatpush2.msra.mxu0 0.0
        %1286 = vmatprep.subr.mxu0 0.0
        %1287 = vmatpush2.msra.mxu0 0.0
        %1288 = vmatprep.subr.mxu0 0.0
        %1289 = vmatpush2.msra.mxu0 0.0
        %1290 = vmatprep.subr.mxu0 0.0
        %1291 = vmatpush2.msra.mxu0 0.0
        %1292 = vmatprep.subr.mxu0 0.0
        %1293 = vmatpush2.msra.mxu0 0.0
        %1294 = vmatprep.mubr.f32.mxu0 0.0
        %1295 = vmatmul.mubr.f32.gmra.mxu0 %v1219
        %v1296 = vpop.f32.mrf.mxu0
        %v1297 = vadd.f32 %v1200, %v1296
        %v1298 = vpop.f32.mrf.mxu0
        %1299 = vmatprep.mubr.f32.mxu0 0.0
        %1300 = vmatmul.mubr.f32.gmra.mxu0 %v1222
        %v1301 = vpop.f32.mrf.mxu0
        %v1302 = vadd.f32 %v1205, %v1301
        %v1303 = vpop.f32.mrf.mxu0
        %1304 = vmatprep.mubr.f32.mxu0 0.0
        %1305 = vmatmul.mubr.f32.gmra.mxu0 %v1225
        %v1306 = vpop.f32.mrf.mxu0
        %v1307 = vadd.f32 %v1210, %v1306
        %v1308 = vpop.f32.mrf.mxu0
        %1309 = vmatprep.mubr.f32.mxu0 0.0
        %1310 = vmatmul.mubr.f32.gmra.mxu0 %v1228
        %v1311 = vpop.f32.mrf.mxu0
        %v1312 = vadd.f32 %v1215, %v1311
        %v1313 = vpop.f32.mrf.mxu0
        %1314 = vdwg.mxu0
        %s1315 = scalar_lea.vmem [#allocation4], 160
        %v1316 = vld [vmem:[%s1315] sm:$0xff]
        %v1317 = vld [vmem:[%s1315 + $0x8] sm:$0xff]
        %v1318 = vld [vmem:[%s1315 + $0x10] sm:$0xff]
        %v1319 = vld [vmem:[%s1315 + $0x18] sm:$0xff]
        %1320 = vrot.lane.b32.xlu0 %v1070, 126
        %v1321 = vpop.permute.xlu0 %1320
        %1322 = vrot.lane.b32.xlu0 %v1071, 126
        %v1323 = vpop.permute.xlu0 %1322
        %1324 = vrot.lane.b32.xlu0 %v1072, 126
        %v1325 = vpop.permute.xlu0 %1324
        %1326 = vrot.lane.b32.xlu0 %v1073, 126
        %v1327 = vpop.permute.xlu0 %1326
        %v1333 = vsel %vm580, %v1316, 0
        %v1336 = vsel %vm580, %v1317, 0
        %v1339 = vsel %vm580, %v1318, 0
        %v1342 = vsel %vm580, %v1319, 0
        %1344 = vmatprep.subr.mxu0 0.0
        %1345 = vmatpush1.msra.mxu0 0.0
        %1346 = vmatprep.subr.mxu0 0.0
        %1347 = vmatpush1.msra.mxu0 0.0
        %1348 = vmatprep.subr.mxu0 0.0
        %1349 = vmatpush1.msra.mxu0 0.0
        %1350 = vmatprep.subr.mxu0 0.0
        %1351 = vmatpush1.msra.mxu0 0.0
        %1352 = vmatprep.subr.mxu0 0.0
        %1353 = vmatpush1.msra.mxu0 0.0
        %1354 = vmatprep.subr.mxu0 0.0
        %1355 = vmatpush1.msra.mxu0 0.0
        %1356 = vmatprep.subr.mxu0 0.0
        %1357 = vmatpush1.msra.mxu0 0.0
        %1358 = vmatprep.subr.mxu0 0.0
        %1359 = vmatpush1.msra.mxu0 0.0
        %1360 = vmatprep.subr.mxu0 0.0
        %1361 = vmatpush1.msra.mxu0 0.0
        %1362 = vmatprep.subr.mxu0 0.0
        %1363 = vmatpush1.msra.mxu0 0.0
        %1364 = vmatprep.subr.mxu0 0.0
        %1365 = vmatpush1.msra.mxu0 0.0
        %1366 = vmatprep.subr.mxu0 0.0
        %1367 = vmatpush1.msra.mxu0 0.0
        %1368 = vmatprep.subr.mxu0 0.0
        %1369 = vmatpush1.msra.mxu0 %v1327
        %1370 = vmatprep.subr.mxu0 0.0
        %1371 = vmatpush1.msra.mxu0 %v1325
        %1372 = vmatprep.subr.mxu0 0.0
        %1373 = vmatpush1.msra.mxu0 %v1323
        %1374 = vmatprep.subr.mxu0 0.0
        %1375 = vmatpush1.msra.mxu0 %v1321
        %1376 = vmatprep.subr.mxu0 0.0
        %1377 = vmatpush2.msra.mxu0 0.0
        %1378 = vmatprep.subr.mxu0 0.0
        %1379 = vmatpush2.msra.mxu0 0.0
        %1380 = vmatprep.subr.mxu0 0.0
        %1381 = vmatpush2.msra.mxu0 0.0
        %1382 = vmatprep.subr.mxu0 0.0
        %1383 = vmatpush2.msra.mxu0 0.0
        %1384 = vmatprep.subr.mxu0 0.0
        %1385 = vmatpush2.msra.mxu0 0.0
        %1386 = vmatprep.subr.mxu0 0.0
        %1387 = vmatpush2.msra.mxu0 0.0
        %1388 = vmatprep.subr.mxu0 0.0
        %1389 = vmatpush2.msra.mxu0 0.0
        %1390 = vmatprep.subr.mxu0 0.0
        %1391 = vmatpush2.msra.mxu0 0.0
        %1392 = vmatprep.subr.mxu0 0.0
        %1393 = vmatpush2.msra.mxu0 0.0
        %1394 = vmatprep.subr.mxu0 0.0
        %1395 = vmatpush2.msra.mxu0 0.0
        %1396 = vmatprep.subr.mxu0 0.0
        %1397 = vmatpush2.msra.mxu0 0.0
        %1398 = vmatprep.subr.mxu0 0.0
        %1399 = vmatpush2.msra.mxu0 0.0
        %1400 = vmatprep.subr.mxu0 0.0
        %1401 = vmatpush2.msra.mxu0 0.0
        %1402 = vmatprep.subr.mxu0 0.0
        %1403 = vmatpush2.msra.mxu0 0.0
        %1404 = vmatprep.subr.mxu0 0.0
        %1405 = vmatpush2.msra.mxu0 0.0
        %1406 = vmatprep.subr.mxu0 0.0
        %1407 = vmatpush2.msra.mxu0 0.0
        %1408 = vmatprep.mubr.f32.mxu0 0.0
        %1409 = vmatmul.mubr.f32.gmra.mxu0 %v1333
        %v1410 = vpop.f32.mrf.mxu0
        %v1411 = vadd.f32 0.0, %v1410
        %v1412 = vpop.f32.mrf.mxu0
        %1413 = vmatprep.mubr.f32.mxu0 0.0
        %1414 = vmatmul.mubr.f32.gmra.mxu0 %v1336
        %v1415 = vpop.f32.mrf.mxu0
        %v1416 = vadd.f32 0.0, %v1415
        %v1417 = vpop.f32.mrf.mxu0
        %1418 = vmatprep.mubr.f32.mxu0 0.0
        %1419 = vmatmul.mubr.f32.gmra.mxu0 %v1339
        %v1420 = vpop.f32.mrf.mxu0
        %v1421 = vadd.f32 0.0, %v1420
        %v1422 = vpop.f32.mrf.mxu0
        %1423 = vmatprep.mubr.f32.mxu0 0.0
        %1424 = vmatmul.mubr.f32.gmra.mxu0 %v1342
        %v1425 = vpop.f32.mrf.mxu0
        %v1426 = vadd.f32 0.0, %v1425
        %v1427 = vpop.f32.mrf.mxu0
        %1428 = vdwg.mxu0
        %v1429 = vadd.f32 %v1297, %v1411
        %v1430 = vadd.f32 %v1302, %v1416
        %v1431 = vadd.f32 %v1307, %v1421
        %v1432 = vadd.f32 %v1312, %v1426
        %s1433 = scalar_lea.vmem %s5, 32
        %v1434 = vld [vmem:[%s1433] sm:$0xff]
        %v1435 = vld [vmem:[%s1433 + $0x8] sm:$0xff]
        %v1436 = vld [vmem:[%s1433 + $0x10] sm:$0xff]
        %v1437 = vld [vmem:[%s1433 + $0x18] sm:$0xff]
        %1439 = vset.pattern.permute.xlu0 0
        %1440 = vperm.xlu0 %1439, %v1434
        %v1441 = vpop.permute.xlu0 %1440
        %1444 = vset.pattern.permute.xlu0 0
        %1445 = vperm.xlu0 %1444, %v1435
        %v1446 = vpop.permute.xlu0 %1445
        %1449 = vset.pattern.permute.xlu0 0
        %1450 = vperm.xlu0 %1449, %v1436
        %v1451 = vpop.permute.xlu0 %1450
        %1454 = vset.pattern.permute.xlu0 0
        %1455 = vperm.xlu0 %1454, %v1437
        %v1456 = vpop.permute.xlu0 %1455
        %v1458 = vadd.f32 %v1429, %v1441
        %v1459 = vadd.f32 %v1430, %v1446
        %v1460 = vadd.f32 %v1431, %v1451
        %v1461 = vadd.f32 %v1432, %v1456
        %v1462 = vmax.f32 %v1458, 0.0
        %v1463 = vmax.f32 %v1459, 0.0
        %v1464 = vmax.f32 %v1460, 0.0
        %v1465 = vmax.f32 %v1461, 0.0
        %s1466 = scalar_lea.vmem %s6, 32
        %v1467 = vld [vmem:[%s1466] sm:$0xff]
        %v1468 = vld [vmem:[%s1466 + $0x8] sm:$0xff]
        %v1469 = vld [vmem:[%s1466 + $0x10] sm:$0xff]
        %v1470 = vld [vmem:[%s1466 + $0x18] sm:$0xff]
        %s1471 = scalar_lea.vmem %s7, 32
        %v1472 = vld [vmem:[%s1471] sm:$0xff]
        %v1473 = vld [vmem:[%s1471 + $0x8] sm:$0xff]
        %v1474 = vld [vmem:[%s1471 + $0x10] sm:$0xff]
        %v1475 = vld [vmem:[%s1471 + $0x18] sm:$0xff]
        %1477 = vset.pattern.permute.xlu0 0
        %1478 = vperm.xlu0 %1477, %v1472
        %v1479 = vpop.permute.xlu0 %1478
        %1482 = vset.pattern.permute.xlu0 0
        %1483 = vperm.xlu0 %1482, %v1473
        %v1484 = vpop.permute.xlu0 %1483
        %1487 = vset.pattern.permute.xlu0 0
        %1488 = vperm.xlu0 %1487, %v1474
        %v1489 = vpop.permute.xlu0 %1488
        %1492 = vset.pattern.permute.xlu0 0
        %1493 = vperm.xlu0 %1492, %v1475
        %v1494 = vpop.permute.xlu0 %1493
        %v1497 = vsel %vm580, %v1467, 0
        %v1500 = vsel %vm580, %v1468, 0
        %v1503 = vsel %vm580, %v1469, 0
        %v1506 = vsel %vm580, %v1470, 0
        %1508 = vmatprep.subr.mxu0 0.0
        %1509 = vmatpush1.msra.mxu0 0.0
        %1510 = vmatprep.subr.mxu0 0.0
        %1511 = vmatpush1.msra.mxu0 0.0
        %1512 = vmatprep.subr.mxu0 0.0
        %1513 = vmatpush1.msra.mxu0 0.0
        %1514 = vmatprep.subr.mxu0 0.0
        %1515 = vmatpush1.msra.mxu0 0.0
        %1516 = vmatprep.subr.mxu0 0.0
        %1517 = vmatpush1.msra.mxu0 0.0
        %1518 = vmatprep.subr.mxu0 0.0
        %1519 = vmatpush1.msra.mxu0 0.0
        %1520 = vmatprep.subr.mxu0 0.0
        %1521 = vmatpush1.msra.mxu0 0.0
        %1522 = vmatprep.subr.mxu0 0.0
        %1523 = vmatpush1.msra.mxu0 0.0
        %1524 = vmatprep.subr.mxu0 0.0
        %1525 = vmatpush1.msra.mxu0 0.0
        %1526 = vmatprep.subr.mxu0 0.0
        %1527 = vmatpush1.msra.mxu0 0.0
        %1528 = vmatprep.subr.mxu0 0.0
        %1529 = vmatpush1.msra.mxu0 0.0
        %1530 = vmatprep.subr.mxu0 0.0
        %1531 = vmatpush1.msra.mxu0 0.0
        %1532 = vmatprep.subr.mxu0 0.0
        %1533 = vmatpush1.msra.mxu0 %v1465
        %1534 = vmatprep.subr.mxu0 0.0
        %1535 = vmatpush1.msra.mxu0 %v1464
        %1536 = vmatprep.subr.mxu0 0.0
        %1537 = vmatpush1.msra.mxu0 %v1463
        %1538 = vmatprep.subr.mxu0 0.0
        %1539 = vmatpush1.msra.mxu0 %v1462
        %1540 = vmatprep.subr.mxu0 0.0
        %1541 = vmatpush2.msra.mxu0 0.0
        %1542 = vmatprep.subr.mxu0 0.0
        %1543 = vmatpush2.msra.mxu0 0.0
        %1544 = vmatprep.subr.mxu0 0.0
        %1545 = vmatpush2.msra.mxu0 0.0
        %1546 = vmatprep.subr.mxu0 0.0
        %1547 = vmatpush2.msra.mxu0 0.0
        %1548 = vmatprep.subr.mxu0 0.0
        %1549 = vmatpush2.msra.mxu0 0.0
        %1550 = vmatprep.subr.mxu0 0.0
        %1551 = vmatpush2.msra.mxu0 0.0
        %1552 = vmatprep.subr.mxu0 0.0
        %1553 = vmatpush2.msra.mxu0 0.0
        %1554 = vmatprep.subr.mxu0 0.0
        %1555 = vmatpush2.msra.mxu0 0.0
        %1556 = vmatprep.subr.mxu0 0.0
        %1557 = vmatpush2.msra.mxu0 0.0
        %1558 = vmatprep.subr.mxu0 0.0
        %1559 = vmatpush2.msra.mxu0 0.0
        %1560 = vmatprep.subr.mxu0 0.0
        %1561 = vmatpush2.msra.mxu0 0.0
        %1562 = vmatprep.subr.mxu0 0.0
        %1563 = vmatpush2.msra.mxu0 0.0
        %1564 = vmatprep.subr.mxu0 0.0
        %1565 = vmatpush2.msra.mxu0 0.0
        %1566 = vmatprep.subr.mxu0 0.0
        %1567 = vmatpush2.msra.mxu0 0.0
        %1568 = vmatprep.subr.mxu0 0.0
        %1569 = vmatpush2.msra.mxu0 0.0
        %1570 = vmatprep.subr.mxu0 0.0
        %1571 = vmatpush2.msra.mxu0 0.0
        %1572 = vmatprep.mubr.f32.mxu0 0.0
        %1573 = vmatmul.mubr.f32.gmra.mxu0 %v1497
        %v1574 = vpop.f32.mrf.mxu0
        %v1575 = vadd.f32 %v1479, %v1574
        %v1576 = vpop.f32.mrf.mxu0
        %1577 = vmatprep.mubr.f32.mxu0 0.0
        %1578 = vmatmul.mubr.f32.gmra.mxu0 %v1500
        %v1579 = vpop.f32.mrf.mxu0
        %v1580 = vadd.f32 %v1484, %v1579
        %v1581 = vpop.f32.mrf.mxu0
        %1582 = vmatprep.mubr.f32.mxu0 0.0
        %1583 = vmatmul.mubr.f32.gmra.mxu0 %v1503
        %v1584 = vpop.f32.mrf.mxu0
        %v1585 = vadd.f32 %v1489, %v1584
        %v1586 = vpop.f32.mrf.mxu0
        %1587 = vmatprep.mubr.f32.mxu0 0.0
        %1588 = vmatmul.mubr.f32.gmra.mxu0 %v1506
        %v1589 = vpop.f32.mrf.mxu0
        %v1590 = vadd.f32 %v1494, %v1589
        %v1591 = vpop.f32.mrf.mxu0
        %1592 = vdwg.mxu0
        %v1593 = vld [vmem:[#allocation3] sm:$0xff]
        %v1594 = vld [vmem:[#allocation3 + $0x8] sm:$0xff]
        %v1595 = vld [vmem:[#allocation3 + $0x10] sm:$0xff]
        %v1596 = vld [vmem:[#allocation3 + $0x18] sm:$0xff]
        %v1597 = vadd.f32 %v1593, %v1575
        %v1598 = vadd.f32 %v1594, %v1580
        %v1599 = vadd.f32 %v1595, %v1585
        %v1600 = vadd.f32 %v1596, %v1590
        %1601 = vst.msk [vmem:[#allocation3] sm:$0xff] %vm521, %v1597
        %1602 = vst.msk [vmem:[#allocation3 + $0x8] sm:$0xff] %vm521, %v1598
        %1603 = vst.msk [vmem:[#allocation3 + $0x10] sm:$0xff] %vm521, %v1599
        %1604 = vst.msk [vmem:[#allocation3 + $0x18] sm:$0xff] %vm521, %v1600
        %v1605 = vld [vmem:[#allocation3] sm:$0xff]
        %v1606 = vld [vmem:[#allocation3 + $0x8] sm:$0xff]
        %v1607 = vld [vmem:[#allocation3 + $0x10] sm:$0xff]
        %v1608 = vld [vmem:[#allocation3 + $0x18] sm:$0xff]
        %1609 = vst.msk [vmem:[#allocation2 + $0x8] sm:$0xff] %vm521, %v1605
        %1610 = vst.msk [vmem:[#allocation2 + $0x18] sm:$0xff] %vm521, %v1606
        %1611 = vst.msk [vmem:[#allocation2 + $0x28] sm:$0xff] %vm521, %v1607
        %1612 = vst.msk [vmem:[#allocation2 + $0x38] sm:$0xff] %vm521, %v1608
        %v1613 = vld [vmem:[#allocation2 + $0x8] sm:$0xff]
        %v1614 = vld [vmem:[#allocation2 + $0x18] sm:$0xff]
        %v1615 = vld [vmem:[#allocation2 + $0x28] sm:$0xff]
        %v1616 = vld [vmem:[#allocation2 + $0x38] sm:$0xff]
        %v1617 = vld [vmem:[#allocation2] sm:$0xff]
        %v1618 = vld [vmem:[#allocation2 + $0x10] sm:$0xff]
        %v1619 = vld [vmem:[#allocation2 + $0x20] sm:$0xff]
        %v1620 = vld [vmem:[#allocation2 + $0x30] sm:$0xff]
        %s1621 = scalar_lea.vmem [#allocation4], 224
        %v1622 = vld [vmem:[%s1621] sm:$0xff]
        %v1623 = vld [vmem:[%s1621 + $0x8] sm:$0xff]
        %v1624 = vld [vmem:[%s1621 + $0x10] sm:$0xff]
        %v1625 = vld [vmem:[%s1621 + $0x18] sm:$0xff]
        %s1626 = scalar_lea.vmem [#allocation4], 192
        %v1627 = vld [vmem:[%s1626] sm:$0xff]
        %v1628 = vld [vmem:[%s1626 + $0x8] sm:$0xff]
        %v1629 = vld [vmem:[%s1626 + $0x10] sm:$0xff]
        %v1630 = vld [vmem:[%s1626 + $0x18] sm:$0xff]
        %1639 = vrot.lane.b32.xlu0 %v1617, 4
        %v1640 = vpop.permute.xlu0 %1639
        %1641 = vrot.lane.b32.xlu0 %v1613, 4
        %v1642 = vpop.permute.xlu0 %1641
        %1643 = vrot.lane.b32.xlu0 %v1618, 4
        %v1644 = vpop.permute.xlu0 %1643
        %1645 = vrot.lane.b32.xlu0 %v1614, 4
        %v1646 = vpop.permute.xlu0 %1645
        %1647 = vrot.lane.b32.xlu0 %v1619, 4
        %v1648 = vpop.permute.xlu0 %1647
        %1649 = vrot.lane.b32.xlu0 %v1615, 4
        %v1650 = vpop.permute.xlu0 %1649
        %1651 = vrot.lane.b32.xlu0 %v1620, 4
        %v1652 = vpop.permute.xlu0 %1651
        %1653 = vrot.lane.b32.xlu0 %v1616, 4
        %v1654 = vpop.permute.xlu0 %1653
        %vm1655 = vcmask 31744
        %v1656 = vsel %vm1655, %v1640, %v1642
        %v1657 = vsel %vm1655, %v1644, %v1646
        %v1658 = vsel %vm1655, %v1648, %v1650
        %v1659 = vsel %vm1655, %v1652, %v1654
        %v1665 = vsel %vm580, %v1627, 0
        %v1668 = vsel %vm580, %v1628, 0
        %v1671 = vsel %vm580, %v1629, 0
        %v1674 = vsel %vm580, %v1630, 0
        %1676 = vmatprep.subr.mxu0 0.0
        %1677 = vmatpush1.msra.mxu0 0.0
        %1678 = vmatprep.subr.mxu0 0.0
        %1679 = vmatpush1.msra.mxu0 0.0
        %1680 = vmatprep.subr.mxu0 0.0
        %1681 = vmatpush1.msra.mxu0 0.0
        %1682 = vmatprep.subr.mxu0 0.0
        %1683 = vmatpush1.msra.mxu0 0.0
        %1684 = vmatprep.subr.mxu0 0.0
        %1685 = vmatpush1.msra.mxu0 0.0
        %1686 = vmatprep.subr.mxu0 0.0
        %1687 = vmatpush1.msra.mxu0 0.0
        %1688 = vmatprep.subr.mxu0 0.0
        %1689 = vmatpush1.msra.mxu0 0.0
        %1690 = vmatprep.subr.mxu0 0.0
        %1691 = vmatpush1.msra.mxu0 0.0
        %1692 = vmatprep.subr.mxu0 0.0
        %1693 = vmatpush1.msra.mxu0 0.0
        %1694 = vmatprep.subr.mxu0 0.0
        %1695 = vmatpush1.msra.mxu0 0.0
        %1696 = vmatprep.subr.mxu0 0.0
        %1697 = vmatpush1.msra.mxu0 0.0
        %1698 = vmatprep.subr.mxu0 0.0
        %1699 = vmatpush1.msra.mxu0 0.0
        %1700 = vmatprep.subr.mxu0 0.0
        %1701 = vmatpush1.msra.mxu0 %v1659
        %1702 = vmatprep.subr.mxu0 0.0
        %1703 = vmatpush1.msra.mxu0 %v1658
        %1704 = vmatprep.subr.mxu0 0.0
        %1705 = vmatpush1.msra.mxu0 %v1657
        %1706 = vmatprep.subr.mxu0 0.0
        %1707 = vmatpush1.msra.mxu0 %v1656
        %1708 = vmatprep.subr.mxu0 0.0
        %1709 = vmatpush2.msra.mxu0 0.0
        %1710 = vmatprep.subr.mxu0 0.0
        %1711 = vmatpush2.msra.mxu0 0.0
        %1712 = vmatprep.subr.mxu0 0.0
        %1713 = vmatpush2.msra.mxu0 0.0
        %1714 = vmatprep.subr.mxu0 0.0
        %1715 = vmatpush2.msra.mxu0 0.0
        %1716 = vmatprep.subr.mxu0 0.0
        %1717 = vmatpush2.msra.mxu0 0.0
        %1718 = vmatprep.subr.mxu0 0.0
        %1719 = vmatpush2.msra.mxu0 0.0
        %1720 = vmatprep.subr.mxu0 0.0
        %1721 = vmatpush2.msra.mxu0 0.0
        %1722 = vmatprep.subr.mxu0 0.0
        %1723 = vmatpush2.msra.mxu0 0.0
        %1724 = vmatprep.subr.mxu0 0.0
        %1725 = vmatpush2.msra.mxu0 0.0
        %1726 = vmatprep.subr.mxu0 0.0
        %1727 = vmatpush2.msra.mxu0 0.0
        %1728 = vmatprep.subr.mxu0 0.0
        %1729 = vmatpush2.msra.mxu0 0.0
        %1730 = vmatprep.subr.mxu0 0.0
        %1731 = vmatpush2.msra.mxu0 0.0
        %1732 = vmatprep.subr.mxu0 0.0
        %1733 = vmatpush2.msra.mxu0 0.0
        %1734 = vmatprep.subr.mxu0 0.0
        %1735 = vmatpush2.msra.mxu0 0.0
        %1736 = vmatprep.subr.mxu0 0.0
        %1737 = vmatpush2.msra.mxu0 0.0
        %1738 = vmatprep.subr.mxu0 0.0
        %1739 = vmatpush2.msra.mxu0 0.0
        %1740 = vmatprep.mubr.f32.mxu0 0.0
        %1741 = vmatmul.mubr.f32.gmra.mxu0 %v1665
        %v1742 = vpop.f32.mrf.mxu0
        %v1743 = vadd.f32 0.0, %v1742
        %v1744 = vpop.f32.mrf.mxu0
        %1745 = vmatprep.mubr.f32.mxu0 0.0
        %1746 = vmatmul.mubr.f32.gmra.mxu0 %v1668
        %v1747 = vpop.f32.mrf.mxu0
        %v1748 = vadd.f32 0.0, %v1747
        %v1749 = vpop.f32.mrf.mxu0
        %1750 = vmatprep.mubr.f32.mxu0 0.0
        %1751 = vmatmul.mubr.f32.gmra.mxu0 %v1671
        %v1752 = vpop.f32.mrf.mxu0
        %v1753 = vadd.f32 0.0, %v1752
        %v1754 = vpop.f32.mrf.mxu0
        %1755 = vmatprep.mubr.f32.mxu0 0.0
        %1756 = vmatmul.mubr.f32.gmra.mxu0 %v1674
        %v1757 = vpop.f32.mrf.mxu0
        %v1758 = vadd.f32 0.0, %v1757
        %v1759 = vpop.f32.mrf.mxu0
        %1760 = vdwg.mxu0
        %v1762 = vsel %vm580, %v1622, 0
        %v1765 = vsel %vm580, %v1623, 0
        %v1768 = vsel %vm580, %v1624, 0
        %v1771 = vsel %vm580, %v1625, 0
        %1773 = vmatprep.subr.mxu0 0.0
        %1774 = vmatpush1.msra.mxu0 0.0
        %1775 = vmatprep.subr.mxu0 0.0
        %1776 = vmatpush1.msra.mxu0 0.0
        %1777 = vmatprep.subr.mxu0 0.0
        %1778 = vmatpush1.msra.mxu0 0.0
        %1779 = vmatprep.subr.mxu0 0.0
        %1780 = vmatpush1.msra.mxu0 0.0
        %1781 = vmatprep.subr.mxu0 0.0
        %1782 = vmatpush1.msra.mxu0 0.0
        %1783 = vmatprep.subr.mxu0 0.0
        %1784 = vmatpush1.msra.mxu0 0.0
        %1785 = vmatprep.subr.mxu0 0.0
        %1786 = vmatpush1.msra.mxu0 0.0
        %1787 = vmatprep.subr.mxu0 0.0
        %1788 = vmatpush1.msra.mxu0 0.0
        %1789 = vmatprep.subr.mxu0 0.0
        %1790 = vmatpush1.msra.mxu0 0.0
        %1791 = vmatprep.subr.mxu0 0.0
        %1792 = vmatpush1.msra.mxu0 0.0
        %1793 = vmatprep.subr.mxu0 0.0
        %1794 = vmatpush1.msra.mxu0 0.0
        %1795 = vmatprep.subr.mxu0 0.0
        %1796 = vmatpush1.msra.mxu0 0.0
        %1797 = vmatprep.subr.mxu0 0.0
        %1798 = vmatpush1.msra.mxu0 %v1616
        %1799 = vmatprep.subr.mxu0 0.0
        %1800 = vmatpush1.msra.mxu0 %v1615
        %1801 = vmatprep.subr.mxu0 0.0
        %1802 = vmatpush1.msra.mxu0 %v1614
        %1803 = vmatprep.subr.mxu0 0.0
        %1804 = vmatpush1.msra.mxu0 %v1613
        %1805 = vmatprep.subr.mxu0 0.0
        %1806 = vmatpush2.msra.mxu0 0.0
        %1807 = vmatprep.subr.mxu0 0.0
        %1808 = vmatpush2.msra.mxu0 0.0
        %1809 = vmatprep.subr.mxu0 0.0
        %1810 = vmatpush2.msra.mxu0 0.0
        %1811 = vmatprep.subr.mxu0 0.0
        %1812 = vmatpush2.msra.mxu0 0.0
        %1813 = vmatprep.subr.mxu0 0.0
        %1814 = vmatpush2.msra.mxu0 0.0
        %1815 = vmatprep.subr.mxu0 0.0
        %1816 = vmatpush2.msra.mxu0 0.0
        %1817 = vmatprep.subr.mxu0 0.0
        %1818 = vmatpush2.msra.mxu0 0.0
        %1819 = vmatprep.subr.mxu0 0.0
        %1820 = vmatpush2.msra.mxu0 0.0
        %1821 = vmatprep.subr.mxu0 0.0
        %1822 = vmatpush2.msra.mxu0 0.0
        %1823 = vmatprep.subr.mxu0 0.0
        %1824 = vmatpush2.msra.mxu0 0.0
        %1825 = vmatprep.subr.mxu0 0.0
        %1826 = vmatpush2.msra.mxu0 0.0
        %1827 = vmatprep.subr.mxu0 0.0
        %1828 = vmatpush2.msra.mxu0 0.0
        %1829 = vmatprep.subr.mxu0 0.0
        %1830 = vmatpush2.msra.mxu0 0.0
        %1831 = vmatprep.subr.mxu0 0.0
        %1832 = vmatpush2.msra.mxu0 0.0
        %1833 = vmatprep.subr.mxu0 0.0
        %1834 = vmatpush2.msra.mxu0 0.0
        %1835 = vmatprep.subr.mxu0 0.0
        %1836 = vmatpush2.msra.mxu0 0.0
        %1837 = vmatprep.mubr.f32.mxu0 0.0
        %1838 = vmatmul.mubr.f32.gmra.mxu0 %v1762
        %v1839 = vpop.f32.mrf.mxu0
        %v1840 = vadd.f32 %v1743, %v1839
        %v1841 = vpop.f32.mrf.mxu0
        %1842 = vmatprep.mubr.f32.mxu0 0.0
        %1843 = vmatmul.mubr.f32.gmra.mxu0 %v1765
        %v1844 = vpop.f32.mrf.mxu0
        %v1845 = vadd.f32 %v1748, %v1844
        %v1846 = vpop.f32.mrf.mxu0
        %1847 = vmatprep.mubr.f32.mxu0 0.0
        %1848 = vmatmul.mubr.f32.gmra.mxu0 %v1768
        %v1849 = vpop.f32.mrf.mxu0
        %v1850 = vadd.f32 %v1753, %v1849
        %v1851 = vpop.f32.mrf.mxu0
        %1852 = vmatprep.mubr.f32.mxu0 0.0
        %1853 = vmatmul.mubr.f32.gmra.mxu0 %v1771
        %v1854 = vpop.f32.mrf.mxu0
        %v1855 = vadd.f32 %v1758, %v1854
        %v1856 = vpop.f32.mrf.mxu0
        %1857 = vdwg.mxu0
        %s1858 = scalar_lea.vmem [#allocation4], 256
        %v1859 = vld [vmem:[%s1858] sm:$0xff]
        %v1860 = vld [vmem:[%s1858 + $0x8] sm:$0xff]
        %v1861 = vld [vmem:[%s1858 + $0x10] sm:$0xff]
        %v1862 = vld [vmem:[%s1858 + $0x18] sm:$0xff]
        %1863 = vrot.lane.b32.xlu0 %v1613, 124
        %v1864 = vpop.permute.xlu0 %1863
        %1865 = vrot.lane.b32.xlu0 %v1614, 124
        %v1866 = vpop.permute.xlu0 %1865
        %1867 = vrot.lane.b32.xlu0 %v1615, 124
        %v1868 = vpop.permute.xlu0 %1867
        %1869 = vrot.lane.b32.xlu0 %v1616, 124
        %v1870 = vpop.permute.xlu0 %1869
        %v1876 = vsel %vm580, %v1859, 0
        %v1879 = vsel %vm580, %v1860, 0
        %v1882 = vsel %vm580, %v1861, 0
        %v1885 = vsel %vm580, %v1862, 0
        %1887 = vmatprep.subr.mxu0 0.0
        %1888 = vmatpush1.msra.mxu0 0.0
        %1889 = vmatprep.subr.mxu0 0.0
        %1890 = vmatpush1.msra.mxu0 0.0
        %1891 = vmatprep.subr.mxu0 0.0
        %1892 = vmatpush1.msra.mxu0 0.0
        %1893 = vmatprep.subr.mxu0 0.0
        %1894 = vmatpush1.msra.mxu0 0.0
        %1895 = vmatprep.subr.mxu0 0.0
        %1896 = vmatpush1.msra.mxu0 0.0
        %1897 = vmatprep.subr.mxu0 0.0
        %1898 = vmatpush1.msra.mxu0 0.0
        %1899 = vmatprep.subr.mxu0 0.0
        %1900 = vmatpush1.msra.mxu0 0.0
        %1901 = vmatprep.subr.mxu0 0.0
        %1902 = vmatpush1.msra.mxu0 0.0
        %1903 = vmatprep.subr.mxu0 0.0
        %1904 = vmatpush1.msra.mxu0 0.0
        %1905 = vmatprep.subr.mxu0 0.0
        %1906 = vmatpush1.msra.mxu0 0.0
        %1907 = vmatprep.subr.mxu0 0.0
        %1908 = vmatpush1.msra.mxu0 0.0
        %1909 = vmatprep.subr.mxu0 0.0
        %1910 = vmatpush1.msra.mxu0 0.0
        %1911 = vmatprep.subr.mxu0 0.0
        %1912 = vmatpush1.msra.mxu0 %v1870
        %1913 = vmatprep.subr.mxu0 0.0
        %1914 = vmatpush1.msra.mxu0 %v1868
        %1915 = vmatprep.subr.mxu0 0.0
        %1916 = vmatpush1.msra.mxu0 %v1866
        %1917 = vmatprep.subr.mxu0 0.0
        %1918 = vmatpush1.msra.mxu0 %v1864
        %1919 = vmatprep.subr.mxu0 0.0
        %1920 = vmatpush2.msra.mxu0 0.0
        %1921 = vmatprep.subr.mxu0 0.0
        %1922 = vmatpush2.msra.mxu0 0.0
        %1923 = vmatprep.subr.mxu0 0.0
        %1924 = vmatpush2.msra.mxu0 0.0
        %1925 = vmatprep.subr.mxu0 0.0
        %1926 = vmatpush2.msra.mxu0 0.0
        %1927 = vmatprep.subr.mxu0 0.0
        %1928 = vmatpush2.msra.mxu0 0.0
        %1929 = vmatprep.subr.mxu0 0.0
        %1930 = vmatpush2.msra.mxu0 0.0
        %1931 = vmatprep.subr.mxu0 0.0
        %1932 = vmatpush2.msra.mxu0 0.0
        %1933 = vmatprep.subr.mxu0 0.0
        %1934 = vmatpush2.msra.mxu0 0.0
        %1935 = vmatprep.subr.mxu0 0.0
        %1936 = vmatpush2.msra.mxu0 0.0
        %1937 = vmatprep.subr.mxu0 0.0
        %1938 = vmatpush2.msra.mxu0 0.0
        %1939 = vmatprep.subr.mxu0 0.0
        %1940 = vmatpush2.msra.mxu0 0.0
        %1941 = vmatprep.subr.mxu0 0.0
        %1942 = vmatpush2.msra.mxu0 0.0
        %1943 = vmatprep.subr.mxu0 0.0
        %1944 = vmatpush2.msra.mxu0 0.0
        %1945 = vmatprep.subr.mxu0 0.0
        %1946 = vmatpush2.msra.mxu0 0.0
        %1947 = vmatprep.subr.mxu0 0.0
        %1948 = vmatpush2.msra.mxu0 0.0
        %1949 = vmatprep.subr.mxu0 0.0
        %1950 = vmatpush2.msra.mxu0 0.0
        %1951 = vmatprep.mubr.f32.mxu0 0.0
        %1952 = vmatmul.mubr.f32.gmra.mxu0 %v1876
        %v1953 = vpop.f32.mrf.mxu0
        %v1954 = vadd.f32 0.0, %v1953
        %v1955 = vpop.f32.mrf.mxu0
        %1956 = vmatprep.mubr.f32.mxu0 0.0
        %1957 = vmatmul.mubr.f32.gmra.mxu0 %v1879
        %v1958 = vpop.f32.mrf.mxu0
        %v1959 = vadd.f32 0.0, %v1958
        %v1960 = vpop.f32.mrf.mxu0
        %1961 = vmatprep.mubr.f32.mxu0 0.0
        %1962 = vmatmul.mubr.f32.gmra.mxu0 %v1882
        %v1963 = vpop.f32.mrf.mxu0
        %v1964 = vadd.f32 0.0, %v1963
        %v1965 = vpop.f32.mrf.mxu0
        %1966 = vmatprep.mubr.f32.mxu0 0.0
        %1967 = vmatmul.mubr.f32.gmra.mxu0 %v1885
        %v1968 = vpop.f32.mrf.mxu0
        %v1969 = vadd.f32 0.0, %v1968
        %v1970 = vpop.f32.mrf.mxu0
        %1971 = vdwg.mxu0
        %v1972 = vadd.f32 %v1840, %v1954
        %v1973 = vadd.f32 %v1845, %v1959
        %v1974 = vadd.f32 %v1850, %v1964
        %v1975 = vadd.f32 %v1855, %v1969
        %s1976 = scalar_lea.vmem %s5, 64
        %v1977 = vld [vmem:[%s1976] sm:$0xff]
        %v1978 = vld [vmem:[%s1976 + $0x8] sm:$0xff]
        %v1979 = vld [vmem:[%s1976 + $0x10] sm:$0xff]
        %v1980 = vld [vmem:[%s1976 + $0x18] sm:$0xff]
        %1982 = vset.pattern.permute.xlu0 0
        %1983 = vperm.xlu0 %1982, %v1977
        %v1984 = vpop.permute.xlu0 %1983
        %1987 = vset.pattern.permute.xlu0 0
        %1988 = vperm.xlu0 %1987, %v1978
        %v1989 = vpop.permute.xlu0 %1988
        %1992 = vset.pattern.permute.xlu0 0
        %1993 = vperm.xlu0 %1992, %v1979
        %v1994 = vpop.permute.xlu0 %1993
        %1997 = vset.pattern.permute.xlu0 0
        %1998 = vperm.xlu0 %1997, %v1980
        %v1999 = vpop.permute.xlu0 %1998
        %v2001 = vadd.f32 %v1972, %v1984
        %v2002 = vadd.f32 %v1973, %v1989
        %v2003 = vadd.f32 %v1974, %v1994
        %v2004 = vadd.f32 %v1975, %v1999
        %v2005 = vmax.f32 %v2001, 0.0
        %v2006 = vmax.f32 %v2002, 0.0
        %v2007 = vmax.f32 %v2003, 0.0
        %v2008 = vmax.f32 %v2004, 0.0
        %s2009 = scalar_lea.vmem %s6, 64
        %v2010 = vld [vmem:[%s2009] sm:$0xff]
        %v2011 = vld [vmem:[%s2009 + $0x8] sm:$0xff]
        %v2012 = vld [vmem:[%s2009 + $0x10] sm:$0xff]
        %v2013 = vld [vmem:[%s2009 + $0x18] sm:$0xff]
        %s2014 = scalar_lea.vmem %s7, 64
        %v2015 = vld [vmem:[%s2014] sm:$0xff]
        %v2016 = vld [vmem:[%s2014 + $0x8] sm:$0xff]
        %v2017 = vld [vmem:[%s2014 + $0x10] sm:$0xff]
        %v2018 = vld [vmem:[%s2014 + $0x18] sm:$0xff]
        %2020 = vset.pattern.permute.xlu0 0
        %2021 = vperm.xlu0 %2020, %v2015
        %v2022 = vpop.permute.xlu0 %2021
        %2025 = vset.pattern.permute.xlu0 0
        %2026 = vperm.xlu0 %2025, %v2016
        %v2027 = vpop.permute.xlu0 %2026
        %2030 = vset.pattern.permute.xlu0 0
        %2031 = vperm.xlu0 %2030, %v2017
        %v2032 = vpop.permute.xlu0 %2031
        %2035 = vset.pattern.permute.xlu0 0
        %2036 = vperm.xlu0 %2035, %v2018
        %v2037 = vpop.permute.xlu0 %2036
        %v2040 = vsel %vm580, %v2010, 0
        %v2043 = vsel %vm580, %v2011, 0
        %v2046 = vsel %vm580, %v2012, 0
        %v2049 = vsel %vm580, %v2013, 0
        %2051 = vmatprep.subr.mxu0 0.0
        %2052 = vmatpush1.msra.mxu0 0.0
        %2053 = vmatprep.subr.mxu0 0.0
        %2054 = vmatpush1.msra.mxu0 0.0
        %2055 = vmatprep.subr.mxu0 0.0
        %2056 = vmatpush1.msra.mxu0 0.0
        %2057 = vmatprep.subr.mxu0 0.0
        %2058 = vmatpush1.msra.mxu0 0.0
        %2059 = vmatprep.subr.mxu0 0.0
        %2060 = vmatpush1.msra.mxu0 0.0
        %2061 = vmatprep.subr.mxu0 0.0
        %2062 = vmatpush1.msra.mxu0 0.0
        %2063 = vmatprep.subr.mxu0 0.0
        %2064 = vmatpush1.msra.mxu0 0.0
        %2065 = vmatprep.subr.mxu0 0.0
        %2066 = vmatpush1.msra.mxu0 0.0
        %2067 = vmatprep.subr.mxu0 0.0
        %2068 = vmatpush1.msra.mxu0 0.0
        %2069 = vmatprep.subr.mxu0 0.0
        %2070 = vmatpush1.msra.mxu0 0.0
        %2071 = vmatprep.subr.mxu0 0.0
        %2072 = vmatpush1.msra.mxu0 0.0
        %2073 = vmatprep.subr.mxu0 0.0
        %2074 = vmatpush1.msra.mxu0 0.0
        %2075 = vmatprep.subr.mxu0 0.0
        %2076 = vmatpush1.msra.mxu0 %v2008
        %2077 = vmatprep.subr.mxu0 0.0
        %2078 = vmatpush1.msra.mxu0 %v2007
        %2079 = vmatprep.subr.mxu0 0.0
        %2080 = vmatpush1.msra.mxu0 %v2006
        %2081 = vmatprep.subr.mxu0 0.0
        %2082 = vmatpush1.msra.mxu0 %v2005
        %2083 = vmatprep.subr.mxu0 0.0
        %2084 = vmatpush2.msra.mxu0 0.0
        %2085 = vmatprep.subr.mxu0 0.0
        %2086 = vmatpush2.msra.mxu0 0.0
        %2087 = vmatprep.subr.mxu0 0.0
        %2088 = vmatpush2.msra.mxu0 0.0
        %2089 = vmatprep.subr.mxu0 0.0
        %2090 = vmatpush2.msra.mxu0 0.0
        %2091 = vmatprep.subr.mxu0 0.0
        %2092 = vmatpush2.msra.mxu0 0.0
        %2093 = vmatprep.subr.mxu0 0.0
        %2094 = vmatpush2.msra.mxu0 0.0
        %2095 = vmatprep.subr.mxu0 0.0
        %2096 = vmatpush2.msra.mxu0 0.0
        %2097 = vmatprep.subr.mxu0 0.0
        %2098 = vmatpush2.msra.mxu0 0.0
        %2099 = vmatprep.subr.mxu0 0.0
        %2100 = vmatpush2.msra.mxu0 0.0
        %2101 = vmatprep.subr.mxu0 0.0
        %2102 = vmatpush2.msra.mxu0 0.0
        %2103 = vmatprep.subr.mxu0 0.0
        %2104 = vmatpush2.msra.mxu0 0.0
        %2105 = vmatprep.subr.mxu0 0.0
        %2106 = vmatpush2.msra.mxu0 0.0
        %2107 = vmatprep.subr.mxu0 0.0
        %2108 = vmatpush2.msra.mxu0 0.0
        %2109 = vmatprep.subr.mxu0 0.0
        %2110 = vmatpush2.msra.mxu0 0.0
        %2111 = vmatprep.subr.mxu0 0.0
        %2112 = vmatpush2.msra.mxu0 0.0
        %2113 = vmatprep.subr.mxu0 0.0
        %2114 = vmatpush2.msra.mxu0 0.0
        %2115 = vmatprep.mubr.f32.mxu0 0.0
        %2116 = vmatmul.mubr.f32.gmra.mxu0 %v2040
        %v2117 = vpop.f32.mrf.mxu0
        %v2118 = vadd.f32 %v2022, %v2117
        %v2119 = vpop.f32.mrf.mxu0
        %2120 = vmatprep.mubr.f32.mxu0 0.0
        %2121 = vmatmul.mubr.f32.gmra.mxu0 %v2043
        %v2122 = vpop.f32.mrf.mxu0
        %v2123 = vadd.f32 %v2027, %v2122
        %v2124 = vpop.f32.mrf.mxu0
        %2125 = vmatprep.mubr.f32.mxu0 0.0
        %2126 = vmatmul.mubr.f32.gmra.mxu0 %v2046
        %v2127 = vpop.f32.mrf.mxu0
        %v2128 = vadd.f32 %v2032, %v2127
        %v2129 = vpop.f32.mrf.mxu0
        %2130 = vmatprep.mubr.f32.mxu0 0.0
        %2131 = vmatmul.mubr.f32.gmra.mxu0 %v2049
        %v2132 = vpop.f32.mrf.mxu0
        %v2133 = vadd.f32 %v2037, %v2132
        %v2134 = vpop.f32.mrf.mxu0
        %2135 = vdwg.mxu0
        %v2136 = vld [vmem:[#allocation3] sm:$0xff]
        %v2137 = vld [vmem:[#allocation3 + $0x8] sm:$0xff]
        %v2138 = vld [vmem:[#allocation3 + $0x10] sm:$0xff]
        %v2139 = vld [vmem:[#allocation3 + $0x18] sm:$0xff]
        %v2140 = vadd.f32 %v2136, %v2118
        %v2141 = vadd.f32 %v2137, %v2123
        %v2142 = vadd.f32 %v2138, %v2128
        %v2143 = vadd.f32 %v2139, %v2133
        %2144 = vst.msk [vmem:[#allocation3] sm:$0xff] %vm521, %v2140
        %2145 = vst.msk [vmem:[#allocation3 + $0x8] sm:$0xff] %vm521, %v2141
        %2146 = vst.msk [vmem:[#allocation3 + $0x10] sm:$0xff] %vm521, %v2142
        %2147 = vst.msk [vmem:[#allocation3 + $0x18] sm:$0xff] %vm521, %v2143
        %v2148 = vld [vmem:[#allocation3] sm:$0xff]
        %v2149 = vld [vmem:[#allocation3 + $0x8] sm:$0xff]
        %v2150 = vld [vmem:[#allocation3 + $0x10] sm:$0xff]
        %v2151 = vld [vmem:[#allocation3 + $0x18] sm:$0xff]
        %v2152 = vld [vmem:[%s8] sm:$0x3f]
        %v2153 = vld [vmem:[%s9] sm:$0x3f]
        %2155 = vset.pattern.permute.xlu0 0
        %2156 = vperm.xlu0 %2155, %v2153
        %v2157 = vpop.permute.xlu0 %2156
        %v2160 = vsel %vm580, %v2152, 0
        %2162 = vmatprep.subr.mxu0 0.0
        %2163 = vmatpush1.msra.mxu0 0.0
        %2164 = vmatprep.subr.mxu0 0.0
        %2165 = vmatpush1.msra.mxu0 0.0
        %2166 = vmatprep.subr.mxu0 0.0
        %2167 = vmatpush1.msra.mxu0 0.0
        %2168 = vmatprep.subr.mxu0 0.0
        %2169 = vmatpush1.msra.mxu0 0.0
        %2170 = vmatprep.subr.mxu0 0.0
        %2171 = vmatpush1.msra.mxu0 0.0
        %2172 = vmatprep.subr.mxu0 0.0
        %2173 = vmatpush1.msra.mxu0 0.0
        %2174 = vmatprep.subr.mxu0 0.0
        %2175 = vmatpush1.msra.mxu0 0.0
        %2176 = vmatprep.subr.mxu0 0.0
        %2177 = vmatpush1.msra.mxu0 0.0
        %2178 = vmatprep.subr.mxu0 0.0
        %2179 = vmatpush1.msra.mxu0 0.0
        %2180 = vmatprep.subr.mxu0 0.0
        %2181 = vmatpush1.msra.mxu0 0.0
        %2182 = vmatprep.subr.mxu0 0.0
        %2183 = vmatpush1.msra.mxu0 0.0
        %2184 = vmatprep.subr.mxu0 0.0
        %2185 = vmatpush1.msra.mxu0 0.0
        %2186 = vmatprep.subr.mxu0 0.0
        %2187 = vmatpush1.msra.mxu0 %v2151
        %2188 = vmatprep.subr.mxu0 0.0
        %2189 = vmatpush1.msra.mxu0 %v2150
        %2190 = vmatprep.subr.mxu0 0.0
        %2191 = vmatpush1.msra.mxu0 %v2149
        %2192 = vmatprep.subr.mxu0 0.0
        %2193 = vmatpush1.msra.mxu0 %v2148
        %2194 = vmatprep.subr.mxu0 0.0
        %2195 = vmatpush2.msra.mxu0 0.0
        %2196 = vmatprep.subr.mxu0 0.0
        %2197 = vmatpush2.msra.mxu0 0.0
        %2198 = vmatprep.subr.mxu0 0.0
        %2199 = vmatpush2.msra.mxu0 0.0
        %2200 = vmatprep.subr.mxu0 0.0
        %2201 = vmatpush2.msra.mxu0 0.0
        %2202 = vmatprep.subr.mxu0 0.0
        %2203 = vmatpush2.msra.mxu0 0.0
        %2204 = vmatprep.subr.mxu0 0.0
        %2205 = vmatpush2.msra.mxu0 0.0
        %2206 = vmatprep.subr.mxu0 0.0
        %2207 = vmatpush2.msra.mxu0 0.0
        %2208 = vmatprep.subr.mxu0 0.0
        %2209 = vmatpush2.msra.mxu0 0.0
        %2210 = vmatprep.subr.mxu0 0.0
        %2211 = vmatpush2.msra.mxu0 0.0
        %2212 = vmatprep.subr.mxu0 0.0
        %2213 = vmatpush2.msra.mxu0 0.0
        %2214 = vmatprep.subr.mxu0 0.0
        %2215 = vmatpush2.msra.mxu0 0.0
        %2216 = vmatprep.subr.mxu0 0.0
        %2217 = vmatpush2.msra.mxu0 0.0
        %2218 = vmatprep.subr.mxu0 0.0
        %2219 = vmatpush2.msra.mxu0 0.0
        %2220 = vmatprep.subr.mxu0 0.0
        %2221 = vmatpush2.msra.mxu0 0.0
        %2222 = vmatprep.subr.mxu0 0.0
        %2223 = vmatpush2.msra.mxu0 0.0
        %2224 = vmatprep.subr.mxu0 0.0
        %2225 = vmatpush2.msra.mxu0 0.0
        %2226 = vmatprep.mubr.f32.mxu0 0.0
        %2227 = vmatmul.mubr.f32.gmra.mxu0 %v2160
        %v2228 = vpop.f32.mrf.mxu0
        %v2229 = vadd.f32 %v2157, %v2228
        %v2230 = vpop.f32.mrf.mxu0
        %2231 = vdwg.mxu0
        %v2232 = vld [vmem:[%s379] sm:$0x1]
        %v2234 = vlaneseq
        %v2235 = vshrl.u32 %v2234, 7
        %v2236 = vsub.s32 0, %v2235
        %v2237 = vrot.slane %v2232, %v2236
        %v2239 = vmul.f32 %v2229, %v2237
        %vm2240 = vcmask 128000
        %2241 = vst.msk [vmem:[%s383] sm:$0x3f] %vm2240, %v2239
        %p2242 = scmp.lt.s32.totalorder %s22, 1
        %s2243 = scalar_select %p2242, %s22, 1
        %s2244 = smul.addr %s2243, 8
        %s2245 = scalar_lea.vmem %s10, %s2244
        // Predicated region
        $region65: #{tpu_custom_call.1} parent=59 // pred_check
          %p2246 = pneg %p260
        $region66: #{tpu_custom_call.1} parent=59 // pred_check_branch
          %2248 = sbr.rel (%p2246) target = $region68
        $region67: #{tpu_custom_call.1} parent=59 // pred_region
          _
        $region68: #{tpu_custom_call.1} parent=59 // pred_fallthru
          _
      $region60: #{tpu_custom_call.1} parent=5 // pred_fallthru
        _
      %p2249 = scmp.le.s32.totalorder 2, %s17
      // Predicated region
      $region69: #{tpu_custom_call.1} parent=5 // pred_check
        %p2250 = pneg %p2249
      $region70: #{tpu_custom_call.1} parent=5 // pred_check_branch
        %2252 = sbr.rel (%p2250) target = $region72
      $region71: #{tpu_custom_call.1} parent=5 // pred_region
        %s2253 = ssub.s32 %s17, 2
        // Predicated region
        $region73: #{tpu_custom_call.1} parent=71 // pred_check
          %p2254 = pneg %p266
        $region74: #{tpu_custom_call.1} parent=71 // pred_check_branch
          %2256 = sbr.rel (%p2254) target = $region76
        $region75: #{tpu_custom_call.1} parent=71 // pred_region
          %p2257 = scmp.lt.s32.totalorder %s23, 1
          %s2258 = scalar_select %p2257, %s23, 1
          %s2259 = smul.addr %s2258, 8
          %s2260 = scalar_lea.vmem %s10, %s2259
        $region76: #{tpu_custom_call.1} parent=71 // pred_fallthru
          _
      $region72: #{tpu_custom_call.1} parent=5 // pred_fallthru
        _
    $region6: #{tpu_custom_call.1} parent=1 // loop_footer
      %s21 = sadd.s32 1, %s17
    $region7: #{tpu_custom_call.1} parent=1 // loop_footer_branch
      %16 = sbr.rel target = $region3
    $region8: #{tpu_custom_call.1} parent=1 // loop_exit
      _
    %2261 = vsyncpa [#allocation5], 1
    %s2262 = scalar_lea.sflag [#allocation5], 1
    %2263 = vsyncpa %s2262, 1

// kernel: tpu_custom_call.1
$region0: #{tpu_custom_call.1}
  #allocation0 [shape = 'u32[]', space=smem, size = 0x4, offset = 0x4, fixed_abs, tag = 'smem constant byte address 0x4 - core index']
  #allocation1 [shape = 'u32[144,128]{1,0:T(1,128)}', space=vmem, size = 0x12000, scoped, tag = 'internal scratch']
  #allocation2 [shape = 'f32[32,256]{1,0:T(8,128)}', space=vmem, size = 0x8000, scoped, tag = 'scratch operand']
  #allocation3 [shape = 'f32[32,16]{1,0:T(8,128)}', space=vmem, size = 0x4000, scoped, tag = 'scratch operand']
  %s0 = inlined_call_operand.vmem [shape: f32[2,8,16], index: 0, kind: input, shape index: {}]
  %s1 = inlined_call_operand.vmem [shape: f32[2,1,16], index: 1, kind: input, shape index: {}]
  %s2 = inlined_call_operand.vmem [shape: f32[32,8], index: 2, kind: input, shape index: {}]
  %s3 = inlined_call_operand.vmem [shape: f32[32,1], index: 3, kind: input, shape index: {}]
  %s4 = inlined_call_operand.hbm [shape: f32[3,3,32,32], index: 4, kind: input, shape index: {}]
  %s5 = inlined_call_operand.vmem [shape: f32[3,32,1], index: 5, kind: input, shape index: {}]
  %s6 = inlined_call_operand.vmem [shape: f32[3,32,32], index: 6, kind: input, shape index: {}]
  %s7 = inlined_call_operand.vmem [shape: f32[3,32,1], index: 7, kind: input, shape index: {}]
  %s8 = inlined_call_operand.vmem [shape: f32[6,32], index: 8, kind: input, shape index: {}]
  %s9 = inlined_call_operand.vmem [shape: f32[6,1], index: 9, kind: input, shape index: {}]
  %s10 = inlined_call_operand.vmem [shape: f32[2,6,16], index: 10, kind: output, shape index: {}]
  %s11 = sld [smem:[#allocation0]]
  $region77: #{tpu_custom_call.1} parent=0
    _
  %s13 = ssub.s32 1, %s11
  %s14 = scalar_select 0, %s13, %s11
  $region1: #{tpu_custom_call.1} parent=0
    #allocation4 [shape = 'u8[147456]{0}', space=vmem, size = 0x24000, scoped, tag = 'input window, operand 4, single buffered']
    #allocation5 [shape = 's32[2]{0}', space=sflag, size = 0x8, scoped, tag = 'scoped memory for tpu_custom_call.1']
    %15 = vsyncpa [#allocation5], 0
    loop: start=0, step=1, limit=4
    $region2: #{tpu_custom_call.1} parent=1 // loop_pre_header
      _
    $region3: #{tpu_custom_call.1} parent=1 // loop_header
      %s17 = sphi 0, %s21
      %p18 = scmp.ge.s32.totalorder %s17, 4
      %s27 = sphi 0, %s29
      %s30 = sphi 0, %s27
      %s31 = sphi 0, %s30
      %s47 = sphi 0, %s31
      %s53 = sphi 0, %s55
      %s56 = sphi 0, %s53
      %s57 = sphi 0, %s56
      %s73 = sphi 0, %s57
      %s77 = sphi 0, %s77
      %s79 = sphi 0, %s77
      %s80 = sphi 0, %s79
      %s94 = sphi 0, %s80
      %s98 = sphi 0, %s98
      %s100 = sphi 0, %s98
      %s101 = sphi 0, %s100
      %s115 = sphi 0, %s101
      %s119 = sphi 0, %s119
      %s121 = sphi 0, %s119
      %s122 = sphi 0, %s121
      %s136 = sphi 0, %s122
      %s140 = sphi 0, %s140
      %s142 = sphi 0, %s140
      %s143 = sphi 0, %s142
      %s157 = sphi 0, %s143
      %s161 = sphi 0, %s161
      %s163 = sphi 0, %s161
      %s164 = sphi 0, %s163
      %s178 = sphi 0, %s164
      %s182 = sphi 0, %s182
      %s184 = sphi 0, %s182
      %s185 = sphi 0, %s184
      %s199 = sphi 0, %s185
      %s203 = sphi 0, %s203
      %s205 = sphi 0, %s203
      %s206 = sphi 0, %s205
      %s220 = sphi 0, %s206
      %s224 = sphi 0, %s224
      %s226 = sphi 0, %s224
      %s227 = sphi 0, %s226
      %s241 = sphi 0, %s227
      %s247 = sphi 0, %s249
      %s250 = sphi 0, %s247
      %s251 = sphi 0, %s250
      %s267 = sphi 0, %s251
    $region4: #{tpu_custom_call.1} parent=1 // loop_header_branch
      %20 = sbr.rel (%p18) target = $region8
    $region5: #{tpu_custom_call.1} parent=1 // loop_body
      %s22 = ssub.s32 %s17, 1
      %s23 = ssub.s32 %s17, 2
      %s24 = sadd.s32 %s17, 1
      %s25 = ssub.s32 %s17, %s24
      %p26 = scmp.eq.s32.totalorder %s25, 0
      %s28 = sadd.s32 %s27, 1
      %s29 = scalar_select %p26, %s27, %s28
      %p32 = pneg %p26
      %p33 = scmp.eq.s32.totalorder %s17, 1
      %p34 = por %p32, %p33
      %p35 = scmp.ne.s32.totalorder %s27, %s30
      %p36 = scmp.eq.s32.totalorder %s17, 0
      %p37 = por %p35, %p36
      %p38 = scmp.ne.s32.totalorder %s27, %s30
      %p39 = scmp.eq.s32.totalorder %s22, 1
      %p40 = por %p38, %p39
      %p41 = scmp.ne.s32.totalorder %s30, %s31
      %p42 = scmp.eq.s32.totalorder %s22, 0
      %p43 = por %p41, %p42
      %p44 = scmp.ne.s32.totalorder %s30, %s31
      %p45 = scmp.eq.s32.totalorder %s23, 1
      %p46 = por %p44, %p45
      %p48 = scmp.ne.s32.totalorder %s31, %s47
      %p49 = scmp.eq.s32.totalorder %s23, 0
      %p50 = por %p48, %p49
      %s51 = ssub.s32 %s17, %s24
      %p52 = scmp.eq.s32.totalorder %s51, 0
      %s54 = sadd.s32 %s53, 1
      %s55 = scalar_select %p52, %s53, %s54
      %p58 = pneg %p52
      %p59 = scmp.eq.s32.totalorder %s17, 1
      %p60 = por %p58, %p59
      %p61 = scmp.ne.s32.totalorder %s53, %s56
      %p62 = scmp.eq.s32.totalorder %s17, 0
      %p63 = por %p61, %p62
      %p64 = scmp.ne.s32.totalorder %s53, %s56
      %p65 = scmp.eq.s32.totalorder %s22, 1
      %p66 = por %p64, %p65
      %p67 = scmp.ne.s32.totalorder %s56, %s57
      %p68 = scmp.eq.s32.totalorder %s22, 0
      %p69 = por %p67, %p68
      %p70 = scmp.ne.s32.totalorder %s56, %s57
      %p71 = scmp.eq.s32.totalorder %s23, 1
      %p72 = por %p70, %p71
      %p74 = scmp.ne.s32.totalorder %s57, %s73
      %p75 = scmp.eq.s32.totalorder %s23, 0
      %p76 = por %p74, %p75
      %s78 = sadd.s32 %s77, 1
      %p81 = scmp.eq.s32.totalorder %s17, 1
      %p82 = scmp.ne.s32.totalorder %s77, %s79
      %p83 = scmp.eq.s32.totalorder %s17, 0
      %p84 = por %p82, %p83
      %p85 = scmp.ne.s32.totalorder %s77, %s79
      %p86 = scmp.eq.s32.totalorder %s22, 1
      %p87 = por %p85, %p86
      %p88 = scmp.ne.s32.totalorder %s79, %s80
      %p89 = scmp.eq.s32.totalorder %s22, 0
      %p90 = por %p88, %p89
      %p91 = scmp.ne.s32.totalorder %s79, %s80
      %p92 = scmp.eq.s32.totalorder %s23, 1
      %p93 = por %p91, %p92
      %p95 = scmp.ne.s32.totalorder %s80, %s94
      %p96 = scmp.eq.s32.totalorder %s23, 0
      %p97 = por %p95, %p96
      %s99 = sadd.s32 %s98, 1
      %p102 = scmp.eq.s32.totalorder %s17, 1
      %p103 = scmp.ne.s32.totalorder %s98, %s100
      %p104 = scmp.eq.s32.totalorder %s17, 0
      %p105 = por %p103, %p104
      %p106 = scmp.ne.s32.totalorder %s98, %s100
      %p107 = scmp.eq.s32.totalorder %s22, 1
      %p108 = por %p106, %p107
      %p109 = scmp.ne.s32.totalorder %s100, %s101
      %p110 = scmp.eq.s32.totalorder %s22, 0
      %p111 = por %p109, %p110
      %p112 = scmp.ne.s32.totalorder %s100, %s101
      %p113 = scmp.eq.s32.totalorder %s23, 1
      %p114 = por %p112, %p113
      %p116 = scmp.ne.s32.totalorder %s101, %s115
      %p117 = scmp.eq.s32.totalorder %s23, 0
      %p118 = por %p116, %p117
      %s120 = sadd.s32 %s119, 1
      %p123 = scmp.eq.s32.totalorder %s17, 1
      %p124 = scmp.ne.s32.totalorder %s119, %s121
      %p125 = scmp.eq.s32.totalorder %s17, 0
      %p126 = por %p124, %p125
      %p127 = scmp.ne.s32.totalorder %s119, %s121
      %p128 = scmp.eq.s32.totalorder %s22, 1
      %p129 = por %p127, %p128
      %p130 = scmp.ne.s32.totalorder %s121, %s122
      %p131 = scmp.eq.s32.totalorder %s22, 0
      %p132 = por %p130, %p131
      %p133 = scmp.ne.s32.totalorder %s121, %s122
      %p134 = scmp.eq.s32.totalorder %s23, 1
      %p135 = por %p133, %p134
      %p137 = scmp.ne.s32.totalorder %s122, %s136
      %p138 = scmp.eq.s32.totalorder %s23, 0
      %p139 = por %p137, %p138
      %s141 = sadd.s32 %s140, 1
      %p144 = scmp.eq.s32.totalorder %s17, 1
      %p145 = scmp.ne.s32.totalorder %s140, %s142
      %p146 = scmp.eq.s32.totalorder %s17, 0
      %p147 = por %p145, %p146
      %p148 = scmp.ne.s32.totalorder %s140, %s142
      %p149 = scmp.eq.s32.totalorder %s22, 1
      %p150 = por %p148, %p149
      %p151 = scmp.ne.s32.totalorder %s142, %s143
      %p152 = scmp.eq.s32.totalorder %s22, 0
      %p153 = por %p151, %p152
      %p154 = scmp.ne.s32.totalorder %s142, %s143
      %p155 = scmp.eq.s32.totalorder %s23, 1
      %p156 = por %p154, %p155
      %p158 = scmp.ne.s32.totalorder %s143, %s157
      %p159 = scmp.eq.s32.totalorder %s23, 0
      %p160 = por %p158, %p159
      %s162 = sadd.s32 %s161, 1
      %p165 = scmp.eq.s32.totalorder %s17, 1
      %p166 = scmp.ne.s32.totalorder %s161, %s163
      %p167 = scmp.eq.s32.totalorder %s17, 0
      %p168 = por %p166, %p167
      %p169 = scmp.ne.s32.totalorder %s161, %s163
      %p170 = scmp.eq.s32.totalorder %s22, 1
      %p171 = por %p169, %p170
      %p172 = scmp.ne.s32.totalorder %s163, %s164
      %p173 = scmp.eq.s32.totalorder %s22, 0
      %p174 = por %p172, %p173
      %p175 = scmp.ne.s32.totalorder %s163, %s164
      %p176 = scmp.eq.s32.totalorder %s23, 1
      %p177 = por %p175, %p176
      %p179 = scmp.ne.s32.totalorder %s164, %s178
      %p180 = scmp.eq.s32.totalorder %s23, 0
      %p181 = por %p179, %p180
      %s183 = sadd.s32 %s182, 1
      %p186 = scmp.eq.s32.totalorder %s17, 1
      %p187 = scmp.ne.s32.totalorder %s182, %s184
      %p188 = scmp.eq.s32.totalorder %s17, 0
      %p189 = por %p187, %p188
      %p190 = scmp.ne.s32.totalorder %s182, %s184
      %p191 = scmp.eq.s32.totalorder %s22, 1
      %p192 = por %p190, %p191
      %p193 = scmp.ne.s32.totalorder %s184, %s185
      %p194 = scmp.eq.s32.totalorder %s22, 0
      %p195 = por %p193, %p194
      %p196 = scmp.ne.s32.totalorder %s184, %s185
      %p197 = scmp.eq.s32.totalorder %s23, 1
      %p198 = por %p196, %p197
      %p200 = scmp.ne.s32.totalorder %s185, %s199
      %p201 = scmp.eq.s32.totalorder %s23, 0
      %p202 = por %p200, %p201
      %s204 = sadd.s32 %s203, 1
      %p207 = scmp.eq.s32.totalorder %s17, 1
      %p208 = scmp.ne.s32.totalorder %s203, %s205
      %p209 = scmp.eq.s32.totalorder %s17, 0
      %p210 = por %p208, %p209
      %p211 = scmp.ne.s32.totalorder %s203, %s205
      %p212 = scmp.eq.s32.totalorder %s22, 1
      %p213 = por %p211, %p212
      %p214 = scmp.ne.s32.totalorder %s205, %s206
      %p215 = scmp.eq.s32.totalorder %s22, 0
      %p216 = por %p214, %p215
      %p217 = scmp.ne.s32.totalorder %s205, %s206
      %p218 = scmp.eq.s32.totalorder %s23, 1
      %p219 = por %p217, %p218
      %p221 = scmp.ne.s32.totalorder %s206, %s220
      %p222 = scmp.eq.s32.totalorder %s23, 0
      %p223 = por %p221, %p222
      %s225 = sadd.s32 %s224, 1
      %p228 = scmp.eq.s32.totalorder %s17, 1
      %p229 = scmp.ne.s32.totalorder %s224, %s226
      %p230 = scmp.eq.s32.totalorder %s17, 0
      %p231 = por %p229, %p230
      %p232 = scmp.ne.s32.totalorder %s224, %s226
      %p233 = scmp.eq.s32.totalorder %s22, 1
      %p234 = por %p232, %p233
      %p235 = scmp.ne.s32.totalorder %s226, %s227
      %p236 = scmp.eq.s32.totalorder %s22, 0
      %p237 = por %p235, %p236
      %p238 = scmp.ne.s32.totalorder %s226, %s227
      %p239 = scmp.eq.s32.totalorder %s23, 1
      %p240 = por %p238, %p239
      %p242 = scmp.ne.s32.totalorder %s227, %s241
      %p243 = scmp.eq.s32.totalorder %s23, 0
      %p244 = por %p242, %p243
      %s245 = ssub.s32 %s17, %s24
      %p246 = scmp.eq.s32.totalorder %s245, 0
      %s248 = sadd.s32 %s247, 1
      %s249 = scalar_select %p246, %s247, %s248
      %p252 = pneg %p246
      %p253 = scmp.eq.s32.totalorder %s17, 1
      %p254 = por %p252, %p253
      %p255 = scmp.ne.s32.totalorder %s247, %s250
      %p256 = scmp.eq.s32.totalorder %s17, 0
      %p257 = por %p255, %p256
      %p258 = scmp.ne.s32.totalorder %s247, %s250
      %p259 = scmp.eq.s32.totalorder %s22, 1
      %p260 = por %p258, %p259
      %p261 = scmp.ne.s32.totalorder %s250, %s251
      %p262 = scmp.eq.s32.totalorder %s22, 0
      %p263 = por %p261, %p262
      %p264 = scmp.ne.s32.totalorder %s250, %s251
      %p265 = scmp.eq.s32.totalorder %s23, 1
      %p266 = por %p264, %p265
      %p268 = scmp.ne.s32.totalorder %s251, %s267
      %p269 = scmp.eq.s32.totalorder %s23, 0
      %p270 = por %p268, %p269
      %p271 = scmp.le.s32.totalorder 1, %s17
      %p272 = scmp.lt.s32.totalorder %s17, 3
      %p273 = pnand %p271, %p272
      %p274 = pneg %p273
      // Predicated region
      $region9: #{tpu_custom_call.1} parent=5 // pred_check
        _
      $region10: #{tpu_custom_call.1} parent=5 // pred_check_branch
        %276 = sbr.rel (%p273) target = $region12
      $region11: #{tpu_custom_call.1} parent=5 // pred_region
        %s277 = ssub.s32 %s17, 1
        // Predicated region
        $region13: #{tpu_custom_call.1} parent=11 // pred_check
          %p278 = pneg %p90
        $region14: #{tpu_custom_call.1} parent=11 // pred_check_branch
          %280 = sbr.rel (%p278) target = $region16
        $region15: #{tpu_custom_call.1} parent=11 // pred_region
          _
        $region16: #{tpu_custom_call.1} parent=11 // pred_fallthru
          _
        // Predicated region
        $region17: #{tpu_custom_call.1} parent=11 // pred_check
          %p281 = pneg %p111
        $region18: #{tpu_custom_call.1} parent=11 // pred_check_branch
          %283 = sbr.rel (%p281) target = $region20
        $region19: #{tpu_custom_call.1} parent=11 // pred_region
          _
        $region20: #{tpu_custom_call.1} parent=11 // pred_fallthru
          _
        // Predicated region
        $region21: #{tpu_custom_call.1} parent=11 // pred_check
          %p284 = pneg %p132
        $region22: #{tpu_custom_call.1} parent=11 // pred_check_branch
          %286 = sbr.rel (%p284) target = $region24
        $region23: #{tpu_custom_call.1} parent=11 // pred_region
          %s288 = ssub.s32 4608, 4608
          %289 = vsyncadd [#allocation5], %s288
          %s290 = sshll.u32 [#allocation4], 4
          %s291 = int_to_ptr.vmem [resolvable:$true] %s290
          %296 = dma.hbm_to_vmem [thread:$0]  %s4, 4608, %s291, [#allocation5], 128, 128, 8
        $region24: #{tpu_custom_call.1} parent=11 // pred_fallthru
          _
        // Predicated region
        $region25: #{tpu_custom_call.1} parent=11 // pred_check
          %p297 = pneg %p153
        $region26: #{tpu_custom_call.1} parent=11 // pred_check_branch
          %299 = sbr.rel (%p297) target = $region28
        $region27: #{tpu_custom_call.1} parent=11 // pred_region
          _
        $region28: #{tpu_custom_call.1} parent=11 // pred_fallthru
          _
        // Predicated region
        $region29: #{tpu_custom_call.1} parent=11 // pred_check
          %p300 = pneg %p174
        $region30: #{tpu_custom_call.1} parent=11 // pred_check_branch
          %302 = sbr.rel (%p300) target = $region32
        $region31: #{tpu_custom_call.1} parent=11 // pred_region
          _
        $region32: #{tpu_custom_call.1} parent=11 // pred_fallthru
          _
        // Predicated region
        $region33: #{tpu_custom_call.1} parent=11 // pred_check
          %p303 = pneg %p195
        $region34: #{tpu_custom_call.1} parent=11 // pred_check_branch
          %305 = sbr.rel (%p303) target = $region36
        $region35: #{tpu_custom_call.1} parent=11 // pred_region
          _
        $region36: #{tpu_custom_call.1} parent=11 // pred_fallthru
          _
        // Predicated region
        $region37: #{tpu_custom_call.1} parent=11 // pred_check
          %p306 = pneg %p216
        $region38: #{tpu_custom_call.1} parent=11 // pred_check_branch
          %308 = sbr.rel (%p306) target = $region40
        $region39: #{tpu_custom_call.1} parent=11 // pred_region
          _
        $region40: #{tpu_custom_call.1} parent=11 // pred_fallthru
          _
        // Predicated region
        $region41: #{tpu_custom_call.1} parent=11 // pred_check
          %p309 = pneg %p237
        $region42: #{tpu_custom_call.1} parent=11 // pred_check_branch
          %311 = sbr.rel (%p309) target = $region44
        $region43: #{tpu_custom_call.1} parent=11 // pred_region
          _
        $region44: #{tpu_custom_call.1} parent=11 // pred_fallthru
          _
      $region12: #{tpu_custom_call.1} parent=5 // pred_fallthru
        _
      %p312 = scmp.lt.s32.totalorder %s17, 2
      // Predicated region
      $region45: #{tpu_custom_call.1} parent=5 // pred_check
        %p313 = pneg %p312
      $region46: #{tpu_custom_call.1} parent=5 // pred_check_branch
        %315 = sbr.rel (%p313) target = $region48
      $region47: #{tpu_custom_call.1} parent=5 // pred_region
        // Predicated region
        $region49: #{tpu_custom_call.1} parent=47 // pred_check
          %p316 = pneg %p37
        $region50: #{tpu_custom_call.1} parent=47 // pred_check_branch
          %318 = sbr.rel (%p316) target = $region52
        $region51: #{tpu_custom_call.1} parent=47 // pred_region
          %p319 = scmp.lt.s32.totalorder %s17, 1
          %s320 = scalar_select %p319, %s17, 1
          %s321 = smul.addr %s320, 8
          %s322 = scalar_lea.vmem %s0, %s321
        $region52: #{tpu_custom_call.1} parent=47 // pred_fallthru
          _
        // Predicated region
        $region53: #{tpu_custom_call.1} parent=47 // pred_check
          %p323 = pneg %p63
        $region54: #{tpu_custom_call.1} parent=47 // pred_check_branch
          %325 = sbr.rel (%p323) target = $region56
        $region55: #{tpu_custom_call.1} parent=47 // pred_region
          %p326 = scmp.lt.s32.totalorder %s17, 1
          %s327 = scalar_select %p326, %s17, 1
          %s328 = scalar_lea.vmem %s1, %s327
        $region56: #{tpu_custom_call.1} parent=47 // pred_fallthru
          _
      $region48: #{tpu_custom_call.1} parent=5 // pred_fallthru
        _
      %p329 = scmp.le.s32.totalorder 1, %s17
      %p330 = scmp.lt.s32.totalorder %s17, 3
      %p331 = pnand %p329, %p330
      %p332 = pneg %p331
      // Predicated region
      $region57: #{tpu_custom_call.1} parent=5 // pred_check
        _
      $region58: #{tpu_custom_call.1} parent=5 // pred_check_branch
        %334 = sbr.rel (%p331) target = $region60
      $region59: #{tpu_custom_call.1} parent=5 // pred_region
        %s335 = ssub.s32 %s17, 1
        // Predicated region
        $region61: #{tpu_custom_call.1} parent=59 // pred_check
          %p336 = pneg %p132
        $region62: #{tpu_custom_call.1} parent=59 // pred_check_branch
          %338 = sbr.rel (%p336) target = $region64
        $region63: #{tpu_custom_call.1} parent=59 // pred_region
          %339 = dma.done [#allocation5], 4608
        $region64: #{tpu_custom_call.1} parent=59 // pred_fallthru
          _
        %p340 = scmp.lt.s32.totalorder %s22, 1
        %s341 = scalar_select %p340, %s22, 1
        %s342 = smul.addr %s341, 8
        %s343 = scalar_lea.vmem %s0, %s342
        %p344 = pneg %p43
        %p345 = pneg %p40
        %p346 = scmp.lt.s32.totalorder %s22, 1
        %s347 = scalar_select %p346, %s22, 1
        %s348 = scalar_lea.vmem %s1, %s347
        %p349 = pneg %p69
        %p350 = pneg %p66
        %p351 = pneg %p90
        %p352 = pneg %p87
        %p353 = pneg %p111
        %p354 = pneg %p108
        %p355 = pneg %p132
        %p356 = pneg %p129
        %p357 = pneg %p153
        %p358 = pneg %p150
        %p359 = pneg %p174
        %p360 = pneg %p171
        %p361 = pneg %p195
        %p362 = pneg %p192
        %p363 = pneg %p216
        %p364 = pneg %p213
        %p365 = pneg %p237
        %p366 = pneg %p234
        %p367 = pneg %p263
        %p368 = pneg %p260
        %p369 = scmp.lt.s32.totalorder %s22, 1
        %s370 = scalar_select %p369, %s22, 1
        %s371 = smul.addr %s370, 8
        %s372 = scalar_lea.vmem %s10, %s371
        %p373 = scmp.lt.s32.totalorder %s22, 1
        %s374 = scalar_select %p373, %s22, 1
        %s375 = smul.addr %s374, 8
        %s376 = scalar_lea.vmem %s0, %s375
        %p377 = scmp.lt.s32.totalorder %s22, 1
        %s378 = scalar_select %p377, %s22, 1
        %s379 = scalar_lea.vmem %s1, %s378
        %p380 = scmp.lt.s32.totalorder %s22, 1
        %s381 = scalar_select %p380, %s22, 1
        %s382 = smul.addr %s381, 8
        %s383 = scalar_lea.vmem %s10, %s382
        %vm384 = vcmask 1048544
        %385 = vst.msk [vmem:[#allocation2] sm:$0xff] %vm384, 0.0
        %386 = vst.msk [vmem:[#allocation2 + $0x10] sm:$0xff] %vm384, 0.0
        %387 = vst.msk [vmem:[#allocation2 + $0x20] sm:$0xff] %vm384, 0.0
        %388 = vst.msk [vmem:[#allocation2 + $0x30] sm:$0xff] %vm384, 0.0
        %vm389 = vcmask 162944
        %390 = vst.msk [vmem:[#allocation2 + $0x8] sm:$0xff] %vm389, 0.0
        %391 = vst.msk [vmem:[#allocation2 + $0x18] sm:$0xff] %vm389, 0.0
        %392 = vst.msk [vmem:[#allocation2 + $0x28] sm:$0xff] %vm389, 0.0
        %393 = vst.msk [vmem:[#allocation2 + $0x38] sm:$0xff] %vm389, 0.0
        %v394 = vld [vmem:[%s376] sm:$0xff]
        %v395 = vld [vmem:[%s2] sm:$0xff]
        %v396 = vld [vmem:[%s2 + $0x8] sm:$0xff]
        %v397 = vld [vmem:[%s2 + $0x10] sm:$0xff]
        %v398 = vld [vmem:[%s2 + $0x18] sm:$0xff]
        %v399 = vld [vmem:[%s3] sm:$0xff]
        %v400 = vld [vmem:[%s3 + $0x8] sm:$0xff]
        %v401 = vld [vmem:[%s3 + $0x10] sm:$0xff]
        %v402 = vld [vmem:[%s3 + $0x18] sm:$0xff]
        %404 = vset.pattern.permute.xlu0 0
        %405 = vperm.xlu0 %404, %v399
        %v406 = vpop.permute.xlu0 %405
        %409 = vset.pattern.permute.xlu0 0
        %410 = vperm.xlu0 %409, %v400
        %v411 = vpop.permute.xlu0 %410
        %414 = vset.pattern.permute.xlu0 0
        %415 = vperm.xlu0 %414, %v401
        %v416 = vpop.permute.xlu0 %415
        %419 = vset.pattern.permute.xlu0 0
        %420 = vperm.xlu0 %419, %v402
        %v421 = vpop.permute.xlu0 %420
        %vm423 = vcmask 64512
        %v425 = vsel %vm423, %v395, 0
        %v428 = vsel %vm423, %v396, 0
        %v431 = vsel %vm423, %v397, 0
        %v434 = vsel %vm423, %v398, 0
        %436 = vmatprep.subr.mxu0 0.0
        %437 = vmatpush1.msra.mxu0 0.0
        %438 = vmatprep.subr.mxu0 0.0
        %439 = vmatpush1.msra.mxu0 0.0
        %440 = vmatprep.subr.mxu0 0.0
        %441 = vmatpush1.msra.mxu0 0.0
        %442 = vmatprep.subr.mxu0 0.0
        %443 = vmatpush1.msra.mxu0 0.0
        %444 = vmatprep.subr.mxu0 0.0
        %445 = vmatpush1.msra.mxu0 0.0
        %446 = vmatprep.subr.mxu0 0.0
        %447 = vmatpush1.msra.mxu0 0.0
        %448 = vmatprep.subr.mxu0 0.0
        %449 = vmatpush1.msra.mxu0 0.0
        %450 = vmatprep.subr.mxu0 0.0
        %451 = vmatpush1.msra.mxu0 0.0
        %452 = vmatprep.subr.mxu0 0.0
        %453 = vmatpush1.msra.mxu0 0.0
        %454 = vmatprep.subr.mxu0 0.0
        %455 = vmatpush1.msra.mxu0 0.0
        %456 = vmatprep.subr.mxu0 0.0
        %457 = vmatpush1.msra.mxu0 0.0
        %458 = vmatprep.subr.mxu0 0.0
        %459 = vmatpush1.msra.mxu0 0.0
        %460 = vmatprep.subr.mxu0 0.0
        %461 = vmatpush1.msra.mxu0 0.0
        %462 = vmatprep.subr.mxu0 0.0
        %463 = vmatpush1.msra.mxu0 0.0
        %464 = vmatprep.subr.mxu0 0.0
        %465 = vmatpush1.msra.mxu0 0.0
        %466 = vmatprep.subr.mxu0 0.0
        %467 = vmatpush1.msra.mxu0 %v394
        %468 = vmatprep.subr.mxu0 0.0
        %469 = vmatpush2.msra.mxu0 0.0
        %470 = vmatprep.subr.mxu0 0.0
        %471 = vmatpush2.msra.mxu0 0.0
        %472 = vmatprep.subr.mxu0 0.0
        %473 = vmatpush2.msra.mxu0 0.0
        %474 = vmatprep.subr.mxu0 0.0
        %475 = vmatpush2.msra.mxu0 0.0
        %476 = vmatprep.subr.mxu0 0.0
        %477 = vmatpush2.msra.mxu0 0.0
        %478 = vmatprep.subr.mxu0 0.0
        %479 = vmatpush2.msra.mxu0 0.0
        %480 = vmatprep.subr.mxu0 0.0
        %481 = vmatpush2.msra.mxu0 0.0
        %482 = vmatprep.subr.mxu0 0.0
        %483 = vmatpush2.msra.mxu0 0.0
        %484 = vmatprep.subr.mxu0 0.0
        %485 = vmatpush2.msra.mxu0 0.0
        %486 = vmatprep.subr.mxu0 0.0
        %487 = vmatpush2.msra.mxu0 0.0
        %488 = vmatprep.subr.mxu0 0.0
        %489 = vmatpush2.msra.mxu0 0.0
        %490 = vmatprep.subr.mxu0 0.0
        %491 = vmatpush2.msra.mxu0 0.0
        %492 = vmatprep.subr.mxu0 0.0
        %493 = vmatpush2.msra.mxu0 0.0
        %494 = vmatprep.subr.mxu0 0.0
        %495 = vmatpush2.msra.mxu0 0.0
        %496 = vmatprep.subr.mxu0 0.0
        %497 = vmatpush2.msra.mxu0 0.0
        %498 = vmatprep.subr.mxu0 0.0
        %499 = vmatpush2.msra.mxu0 0.0
        %500 = vmatprep.mubr.f32.mxu0 0.0
        %501 = vmatmul.mubr.f32.gmra.mxu0 %v425
        %v502 = vpop.f32.mrf.mxu0
        %v503 = vadd.f32 %v406, %v502
        %v504 = vpop.f32.mrf.mxu0
        %505 = vmatprep.mubr.f32.mxu0 0.0
        %506 = vmatmul.mubr.f32.gmra.mxu0 %v428
        %v507 = vpop.f32.mrf.mxu0
        %v508 = vadd.f32 %v411, %v507
        %v509 = vpop.f32.mrf.mxu0
        %510 = vmatprep.mubr.f32.mxu0 0.0
        %511 = vmatmul.mubr.f32.gmra.mxu0 %v431
        %v512 = vpop.f32.mrf.mxu0
        %v513 = vadd.f32 %v416, %v512
        %v514 = vpop.f32.mrf.mxu0
        %515 = vmatprep.mubr.f32.mxu0 0.0
        %516 = vmatmul.mubr.f32.gmra.mxu0 %v434
        %v517 = vpop.f32.mrf.mxu0
        %v518 = vadd.f32 %v421, %v517
        %v519 = vpop.f32.mrf.mxu0
        %520 = vdwg.mxu0
        %vm521 = vcmask 130048
        %522 = vst.msk [vmem:[#allocation3] sm:$0xff] %vm521, %v503
        %523 = vst.msk [vmem:[#allocation3 + $0x8] sm:$0xff] %vm521, %v508
        %524 = vst.msk [vmem:[#allocation3 + $0x10] sm:$0xff] %vm521, %v513
        %525 = vst.msk [vmem:[#allocation3 + $0x18] sm:$0xff] %vm521, %v518
        %526 = vst.msk [vmem:[#allocation2 + $0x8] sm:$0xff] %vm521, %v503
        %527 = vst.msk [vmem:[#allocation2 + $0x18] sm:$0xff] %vm521, %v508
        %528 = vst.msk [vmem:[#allocation2 + $0x28] sm:$0xff] %vm521, %v513
        %529 = vst.msk [vmem:[#allocation2 + $0x38] sm:$0xff] %vm521, %v518
        %v530 = vld [vmem:[#allocation2 + $0x8] sm:$0xff]
        %v531 = vld [vmem:[#allocation2 + $0x18] sm:$0xff]
        %v532 = vld [vmem:[#allocation2 + $0x28] sm:$0xff]
        %v533 = vld [vmem:[#allocation2 + $0x38] sm:$0xff]
        %v534 = vld [vmem:[#allocation2] sm:$0xff]
        %v535 = vld [vmem:[#allocation2 + $0x10] sm:$0xff]
        %v536 = vld [vmem:[#allocation2 + $0x20] sm:$0xff]
        %v537 = vld [vmem:[#allocation2 + $0x30] sm:$0xff]
        %s538 = scalar_lea.vmem [#allocation4], 32
        %v539 = vld [vmem:[%s538] sm:$0xff]
        %v540 = vld [vmem:[%s538 + $0x8] sm:$0xff]
        %v541 = vld [vmem:[%s538 + $0x10] sm:$0xff]
        %v542 = vld [vmem:[%s538 + $0x18] sm:$0xff]
        %v543 = vld [vmem:[#allocation4] sm:$0xff]
        %v544 = vld [vmem:[#allocation4 + $0x8] sm:$0xff]
        %v545 = vld [vmem:[#allocation4 + $0x10] sm:$0xff]
        %v546 = vld [vmem:[#allocation4 + $0x18] sm:$0xff]
        %555 = vrot.lane.b32.xlu0 %v534, 1
        %v556 = vpop.permute.xlu0 %555
        %557 = vrot.lane.b32.xlu0 %v530, 1
        %v558 = vpop.permute.xlu0 %557
        %559 = vrot.lane.b32.xlu0 %v535, 1
        %v560 = vpop.permute.xlu0 %559
        %561 = vrot.lane.b32.xlu0 %v531, 1
        %v562 = vpop.permute.xlu0 %561
        %563 = vrot.lane.b32.xlu0 %v536, 1
        %v564 = vpop.permute.xlu0 %563
        %565 = vrot.lane.b32.xlu0 %v532, 1
        %v566 = vpop.permute.xlu0 %565
        %567 = vrot.lane.b32.xlu0 %v537, 1
        %v568 = vpop.permute.xlu0 %567
        %569 = vrot.lane.b32.xlu0 %v533, 1
        %v570 = vpop.permute.xlu0 %569
        %vm571 = vcmask 7168
        %v572 = vsel %vm571, %v556, %v558
        %v573 = vsel %vm571, %v560, %v562
        %v574 = vsel %vm571, %v564, %v566
        %v575 = vsel %vm571, %v568, %v570
        %vm580 = vcmask 261120
        %v582 = vsel %vm580, %v543, 0
        %v585 = vsel %vm580, %v544, 0
        %v588 = vsel %vm580, %v545, 0
        %v591 = vsel %vm580, %v546, 0
        %593 = vmatprep.subr.mxu0 0.0
        %594 = vmatpush1.msra.mxu0 0.0
        %595 = vmatprep.subr.mxu0 0.0
        %596 = vmatpush1.msra.mxu0 0.0
        %597 = vmatprep.subr.mxu0 0.0
        %598 = vmatpush1.msra.mxu0 0.0
        %599 = vmatprep.subr.mxu0 0.0
        %600 = vmatpush1.msra.mxu0 0.0
        %601 = vmatprep.subr.mxu0 0.0
        %602 = vmatpush1.msra.mxu0 0.0
        %603 = vmatprep.subr.mxu0 0.0
        %604 = vmatpush1.msra.mxu0 0.0
        %605 = vmatprep.subr.mxu0 0.0
        %606 = vmatpush1.msra.mxu0 0.0
        %607 = vmatprep.subr.mxu0 0.0
        %608 = vmatpush1.msra.mxu0 0.0
        %609 = vmatprep.subr.mxu0 0.0
        %610 = vmatpush1.msra.mxu0 0.0
        %611 = vmatprep.subr.mxu0 0.0
        %612 = vmatpush1.msra.mxu0 0.0
        %613 = vmatprep.subr.mxu0 0.0
        %614 = vmatpush1.msra.mxu0 0.0
        %615 = vmatprep.subr.mxu0 0.0
        %616 = vmatpush1.msra.mxu0 0.0
        %617 = vmatprep.subr.mxu0 0.0
        %618 = vmatpush1.msra.mxu0 %v575
        %619 = vmatprep.subr.mxu0 0.0
        %620 = vmatpush1.msra.mxu0 %v574
        %621 = vmatprep.subr.mxu0 0.0
        %622 = vmatpush1.msra.mxu0 %v573
        %623 = vmatprep.subr.mxu0 0.0
        %624 = vmatpush1.msra.mxu0 %v572
        %625 = vmatprep.subr.mxu0 0.0
        %626 = vmatpush2.msra.mxu0 0.0
        %627 = vmatprep.subr.mxu0 0.0
        %628 = vmatpush2.msra.mxu0 0.0
        %629 = vmatprep.subr.mxu0 0.0
        %630 = vmatpush2.msra.mxu0 0.0
        %631 = vmatprep.subr.mxu0 0.0
        %632 = vmatpush2.msra.mxu0 0.0
        %633 = vmatprep.subr.mxu0 0.0
        %634 = vmatpush2.msra.mxu0 0.0
        %635 = vmatprep.subr.mxu0 0.0
        %636 = vmatpush2.msra.mxu0 0.0
        %637 = vmatprep.subr.mxu0 0.0
        %638 = vmatpush2.msra.mxu0 0.0
        %639 = vmatprep.subr.mxu0 0.0
        %640 = vmatpush2.msra.mxu0 0.0
        %641 = vmatprep.subr.mxu0 0.0
        %642 = vmatpush2.msra.mxu0 0.0
        %643 = vmatprep.subr.mxu0 0.0
        %644 = vmatpush2.msra.mxu0 0.0
        %645 = vmatprep.subr.mxu0 0.0
        %646 = vmatpush2.msra.mxu0 0.0
        %647 = vmatprep.subr.mxu0 0.0
        %648 = vmatpush2.msra.mxu0 0.0
        %649 = vmatprep.subr.mxu0 0.0
        %650 = vmatpush2.msra.mxu0 0.0
        %651 = vmatprep.subr.mxu0 0.0
        %652 = vmatpush2.msra.mxu0 0.0
        %653 = vmatprep.subr.mxu0 0.0
        %654 = vmatpush2.msra.mxu0 0.0
        %655 = vmatprep.subr.mxu0 0.0
        %656 = vmatpush2.msra.mxu0 0.0
        %657 = vmatprep.mubr.f32.mxu0 0.0
        %658 = vmatmul.mubr.f32.gmra.mxu0 %v582
        %v659 = vpop.f32.mrf.mxu0
        %v660 = vadd.f32 0.0, %v659
        %v661 = vpop.f32.mrf.mxu0
        %662 = vmatprep.mubr.f32.mxu0 0.0
        %663 = vmatmul.mubr.f32.gmra.mxu0 %v585
        %v664 = vpop.f32.mrf.mxu0
        %v665 = vadd.f32 0.0, %v664
        %v666 = vpop.f32.mrf.mxu0
        %667 = vmatprep.mubr.f32.mxu0 0.0
        %668 = vmatmul.mubr.f32.gmra.mxu0 %v588
        %v669 = vpop.f32.mrf.mxu0
        %v670 = vadd.f32 0.0, %v669
        %v671 = vpop.f32.mrf.mxu0
        %672 = vmatprep.mubr.f32.mxu0 0.0
        %673 = vmatmul.mubr.f32.gmra.mxu0 %v591
        %v674 = vpop.f32.mrf.mxu0
        %v675 = vadd.f32 0.0, %v674
        %v676 = vpop.f32.mrf.mxu0
        %677 = vdwg.mxu0
        %v679 = vsel %vm580, %v539, 0
        %v682 = vsel %vm580, %v540, 0
        %v685 = vsel %vm580, %v541, 0
        %v688 = vsel %vm580, %v542, 0
        %690 = vmatprep.subr.mxu0 0.0
        %691 = vmatpush1.msra.mxu0 0.0
        %692 = vmatprep.subr.mxu0 0.0
        %693 = vmatpush1.msra.mxu0 0.0
        %694 = vmatprep.subr.mxu0 0.0
        %695 = vmatpush1.msra.mxu0 0.0
        %696 = vmatprep.subr.mxu0 0.0
        %697 = vmatpush1.msra.mxu0 0.0
        %698 = vmatprep.subr.mxu0 0.0
        %699 = vmatpush1.msra.mxu0 0.0
        %700 = vmatprep.subr.mxu0 0.0
        %701 = vmatpush1.msra.mxu0 0.0
        %702 = vmatprep.subr.mxu0 0.0
        %703 = vmatpush1.msra.mxu0 0.0
        %704 = vmatprep.subr.mxu0 0.0
        %705 = vmatpush1.msra.mxu0 0.0
        %706 = vmatprep.subr.mxu0 0.0
        %707 = vmatpush1.msra.mxu0 0.0
        %708 = vmatprep.subr.mxu0 0.0
        %709 = vmatpush1.msra.mxu0 0.0
        %710 = vmatprep.subr.mxu0 0.0
        %711 = vmatpush1.msra.mxu0 0.0
        %712 = vmatprep.subr.mxu0 0.0
        %713 = vmatpush1.msra.mxu0 0.0
        %714 = vmatprep.subr.mxu0 0.0
        %715 = vmatpush1.msra.mxu0 %v533
        %716 = vmatprep.subr.mxu0 0.0
        %717 = vmatpush1.msra.mxu0 %v532
        %718 = vmatprep.subr.mxu0 0.0
        %719 = vmatpush1.msra.mxu0 %v531
        %720 = vmatprep.subr.mxu0 0.0
        %721 = vmatpush1.msra.mxu0 %v530
        %722 = vmatprep.subr.mxu0 0.0
        %723 = vmatpush2.msra.mxu0 0.0
        %724 = vmatprep.subr.mxu0 0.0
        %725 = vmatpush2.msra.mxu0 0.0
        %726 = vmatprep.subr.mxu0 0.0
        %727 = vmatpush2.msra.mxu0 0.0
        %728 = vmatprep.subr.mxu0 0.0
        %729 = vmatpush2.msra.mxu0 0.0
        %730 = vmatprep.subr.mxu0 0.0
        %731 = vmatpush2.msra.mxu0 0.0
        %732 = vmatprep.subr.mxu0 0.0
        %733 = vmatpush2.msra.mxu0 0.0
        %734 = vmatprep.subr.mxu0 0.0
        %735 = vmatpush2.msra.mxu0 0.0
        %736 = vmatprep.subr.mxu0 0.0
        %737 = vmatpush2.msra.mxu0 0.0
        %738 = vmatprep.subr.mxu0 0.0
        %739 = vmatpush2.msra.mxu0 0.0
        %740 = vmatprep.subr.mxu0 0.0
        %741 = vmatpush2.msra.mxu0 0.0
        %742 = vmatprep.subr.mxu0 0.0
        %743 = vmatpush2.msra.mxu0 0.0
        %744 = vmatprep.subr.mxu0 0.0
        %745 = vmatpush2.msra.mxu0 0.0
        %746 = vmatprep.subr.mxu0 0.0
        %747 = vmatpush2.msra.mxu0 0.0
        %748 = vmatprep.subr.mxu0 0.0
        %749 = vmatpush2.msra.mxu0 0.0
        %750 = vmatprep.subr.mxu0 0.0
        %751 = vmatpush2.msra.mxu0 0.0
        %752 = vmatprep.subr.mxu0 0.0
        %753 = vmatpush2.msra.mxu0 0.0
        %754 = vmatprep.mubr.f32.mxu0 0.0
        %755 = vmatmul.mubr.f32.gmra.mxu0 %v679
        %v756 = vpop.f32.mrf.mxu0
        %v757 = vadd.f32 %v660, %v756
        %v758 = vpop.f32.mrf.mxu0
        %759 = vmatprep.mubr.f32.mxu0 0.0
        %760 = vmatmul.mubr.f32.gmra.mxu0 %v682
        %v761 = vpop.f32.mrf.mxu0
        %v762 = vadd.f32 %v665, %v761
        %v763 = vpop.f32.mrf.mxu0
        %764 = vmatprep.mubr.f32.mxu0 0.0
        %765 = vmatmul.mubr.f32.gmra.mxu0 %v685
        %v766 = vpop.f32.mrf.mxu0
        %v767 = vadd.f32 %v670, %v766
        %v768 = vpop.f32.mrf.mxu0
        %769 = vmatprep.mubr.f32.mxu0 0.0
        %770 = vmatmul.mubr.f32.gmra.mxu0 %v688
        %v771 = vpop.f32.mrf.mxu0
        %v772 = vadd.f32 %v675, %v771
        %v773 = vpop.f32.mrf.mxu0
        %774 = vdwg.mxu0
        %s775 = scalar_lea.vmem [#allocation4], 64
        %v776 = vld [vmem:[%s775] sm:$0xff]
        %v777 = vld [vmem:[%s775 + $0x8] sm:$0xff]
        %v778 = vld [vmem:[%s775 + $0x10] sm:$0xff]
        %v779 = vld [vmem:[%s775 + $0x18] sm:$0xff]
        %780 = vrot.lane.b32.xlu0 %v530, 127
        %v781 = vpop.permute.xlu0 %780
        %782 = vrot.lane.b32.xlu0 %v531, 127
        %v783 = vpop.permute.xlu0 %782
        %784 = vrot.lane.b32.xlu0 %v532, 127
        %v785 = vpop.permute.xlu0 %784
        %786 = vrot.lane.b32.xlu0 %v533, 127
        %v787 = vpop.permute.xlu0 %786
        %v793 = vsel %vm580, %v776, 0
        %v796 = vsel %vm580, %v777, 0
        %v799 = vsel %vm580, %v778, 0
        %v802 = vsel %vm580, %v779, 0
        %804 = vmatprep.subr.mxu0 0.0
        %805 = vmatpush1.msra.mxu0 0.0
        %806 = vmatprep.subr.mxu0 0.0
        %807 = vmatpush1.msra.mxu0 0.0
        %808 = vmatprep.subr.mxu0 0.0
        %809 = vmatpush1.msra.mxu0 0.0
        %810 = vmatprep.subr.mxu0 0.0
        %811 = vmatpush1.msra.mxu0 0.0
        %812 = vmatprep.subr.mxu0 0.0
        %813 = vmatpush1.msra.mxu0 0.0
        %814 = vmatprep.subr.mxu0 0.0
        %815 = vmatpush1.msra.mxu0 0.0
        %816 = vmatprep.subr.mxu0 0.0
        %817 = vmatpush1.msra.mxu0 0.0
        %818 = vmatprep.subr.mxu0 0.0
        %819 = vmatpush1.msra.mxu0 0.0
        %820 = vmatprep.subr.mxu0 0.0
        %821 = vmatpush1.msra.mxu0 0.0
        %822 = vmatprep.subr.mxu0 0.0
        %823 = vmatpush1.msra.mxu0 0.0
        %824 = vmatprep.subr.mxu0 0.0
        %825 = vmatpush1.msra.mxu0 0.0
        %826 = vmatprep.subr.mxu0 0.0
        %827 = vmatpush1.msra.mxu0 0.0
        %828 = vmatprep.subr.mxu0 0.0
        %829 = vmatpush1.msra.mxu0 %v787
        %830 = vmatprep.subr.mxu0 0.0
        %831 = vmatpush1.msra.mxu0 %v785
        %832 = vmatprep.subr.mxu0 0.0
        %833 = vmatpush1.msra.mxu0 %v783
        %834 = vmatprep.subr.mxu0 0.0
        %835 = vmatpush1.msra.mxu0 %v781
        %836 = vmatprep.subr.mxu0 0.0
        %837 = vmatpush2.msra.mxu0 0.0
        %838 = vmatprep.subr.mxu0 0.0
        %839 = vmatpush2.msra.mxu0 0.0
        %840 = vmatprep.subr.mxu0 0.0
        %841 = vmatpush2.msra.mxu0 0.0
        %842 = vmatprep.subr.mxu0 0.0
        %843 = vmatpush2.msra.mxu0 0.0
        %844 = vmatprep.subr.mxu0 0.0
        %845 = vmatpush2.msra.mxu0 0.0
        %846 = vmatprep.subr.mxu0 0.0
        %847 = vmatpush2.msra.mxu0 0.0
        %848 = vmatprep.subr.mxu0 0.0
        %849 = vmatpush2.msra.mxu0 0.0
        %850 = vmatprep.subr.mxu0 0.0
        %851 = vmatpush2.msra.mxu0 0.0
        %852 = vmatprep.subr.mxu0 0.0
        %853 = vmatpush2.msra.mxu0 0.0
        %854 = vmatprep.subr.mxu0 0.0
        %855 = vmatpush2.msra.mxu0 0.0
        %856 = vmatprep.subr.mxu0 0.0
        %857 = vmatpush2.msra.mxu0 0.0
        %858 = vmatprep.subr.mxu0 0.0
        %859 = vmatpush2.msra.mxu0 0.0
        %860 = vmatprep.subr.mxu0 0.0
        %861 = vmatpush2.msra.mxu0 0.0
        %862 = vmatprep.subr.mxu0 0.0
        %863 = vmatpush2.msra.mxu0 0.0
        %864 = vmatprep.subr.mxu0 0.0
        %865 = vmatpush2.msra.mxu0 0.0
        %866 = vmatprep.subr.mxu0 0.0
        %867 = vmatpush2.msra.mxu0 0.0
        %868 = vmatprep.mubr.f32.mxu0 0.0
        %869 = vmatmul.mubr.f32.gmra.mxu0 %v793
        %v870 = vpop.f32.mrf.mxu0
        %v871 = vadd.f32 0.0, %v870
        %v872 = vpop.f32.mrf.mxu0
        %873 = vmatprep.mubr.f32.mxu0 0.0
        %874 = vmatmul.mubr.f32.gmra.mxu0 %v796
        %v875 = vpop.f32.mrf.mxu0
        %v876 = vadd.f32 0.0, %v875
        %v877 = vpop.f32.mrf.mxu0
        %878 = vmatprep.mubr.f32.mxu0 0.0
        %879 = vmatmul.mubr.f32.gmra.mxu0 %v799
        %v880 = vpop.f32.mrf.mxu0
        %v881 = vadd.f32 0.0, %v880
        %v882 = vpop.f32.mrf.mxu0
        %883 = vmatprep.mubr.f32.mxu0 0.0
        %884 = vmatmul.mubr.f32.gmra.mxu0 %v802
        %v885 = vpop.f32.mrf.mxu0
        %v886 = vadd.f32 0.0, %v885
        %v887 = vpop.f32.mrf.mxu0
        %888 = vdwg.mxu0
        %v889 = vadd.f32 %v757, %v871
        %v890 = vadd.f32 %v762, %v876
        %v891 = vadd.f32 %v767, %v881
        %v892 = vadd.f32 %v772, %v886
        %v893 = vld [vmem:[%s5] sm:$0xff]
        %v894 = vld [vmem:[%s5 + $0x8] sm:$0xff]
        %v895 = vld [vmem:[%s5 + $0x10] sm:$0xff]
        %v896 = vld [vmem:[%s5 + $0x18] sm:$0xff]
        %898 = vset.pattern.permute.xlu0 0
        %899 = vperm.xlu0 %898, %v893
        %v900 = vpop.permute.xlu0 %899
        %903 = vset.pattern.permute.xlu0 0
        %904 = vperm.xlu0 %903, %v894
        %v905 = vpop.permute.xlu0 %904
        %908 = vset.pattern.permute.xlu0 0
        %909 = vperm.xlu0 %908, %v895
        %v910 = vpop.permute.xlu0 %909
        %913 = vset.pattern.permute.xlu0 0
        %914 = vperm.xlu0 %913, %v896
        %v915 = vpop.permute.xlu0 %914
        %v917 = vadd.f32 %v889, %v900
        %v918 = vadd.f32 %v890, %v905
        %v919 = vadd.f32 %v891, %v910
        %v920 = vadd.f32 %v892, %v915
        %v921 = vmax.f32 %v917, 0.0
        %v922 = vmax.f32 %v918, 0.0
        %v923 = vmax.f32 %v919, 0.0
        %v924 = vmax.f32 %v920, 0.0
        %v925 = vld [vmem:[%s6] sm:$0xff]
        %v926 = vld [vmem:[%s6 + $0x8] sm:$0xff]
        %v927 = vld [vmem:[%s6 + $0x10] sm:$0xff]
        %v928 = vld [vmem:[%s6 + $0x18] sm:$0xff]
        %v929 = vld [vmem:[%s7] sm:$0xff]
        %v930 = vld [vmem:[%s7 + $0x8] sm:$0xff]
        %v931 = vld [vmem:[%s7 + $0x10] sm:$0xff]
        %v932 = vld [vmem:[%s7 + $0x18] sm:$0xff]
        %934 = vset.pattern.permute.xlu0 0
        %935 = vperm.xlu0 %934, %v929
        %v936 = vpop.permute.xlu0 %935
        %939 = vset.pattern.permute.xlu0 0
        %940 = vperm.xlu0 %939, %v930
        %v941 = vpop.permute.xlu0 %940
        %944 = vset.pattern.permute.xlu0 0
        %945 = vperm.xlu0 %944, %v931
        %v946 = vpop.permute.xlu0 %945
        %949 = vset.pattern.permute.xlu0 0
        %950 = vperm.xlu0 %949, %v932
        %v951 = vpop.permute.xlu0 %950
        %v954 = vsel %vm580, %v925, 0
        %v957 = vsel %vm580, %v926, 0
        %v960 = vsel %vm580, %v927, 0
        %v963 = vsel %vm580, %v928, 0
        %965 = vmatprep.subr.mxu0 0.0
        %966 = vmatpush1.msra.mxu0 0.0
        %967 = vmatprep.subr.mxu0 0.0
        %968 = vmatpush1.msra.mxu0 0.0
        %969 = vmatprep.subr.mxu0 0.0
        %970 = vmatpush1.msra.mxu0 0.0
        %971 = vmatprep.subr.mxu0 0.0
        %972 = vmatpush1.msra.mxu0 0.0
        %973 = vmatprep.subr.mxu0 0.0
        %974 = vmatpush1.msra.mxu0 0.0
        %975 = vmatprep.subr.mxu0 0.0
        %976 = vmatpush1.msra.mxu0 0.0
        %977 = vmatprep.subr.mxu0 0.0
        %978 = vmatpush1.msra.mxu0 0.0
        %979 = vmatprep.subr.mxu0 0.0
        %980 = vmatpush1.msra.mxu0 0.0
        %981 = vmatprep.subr.mxu0 0.0
        %982 = vmatpush1.msra.mxu0 0.0
        %983 = vmatprep.subr.mxu0 0.0
        %984 = vmatpush1.msra.mxu0 0.0
        %985 = vmatprep.subr.mxu0 0.0
        %986 = vmatpush1.msra.mxu0 0.0
        %987 = vmatprep.subr.mxu0 0.0
        %988 = vmatpush1.msra.mxu0 0.0
        %989 = vmatprep.subr.mxu0 0.0
        %990 = vmatpush1.msra.mxu0 %v924
        %991 = vmatprep.subr.mxu0 0.0
        %992 = vmatpush1.msra.mxu0 %v923
        %993 = vmatprep.subr.mxu0 0.0
        %994 = vmatpush1.msra.mxu0 %v922
        %995 = vmatprep.subr.mxu0 0.0
        %996 = vmatpush1.msra.mxu0 %v921
        %997 = vmatprep.subr.mxu0 0.0
        %998 = vmatpush2.msra.mxu0 0.0
        %999 = vmatprep.subr.mxu0 0.0
        %1000 = vmatpush2.msra.mxu0 0.0
        %1001 = vmatprep.subr.mxu0 0.0
        %1002 = vmatpush2.msra.mxu0 0.0
        %1003 = vmatprep.subr.mxu0 0.0
        %1004 = vmatpush2.msra.mxu0 0.0
        %1005 = vmatprep.subr.mxu0 0.0
        %1006 = vmatpush2.msra.mxu0 0.0
        %1007 = vmatprep.subr.mxu0 0.0
        %1008 = vmatpush2.msra.mxu0 0.0
        %1009 = vmatprep.subr.mxu0 0.0
        %1010 = vmatpush2.msra.mxu0 0.0
        %1011 = vmatprep.subr.mxu0 0.0
        %1012 = vmatpush2.msra.mxu0 0.0
        %1013 = vmatprep.subr.mxu0 0.0
        %1014 = vmatpush2.msra.mxu0 0.0
        %1015 = vmatprep.subr.mxu0 0.0
        %1016 = vmatpush2.msra.mxu0 0.0
        %1017 = vmatprep.subr.mxu0 0.0
        %1018 = vmatpush2.msra.mxu0 0.0
        %1019 = vmatprep.subr.mxu0 0.0
        %1020 = vmatpush2.msra.mxu0 0.0
        %1021 = vmatprep.subr.mxu0 0.0
        %1022 = vmatpush2.msra.mxu0 0.0
        %1023 = vmatprep.subr.mxu0 0.0
        %1024 = vmatpush2.msra.mxu0 0.0
        %1025 = vmatprep.subr.mxu0 0.0
        %1026 = vmatpush2.msra.mxu0 0.0
        %1027 = vmatprep.subr.mxu0 0.0
        %1028 = vmatpush2.msra.mxu0 0.0
        %1029 = vmatprep.mubr.f32.mxu0 0.0
        %1030 = vmatmul.mubr.f32.gmra.mxu0 %v954
        %v1031 = vpop.f32.mrf.mxu0
        %v1032 = vadd.f32 %v936, %v1031
        %v1033 = vpop.f32.mrf.mxu0
        %1034 = vmatprep.mubr.f32.mxu0 0.0
        %1035 = vmatmul.mubr.f32.gmra.mxu0 %v957
        %v1036 = vpop.f32.mrf.mxu0
        %v1037 = vadd.f32 %v941, %v1036
        %v1038 = vpop.f32.mrf.mxu0
        %1039 = vmatprep.mubr.f32.mxu0 0.0
        %1040 = vmatmul.mubr.f32.gmra.mxu0 %v960
        %v1041 = vpop.f32.mrf.mxu0
        %v1042 = vadd.f32 %v946, %v1041
        %v1043 = vpop.f32.mrf.mxu0
        %1044 = vmatprep.mubr.f32.mxu0 0.0
        %1045 = vmatmul.mubr.f32.gmra.mxu0 %v963
        %v1046 = vpop.f32.mrf.mxu0
        %v1047 = vadd.f32 %v951, %v1046
        %v1048 = vpop.f32.mrf.mxu0
        %1049 = vdwg.mxu0
        %v1050 = vld [vmem:[#allocation3] sm:$0xff]
        %v1051 = vld [vmem:[#allocation3 + $0x8] sm:$0xff]
        %v1052 = vld [vmem:[#allocation3 + $0x10] sm:$0xff]
        %v1053 = vld [vmem:[#allocation3 + $0x18] sm:$0xff]
        %v1054 = vadd.f32 %v1050, %v1032
        %v1055 = vadd.f32 %v1051, %v1037
        %v1056 = vadd.f32 %v1052, %v1042
        %v1057 = vadd.f32 %v1053, %v1047
        %1058 = vst.msk [vmem:[#allocation3] sm:$0xff] %vm521, %v1054
        %1059 = vst.msk [vmem:[#allocation3 + $0x8] sm:$0xff] %vm521, %v1055
        %1060 = vst.msk [vmem:[#allocation3 + $0x10] sm:$0xff] %vm521, %v1056
        %1061 = vst.msk [vmem:[#allocation3 + $0x18] sm:$0xff] %vm521, %v1057
        %v1062 = vld [vmem:[#allocation3] sm:$0xff]
        %v1063 = vld [vmem:[#allocation3 + $0x8] sm:$0xff]
        %v1064 = vld [vmem:[#allocation3 + $0x10] sm:$0xff]
        %v1065 = vld [vmem:[#allocation3 + $0x18] sm:$0xff]
        %1066 = vst.msk [vmem:[#allocation2 + $0x8] sm:$0xff] %vm521, %v1062
        %1067 = vst.msk [vmem:[#allocation2 + $0x18] sm:$0xff] %vm521, %v1063
        %1068 = vst.msk [vmem:[#allocation2 + $0x28] sm:$0xff] %vm521, %v1064
        %1069 = vst.msk [vmem:[#allocation2 + $0x38] sm:$0xff] %vm521, %v1065
        %v1070 = vld [vmem:[#allocation2 + $0x8] sm:$0xff]
        %v1071 = vld [vmem:[#allocation2 + $0x18] sm:$0xff]
        %v1072 = vld [vmem:[#allocation2 + $0x28] sm:$0xff]
        %v1073 = vld [vmem:[#allocation2 + $0x38] sm:$0xff]
        %v1074 = vld [vmem:[#allocation2] sm:$0xff]
        %v1075 = vld [vmem:[#allocation2 + $0x10] sm:$0xff]
        %v1076 = vld [vmem:[#allocation2 + $0x20] sm:$0xff]
        %v1077 = vld [vmem:[#allocation2 + $0x30] sm:$0xff]
        %s1078 = scalar_lea.vmem [#allocation4], 128
        %v1079 = vld [vmem:[%s1078] sm:$0xff]
        %v1080 = vld [vmem:[%s1078 + $0x8] sm:$0xff]
        %v1081 = vld [vmem:[%s1078 + $0x10] sm:$0xff]
        %v1082 = vld [vmem:[%s1078 + $0x18] sm:$0xff]
        %s1083 = scalar_lea.vmem [#allocation4], 96
        %v1084 = vld [vmem:[%s1083] sm:$0xff]
        %v1085 = vld [vmem:[%s1083 + $0x8] sm:$0xff]
        %v1086 = vld [vmem:[%s1083 + $0x10] sm:$0xff]
        %v1087 = vld [vmem:[%s1083 + $0x18] sm:$0xff]
        %1096 = vrot.lane.b32.xlu0 %v1074, 2
        %v1097 = vpop.permute.xlu0 %1096
        %1098 = vrot.lane.b32.xlu0 %v1070, 2
        %v1099 = vpop.permute.xlu0 %1098
        %1100 = vrot.lane.b32.xlu0 %v1075, 2
        %v1101 = vpop.permute.xlu0 %1100
        %1102 = vrot.lane.b32.xlu0 %v1071, 2
        %v1103 = vpop.permute.xlu0 %1102
        %1104 = vrot.lane.b32.xlu0 %v1076, 2
        %v1105 = vpop.permute.xlu0 %1104
        %1106 = vrot.lane.b32.xlu0 %v1072, 2
        %v1107 = vpop.permute.xlu0 %1106
        %1108 = vrot.lane.b32.xlu0 %v1077, 2
        %v1109 = vpop.permute.xlu0 %1108
        %1110 = vrot.lane.b32.xlu0 %v1073, 2
        %v1111 = vpop.permute.xlu0 %1110
        %vm1112 = vcmask 15360
        %v1113 = vsel %vm1112, %v1097, %v1099
        %v1114 = vsel %vm1112, %v1101, %v1103
        %v1115 = vsel %vm1112, %v1105, %v1107
        %v1116 = vsel %vm1112, %v1109, %v1111
        %v1122 = vsel %vm580, %v1084, 0
        %v1125 = vsel %vm580, %v1085, 0
        %v1128 = vsel %vm580, %v1086, 0
        %v1131 = vsel %vm580, %v1087, 0
        %1133 = vmatprep.subr.mxu0 0.0
        %1134 = vmatpush1.msra.mxu0 0.0
        %1135 = vmatprep.subr.mxu0 0.0
        %1136 = vmatpush1.msra.mxu0 0.0
        %1137 = vmatprep.subr.mxu0 0.0
        %1138 = vmatpush1.msra.mxu0 0.0
        %1139 = vmatprep.subr.mxu0 0.0
        %1140 = vmatpush1.msra.mxu0 0.0
        %1141 = vmatprep.subr.mxu0 0.0
        %1142 = vmatpush1.msra.mxu0 0.0
        %1143 = vmatprep.subr.mxu0 0.0
        %1144 = vmatpush1.msra.mxu0 0.0
        %1145 = vmatprep.subr.mxu0 0.0
        %1146 = vmatpush1.msra.mxu0 0.0
        %1147 = vmatprep.subr.mxu0 0.0
        %1148 = vmatpush1.msra.mxu0 0.0
        %1149 = vmatprep.subr.mxu0 0.0
        %1150 = vmatpush1.msra.mxu0 0.0
        %1151 = vmatprep.subr.mxu0 0.0
        %1152 = vmatpush1.msra.mxu0 0.0
        %1153 = vmatprep.subr.mxu0 0.0
        %1154 = vmatpush1.msra.mxu0 0.0
        %1155 = vmatprep.subr.mxu0 0.0
        %1156 = vmatpush1.msra.mxu0 0.0
        %1157 = vmatprep.subr.mxu0 0.0
        %1158 = vmatpush1.msra.mxu0 %v1116
        %1159 = vmatprep.subr.mxu0 0.0
        %1160 = vmatpush1.msra.mxu0 %v1115
        %1161 = vmatprep.subr.mxu0 0.0
        %1162 = vmatpush1.msra.mxu0 %v1114
        %1163 = vmatprep.subr.mxu0 0.0
        %1164 = vmatpush1.msra.mxu0 %v1113
        %1165 = vmatprep.subr.mxu0 0.0
        %1166 = vmatpush2.msra.mxu0 0.0
        %1167 = vmatprep.subr.mxu0 0.0
        %1168 = vmatpush2.msra.mxu0 0.0
        %1169 = vmatprep.subr.mxu0 0.0
        %1170 = vmatpush2.msra.mxu0 0.0
        %1171 = vmatprep.subr.mxu0 0.0
        %1172 = vmatpush2.msra.mxu0 0.0
        %1173 = vmatprep.subr.mxu0 0.0
        %1174 = vmatpush2.msra.mxu0 0.0
        %1175 = vmatprep.subr.mxu0 0.0
        %1176 = vmatpush2.msra.mxu0 0.0
        %1177 = vmatprep.subr.mxu0 0.0
        %1178 = vmatpush2.msra.mxu0 0.0
        %1179 = vmatprep.subr.mxu0 0.0
        %1180 = vmatpush2.msra.mxu0 0.0
        %1181 = vmatprep.subr.mxu0 0.0
        %1182 = vmatpush2.msra.mxu0 0.0
        %1183 = vmatprep.subr.mxu0 0.0
        %1184 = vmatpush2.msra.mxu0 0.0
        %1185 = vmatprep.subr.mxu0 0.0
        %1186 = vmatpush2.msra.mxu0 0.0
        %1187 = vmatprep.subr.mxu0 0.0
        %1188 = vmatpush2.msra.mxu0 0.0
        %1189 = vmatprep.subr.mxu0 0.0
        %1190 = vmatpush2.msra.mxu0 0.0
        %1191 = vmatprep.subr.mxu0 0.0
        %1192 = vmatpush2.msra.mxu0 0.0
        %1193 = vmatprep.subr.mxu0 0.0
        %1194 = vmatpush2.msra.mxu0 0.0
        %1195 = vmatprep.subr.mxu0 0.0
        %1196 = vmatpush2.msra.mxu0 0.0
        %1197 = vmatprep.mubr.f32.mxu0 0.0
        %1198 = vmatmul.mubr.f32.gmra.mxu0 %v1122
        %v1199 = vpop.f32.mrf.mxu0
        %v1200 = vadd.f32 0.0, %v1199
        %v1201 = vpop.f32.mrf.mxu0
        %1202 = vmatprep.mubr.f32.mxu0 0.0
        %1203 = vmatmul.mubr.f32.gmra.mxu0 %v1125
        %v1204 = vpop.f32.mrf.mxu0
        %v1205 = vadd.f32 0.0, %v1204
        %v1206 = vpop.f32.mrf.mxu0
        %1207 = vmatprep.mubr.f32.mxu0 0.0
        %1208 = vmatmul.mubr.f32.gmra.mxu0 %v1128
        %v1209 = vpop.f32.mrf.mxu0
        %v1210 = vadd.f32 0.0, %v1209
        %v1211 = vpop.f32.mrf.mxu0
        %1212 = vmatprep.mubr.f32.mxu0 0.0
        %1213 = vmatmul.mubr.f32.gmra.mxu0 %v1131
        %v1214 = vpop.f32.mrf.mxu0
        %v1215 = vadd.f32 0.0, %v1214
        %v1216 = vpop.f32.mrf.mxu0
        %1217 = vdwg.mxu0
        %v1219 = vsel %vm580, %v1079, 0
        %v1222 = vsel %vm580, %v1080, 0
        %v1225 = vsel %vm580, %v1081, 0
        %v1228 = vsel %vm580, %v1082, 0
        %1230 = vmatprep.subr.mxu0 0.0
        %1231 = vmatpush1.msra.mxu0 0.0
        %1232 = vmatprep.subr.mxu0 0.0
        %1233 = vmatpush1.msra.mxu0 0.0
        %1234 = vmatprep.subr.mxu0 0.0
        %1235 = vmatpush1.msra.mxu0 0.0
        %1236 = vmatprep.subr.mxu0 0.0
        %1237 = vmatpush1.msra.mxu0 0.0
        %1238 = vmatprep.subr.mxu0 0.0
        %1239 = vmatpush1.msra.mxu0 0.0
        %1240 = vmatprep.subr.mxu0 0.0
        %1241 = vmatpush1.msra.mxu0 0.0
        %1242 = vmatprep.subr.mxu0 0.0
        %1243 = vmatpush1.msra.mxu0 0.0
        %1244 = vmatprep.subr.mxu0 0.0
        %1245 = vmatpush1.msra.mxu0 0.0
        %1246 = vmatprep.subr.mxu0 0.0
        %1247 = vmatpush1.msra.mxu0 0.0
        %1248 = vmatprep.subr.mxu0 0.0
        %1249 = vmatpush1.msra.mxu0 0.0
        %1250 = vmatprep.subr.mxu0 0.0
        %1251 = vmatpush1.msra.mxu0 0.0
        %1252 = vmatprep.subr.mxu0 0.0
        %1253 = vmatpush1.msra.mxu0 0.0
        %1254 = vmatprep.subr.mxu0 0.0
        %1255 = vmatpush1.msra.mxu0 %v1073
        %1256 = vmatprep.subr.mxu0 0.0
        %1257 = vmatpush1.msra.mxu0 %v1072
        %1258 = vmatprep.subr.mxu0 0.0
        %1259 = vmatpush1.msra.mxu0 %v1071
        %1260 = vmatprep.subr.mxu0 0.0
        %1261 = vmatpush1.msra.mxu0 %v1070
        %1262 = vmatprep.subr.mxu0 0.0
        %1263 = vmatpush2.msra.mxu0 0.0
        %1264 = vmatprep.subr.mxu0 0.0
        %1265 = vmatpush2.msra.mxu0 0.0
        %1266 = vmatprep.subr.mxu0 0.0
        %1267 = vmatpush2.msra.mxu0 0.0
        %1268 = vmatprep.subr.mxu0 0.0
        %1269 = vmatpush2.msra.mxu0 0.0
        %1270 = vmatprep.subr.mxu0 0.0
        %1271 = vmatpush2.msra.mxu0 0.0
        %1272 = vmatprep.subr.mxu0 0.0
        %1273 = vmatpush2.msra.mxu0 0.0
        %1274 = vmatprep.subr.mxu0 0.0
        %1275 = vmatpush2.msra.mxu0 0.0
        %1276 = vmatprep.subr.mxu0 0.0
        %1277 = vmatpush2.msra.mxu0 0.0
        %1278 = vmatprep.subr.mxu0 0.0
        %1279 = vmatpush2.msra.mxu0 0.0
        %1280 = vmatprep.subr.mxu0 0.0
        %1281 = vmatpush2.msra.mxu0 0.0
        %1282 = vmatprep.subr.mxu0 0.0
        %1283 = vmatpush2.msra.mxu0 0.0
        %1284 = vmatprep.subr.mxu0 0.0
        %1285 = vmatpush2.msra.mxu0 0.0
        %1286 = vmatprep.subr.mxu0 0.0
        %1287 = vmatpush2.msra.mxu0 0.0
        %1288 = vmatprep.subr.mxu0 0.0
        %1289 = vmatpush2.msra.mxu0 0.0
        %1290 = vmatprep.subr.mxu0 0.0
        %1291 = vmatpush2.msra.mxu0 0.0
        %1292 = vmatprep.subr.mxu0 0.0
        %1293 = vmatpush2.msra.mxu0 0.0
        %1294 = vmatprep.mubr.f32.mxu0 0.0
        %1295 = vmatmul.mubr.f32.gmra.mxu0 %v1219
        %v1296 = vpop.f32.mrf.mxu0
        %v1297 = vadd.f32 %v1200, %v1296
        %v1298 = vpop.f32.mrf.mxu0
        %1299 = vmatprep.mubr.f32.mxu0 0.0
        %1300 = vmatmul.mubr.f32.gmra.mxu0 %v1222
        %v1301 = vpop.f32.mrf.mxu0
        %v1302 = vadd.f32 %v1205, %v1301
        %v1303 = vpop.f32.mrf.mxu0
        %1304 = vmatprep.mubr.f32.mxu0 0.0
        %1305 = vmatmul.mubr.f32.gmra.mxu0 %v1225
        %v1306 = vpop.f32.mrf.mxu0
        %v1307 = vadd.f32 %v1210, %v1306
        %v1308 = vpop.f32.mrf.mxu0
        %1309 = vmatprep.mubr.f32.mxu0 0.0
        %1310 = vmatmul.mubr.f32.gmra.mxu0 %v1228
        %v1311 = vpop.f32.mrf.mxu0
        %v1312 = vadd.f32 %v1215, %v1311
        %v1313 = vpop.f32.mrf.mxu0
        %1314 = vdwg.mxu0
        %s1315 = scalar_lea.vmem [#allocation4], 160
        %v1316 = vld [vmem:[%s1315] sm:$0xff]
        %v1317 = vld [vmem:[%s1315 + $0x8] sm:$0xff]
        %v1318 = vld [vmem:[%s1315 + $0x10] sm:$0xff]
        %v1319 = vld [vmem:[%s1315 + $0x18] sm:$0xff]
        %1320 = vrot.lane.b32.xlu0 %v1070, 126
        %v1321 = vpop.permute.xlu0 %1320
        %1322 = vrot.lane.b32.xlu0 %v1071, 126
        %v1323 = vpop.permute.xlu0 %1322
        %1324 = vrot.lane.b32.xlu0 %v1072, 126
        %v1325 = vpop.permute.xlu0 %1324
        %1326 = vrot.lane.b32.xlu0 %v1073, 126
        %v1327 = vpop.permute.xlu0 %1326
        %v1333 = vsel %vm580, %v1316, 0
        %v1336 = vsel %vm580, %v1317, 0
        %v1339 = vsel %vm580, %v1318, 0
        %v1342 = vsel %vm580, %v1319, 0
        %1344 = vmatprep.subr.mxu0 0.0
        %1345 = vmatpush1.msra.mxu0 0.0
        %1346 = vmatprep.subr.mxu0 0.0
        %1347 = vmatpush1.msra.mxu0 0.0
        %1348 = vmatprep.subr.mxu0 0.0
        %1349 = vmatpush1.msra.mxu0 0.0
        %1350 = vmatprep.subr.mxu0 0.0
        %1351 = vmatpush1.msra.mxu0 0.0
        %1352 = vmatprep.subr.mxu0 0.0
        %1353 = vmatpush1.msra.mxu0 0.0
        %1354 = vmatprep.subr.mxu0 0.0
        %1355 = vmatpush1.msra.mxu0 0.0
        %1356 = vmatprep.subr.mxu0 0.0
        %1357 = vmatpush1.msra.mxu0 0.0
        %1358 = vmatprep.subr.mxu0 0.0
        %1359 = vmatpush1.msra.mxu0 0.0
        %1360 = vmatprep.subr.mxu0 0.0
        %1361 = vmatpush1.msra.mxu0 0.0
        %1362 = vmatprep.subr.mxu0 0.0
        %1363 = vmatpush1.msra.mxu0 0.0
        %1364 = vmatprep.subr.mxu0 0.0
        %1365 = vmatpush1.msra.mxu0 0.0
        %1366 = vmatprep.subr.mxu0 0.0
        %1367 = vmatpush1.msra.mxu0 0.0
        %1368 = vmatprep.subr.mxu0 0.0
        %1369 = vmatpush1.msra.mxu0 %v1327
        %1370 = vmatprep.subr.mxu0 0.0
        %1371 = vmatpush1.msra.mxu0 %v1325
        %1372 = vmatprep.subr.mxu0 0.0
        %1373 = vmatpush1.msra.mxu0 %v1323
        %1374 = vmatprep.subr.mxu0 0.0
        %1375 = vmatpush1.msra.mxu0 %v1321
        %1376 = vmatprep.subr.mxu0 0.0
        %1377 = vmatpush2.msra.mxu0 0.0
        %1378 = vmatprep.subr.mxu0 0.0
        %1379 = vmatpush2.msra.mxu0 0.0
        %1380 = vmatprep.subr.mxu0 0.0
        %1381 = vmatpush2.msra.mxu0 0.0
        %1382 = vmatprep.subr.mxu0 0.0
        %1383 = vmatpush2.msra.mxu0 0.0
        %1384 = vmatprep.subr.mxu0 0.0
        %1385 = vmatpush2.msra.mxu0 0.0
        %1386 = vmatprep.subr.mxu0 0.0
        %1387 = vmatpush2.msra.mxu0 0.0
        %1388 = vmatprep.subr.mxu0 0.0
        %1389 = vmatpush2.msra.mxu0 0.0
        %1390 = vmatprep.subr.mxu0 0.0
        %1391 = vmatpush2.msra.mxu0 0.0
        %1392 = vmatprep.subr.mxu0 0.0
        %1393 = vmatpush2.msra.mxu0 0.0
        %1394 = vmatprep.subr.mxu0 0.0
        %1395 = vmatpush2.msra.mxu0 0.0
        %1396 = vmatprep.subr.mxu0 0.0
        %1397 = vmatpush2.msra.mxu0 0.0
        %1398 = vmatprep.subr.mxu0 0.0
        %1399 = vmatpush2.msra.mxu0 0.0
        %1400 = vmatprep.subr.mxu0 0.0
        %1401 = vmatpush2.msra.mxu0 0.0
        %1402 = vmatprep.subr.mxu0 0.0
        %1403 = vmatpush2.msra.mxu0 0.0
        %1404 = vmatprep.subr.mxu0 0.0
        %1405 = vmatpush2.msra.mxu0 0.0
        %1406 = vmatprep.subr.mxu0 0.0
        %1407 = vmatpush2.msra.mxu0 0.0
        %1408 = vmatprep.mubr.f32.mxu0 0.0
        %1409 = vmatmul.mubr.f32.gmra.mxu0 %v1333
        %v1410 = vpop.f32.mrf.mxu0
        %v1411 = vadd.f32 0.0, %v1410
        %v1412 = vpop.f32.mrf.mxu0
        %1413 = vmatprep.mubr.f32.mxu0 0.0
        %1414 = vmatmul.mubr.f32.gmra.mxu0 %v1336
        %v1415 = vpop.f32.mrf.mxu0
        %v1416 = vadd.f32 0.0, %v1415
        %v1417 = vpop.f32.mrf.mxu0
        %1418 = vmatprep.mubr.f32.mxu0 0.0
        %1419 = vmatmul.mubr.f32.gmra.mxu0 %v1339
        %v1420 = vpop.f32.mrf.mxu0
        %v1421 = vadd.f32 0.0, %v1420
        %v1422 = vpop.f32.mrf.mxu0
        %1423 = vmatprep.mubr.f32.mxu0 0.0
        %1424 = vmatmul.mubr.f32.gmra.mxu0 %v1342
        %v1425 = vpop.f32.mrf.mxu0
        %v1426 = vadd.f32 0.0, %v1425
        %v1427 = vpop.f32.mrf.mxu0
        %1428 = vdwg.mxu0
        %v1429 = vadd.f32 %v1297, %v1411
        %v1430 = vadd.f32 %v1302, %v1416
        %v1431 = vadd.f32 %v1307, %v1421
        %v1432 = vadd.f32 %v1312, %v1426
        %s1433 = scalar_lea.vmem %s5, 32
        %v1434 = vld [vmem:[%s1433] sm:$0xff]
        %v1435 = vld [vmem:[%s1433 + $0x8] sm:$0xff]
        %v1436 = vld [vmem:[%s1433 + $0x10] sm:$0xff]
        %v1437 = vld [vmem:[%s1433 + $0x18] sm:$0xff]
        %1439 = vset.pattern.permute.xlu0 0
        %1440 = vperm.xlu0 %1439, %v1434
        %v1441 = vpop.permute.xlu0 %1440
        %1444 = vset.pattern.permute.xlu0 0
        %1445 = vperm.xlu0 %1444, %v1435
        %v1446 = vpop.permute.xlu0 %1445
        %1449 = vset.pattern.permute.xlu0 0
        %1450 = vperm.xlu0 %1449, %v1436
        %v1451 = vpop.permute.xlu0 %1450
        %1454 = vset.pattern.permute.xlu0 0
        %1455 = vperm.xlu0 %1454, %v1437
        %v1456 = vpop.permute.xlu0 %1455
        %v1458 = vadd.f32 %v1429, %v1441
        %v1459 = vadd.f32 %v1430, %v1446
        %v1460 = vadd.f32 %v1431, %v1451
        %v1461 = vadd.f32 %v1432, %v1456
        %v1462 = vmax.f32 %v1458, 0.0
        %v1463 = vmax.f32 %v1459, 0.0
        %v1464 = vmax.f32 %v1460, 0.0
        %v1465 = vmax.f32 %v1461, 0.0
        %s1466 = scalar_lea.vmem %s6, 32
        %v1467 = vld [vmem:[%s1466] sm:$0xff]
        %v1468 = vld [vmem:[%s1466 + $0x8] sm:$0xff]
        %v1469 = vld [vmem:[%s1466 + $0x10] sm:$0xff]
        %v1470 = vld [vmem:[%s1466 + $0x18] sm:$0xff]
        %s1471 = scalar_lea.vmem %s7, 32
        %v1472 = vld [vmem:[%s1471] sm:$0xff]
        %v1473 = vld [vmem:[%s1471 + $0x8] sm:$0xff]
        %v1474 = vld [vmem:[%s1471 + $0x10] sm:$0xff]
        %v1475 = vld [vmem:[%s1471 + $0x18] sm:$0xff]
        %1477 = vset.pattern.permute.xlu0 0
        %1478 = vperm.xlu0 %1477, %v1472
        %v1479 = vpop.permute.xlu0 %1478
        %1482 = vset.pattern.permute.xlu0 0
        %1483 = vperm.xlu0 %1482, %v1473
        %v1484 = vpop.permute.xlu0 %1483
        %1487 = vset.pattern.permute.xlu0 0
        %1488 = vperm.xlu0 %1487, %v1474
        %v1489 = vpop.permute.xlu0 %1488
        %1492 = vset.pattern.permute.xlu0 0
        %1493 = vperm.xlu0 %1492, %v1475
        %v1494 = vpop.permute.xlu0 %1493
        %v1497 = vsel %vm580, %v1467, 0
        %v1500 = vsel %vm580, %v1468, 0
        %v1503 = vsel %vm580, %v1469, 0
        %v1506 = vsel %vm580, %v1470, 0
        %1508 = vmatprep.subr.mxu0 0.0
        %1509 = vmatpush1.msra.mxu0 0.0
        %1510 = vmatprep.subr.mxu0 0.0
        %1511 = vmatpush1.msra.mxu0 0.0
        %1512 = vmatprep.subr.mxu0 0.0
        %1513 = vmatpush1.msra.mxu0 0.0
        %1514 = vmatprep.subr.mxu0 0.0
        %1515 = vmatpush1.msra.mxu0 0.0
        %1516 = vmatprep.subr.mxu0 0.0
        %1517 = vmatpush1.msra.mxu0 0.0
        %1518 = vmatprep.subr.mxu0 0.0
        %1519 = vmatpush1.msra.mxu0 0.0
        %1520 = vmatprep.subr.mxu0 0.0
        %1521 = vmatpush1.msra.mxu0 0.0
        %1522 = vmatprep.subr.mxu0 0.0
        %1523 = vmatpush1.msra.mxu0 0.0
        %1524 = vmatprep.subr.mxu0 0.0
        %1525 = vmatpush1.msra.mxu0 0.0
        %1526 = vmatprep.subr.mxu0 0.0
        %1527 = vmatpush1.msra.mxu0 0.0
        %1528 = vmatprep.subr.mxu0 0.0
        %1529 = vmatpush1.msra.mxu0 0.0
        %1530 = vmatprep.subr.mxu0 0.0
        %1531 = vmatpush1.msra.mxu0 0.0
        %1532 = vmatprep.subr.mxu0 0.0
        %1533 = vmatpush1.msra.mxu0 %v1465
        %1534 = vmatprep.subr.mxu0 0.0
        %1535 = vmatpush1.msra.mxu0 %v1464
        %1536 = vmatprep.subr.mxu0 0.0
        %1537 = vmatpush1.msra.mxu0 %v1463
        %1538 = vmatprep.subr.mxu0 0.0
        %1539 = vmatpush1.msra.mxu0 %v1462
        %1540 = vmatprep.subr.mxu0 0.0
        %1541 = vmatpush2.msra.mxu0 0.0
        %1542 = vmatprep.subr.mxu0 0.0
        %1543 = vmatpush2.msra.mxu0 0.0
        %1544 = vmatprep.subr.mxu0 0.0
        %1545 = vmatpush2.msra.mxu0 0.0
        %1546 = vmatprep.subr.mxu0 0.0
        %1547 = vmatpush2.msra.mxu0 0.0
        %1548 = vmatprep.subr.mxu0 0.0
        %1549 = vmatpush2.msra.mxu0 0.0
        %1550 = vmatprep.subr.mxu0 0.0
        %1551 = vmatpush2.msra.mxu0 0.0
        %1552 = vmatprep.subr.mxu0 0.0
        %1553 = vmatpush2.msra.mxu0 0.0
        %1554 = vmatprep.subr.mxu0 0.0
        %1555 = vmatpush2.msra.mxu0 0.0
        %1556 = vmatprep.subr.mxu0 0.0
        %1557 = vmatpush2.msra.mxu0 0.0
        %1558 = vmatprep.subr.mxu0 0.0
        %1559 = vmatpush2.msra.mxu0 0.0
        %1560 = vmatprep.subr.mxu0 0.0
        %1561 = vmatpush2.msra.mxu0 0.0
        %1562 = vmatprep.subr.mxu0 0.0
        %1563 = vmatpush2.msra.mxu0 0.0
        %1564 = vmatprep.subr.mxu0 0.0
        %1565 = vmatpush2.msra.mxu0 0.0
        %1566 = vmatprep.subr.mxu0 0.0
        %1567 = vmatpush2.msra.mxu0 0.0
        %1568 = vmatprep.subr.mxu0 0.0
        %1569 = vmatpush2.msra.mxu0 0.0
        %1570 = vmatprep.subr.mxu0 0.0
        %1571 = vmatpush2.msra.mxu0 0.0
        %1572 = vmatprep.mubr.f32.mxu0 0.0
        %1573 = vmatmul.mubr.f32.gmra.mxu0 %v1497
        %v1574 = vpop.f32.mrf.mxu0
        %v1575 = vadd.f32 %v1479, %v1574
        %v1576 = vpop.f32.mrf.mxu0
        %1577 = vmatprep.mubr.f32.mxu0 0.0
        %1578 = vmatmul.mubr.f32.gmra.mxu0 %v1500
        %v1579 = vpop.f32.mrf.mxu0
        %v1580 = vadd.f32 %v1484, %v1579
        %v1581 = vpop.f32.mrf.mxu0
        %1582 = vmatprep.mubr.f32.mxu0 0.0
        %1583 = vmatmul.mubr.f32.gmra.mxu0 %v1503
        %v1584 = vpop.f32.mrf.mxu0
        %v1585 = vadd.f32 %v1489, %v1584
        %v1586 = vpop.f32.mrf.mxu0
        %1587 = vmatprep.mubr.f32.mxu0 0.0
        %1588 = vmatmul.mubr.f32.gmra.mxu0 %v1506
        %v1589 = vpop.f32.mrf.mxu0
        %v1590 = vadd.f32 %v1494, %v1589
        %v1591 = vpop.f32.mrf.mxu0
        %1592 = vdwg.mxu0
        %v1593 = vld [vmem:[#allocation3] sm:$0xff]
        %v1594 = vld [vmem:[#allocation3 + $0x8] sm:$0xff]
        %v1595 = vld [vmem:[#allocation3 + $0x10] sm:$0xff]
        %v1596 = vld [vmem:[#allocation3 + $0x18] sm:$0xff]
        %v1597 = vadd.f32 %v1593, %v1575
        %v1598 = vadd.f32 %v1594, %v1580
        %v1599 = vadd.f32 %v1595, %v1585
        %v1600 = vadd.f32 %v1596, %v1590
        %1601 = vst.msk [vmem:[#allocation3] sm:$0xff] %vm521, %v1597
        %1602 = vst.msk [vmem:[#allocation3 + $0x8] sm:$0xff] %vm521, %v1598
        %1603 = vst.msk [vmem:[#allocation3 + $0x10] sm:$0xff] %vm521, %v1599
        %1604 = vst.msk [vmem:[#allocation3 + $0x18] sm:$0xff] %vm521, %v1600
        %v1605 = vld [vmem:[#allocation3] sm:$0xff]
        %v1606 = vld [vmem:[#allocation3 + $0x8] sm:$0xff]
        %v1607 = vld [vmem:[#allocation3 + $0x10] sm:$0xff]
        %v1608 = vld [vmem:[#allocation3 + $0x18] sm:$0xff]
        %1609 = vst.msk [vmem:[#allocation2 + $0x8] sm:$0xff] %vm521, %v1605
        %1610 = vst.msk [vmem:[#allocation2 + $0x18] sm:$0xff] %vm521, %v1606
        %1611 = vst.msk [vmem:[#allocation2 + $0x28] sm:$0xff] %vm521, %v1607
        %1612 = vst.msk [vmem:[#allocation2 + $0x38] sm:$0xff] %vm521, %v1608
        %v1613 = vld [vmem:[#allocation2 + $0x8] sm:$0xff]
        %v1614 = vld [vmem:[#allocation2 + $0x18] sm:$0xff]
        %v1615 = vld [vmem:[#allocation2 + $0x28] sm:$0xff]
        %v1616 = vld [vmem:[#allocation2 + $0x38] sm:$0xff]
        %v1617 = vld [vmem:[#allocation2] sm:$0xff]
        %v1618 = vld [vmem:[#allocation2 + $0x10] sm:$0xff]
        %v1619 = vld [vmem:[#allocation2 + $0x20] sm:$0xff]
        %v1620 = vld [vmem:[#allocation2 + $0x30] sm:$0xff]
        %s1621 = scalar_lea.vmem [#allocation4], 224
        %v1622 = vld [vmem:[%s1621] sm:$0xff]
        %v1623 = vld [vmem:[%s1621 + $0x8] sm:$0xff]
        %v1624 = vld [vmem:[%s1621 + $0x10] sm:$0xff]
        %v1625 = vld [vmem:[%s1621 + $0x18] sm:$0xff]
        %s1626 = scalar_lea.vmem [#allocation4], 192
        %v1627 = vld [vmem:[%s1626] sm:$0xff]
        %v1628 = vld [vmem:[%s1626 + $0x8] sm:$0xff]
        %v1629 = vld [vmem:[%s1626 + $0x10] sm:$0xff]
        %v1630 = vld [vmem:[%s1626 + $0x18] sm:$0xff]
        %1639 = vrot.lane.b32.xlu0 %v1617, 4
        %v1640 = vpop.permute.xlu0 %1639
        %1641 = vrot.lane.b32.xlu0 %v1613, 4
        %v1642 = vpop.permute.xlu0 %1641
        %1643 = vrot.lane.b32.xlu0 %v1618, 4
        %v1644 = vpop.permute.xlu0 %1643
        %1645 = vrot.lane.b32.xlu0 %v1614, 4
        %v1646 = vpop.permute.xlu0 %1645
        %1647 = vrot.lane.b32.xlu0 %v1619, 4
        %v1648 = vpop.permute.xlu0 %1647
        %1649 = vrot.lane.b32.xlu0 %v1615, 4
        %v1650 = vpop.permute.xlu0 %1649
        %1651 = vrot.lane.b32.xlu0 %v1620, 4
        %v1652 = vpop.permute.xlu0 %1651
        %1653 = vrot.lane.b32.xlu0 %v1616, 4
        %v1654 = vpop.permute.xlu0 %1653
        %vm1655 = vcmask 31744
        %v1656 = vsel %vm1655, %v1640, %v1642
        %v1657 = vsel %vm1655, %v1644, %v1646
        %v1658 = vsel %vm1655, %v1648, %v1650
        %v1659 = vsel %vm1655, %v1652, %v1654
        %v1665 = vsel %vm580, %v1627, 0
        %v1668 = vsel %vm580, %v1628, 0
        %v1671 = vsel %vm580, %v1629, 0
        %v1674 = vsel %vm580, %v1630, 0
        %1676 = vmatprep.subr.mxu0 0.0
        %1677 = vmatpush1.msra.mxu0 0.0
        %1678 = vmatprep.subr.mxu0 0.0
        %1679 = vmatpush1.msra.mxu0 0.0
        %1680 = vmatprep.subr.mxu0 0.0
        %1681 = vmatpush1.msra.mxu0 0.0
        %1682 = vmatprep.subr.mxu0 0.0
        %1683 = vmatpush1.msra.mxu0 0.0
        %1684 = vmatprep.subr.mxu0 0.0
        %1685 = vmatpush1.msra.mxu0 0.0
        %1686 = vmatprep.subr.mxu0 0.0
        %1687 = vmatpush1.msra.mxu0 0.0
        %1688 = vmatprep.subr.mxu0 0.0
        %1689 = vmatpush1.msra.mxu0 0.0
        %1690 = vmatprep.subr.mxu0 0.0
        %1691 = vmatpush1.msra.mxu0 0.0
        %1692 = vmatprep.subr.mxu0 0.0
        %1693 = vmatpush1.msra.mxu0 0.0
        %1694 = vmatprep.subr.mxu0 0.0
        %1695 = vmatpush1.msra.mxu0 0.0
        %1696 = vmatprep.subr.mxu0 0.0
        %1697 = vmatpush1.msra.mxu0 0.0
        %1698 = vmatprep.subr.mxu0 0.0
        %1699 = vmatpush1.msra.mxu0 0.0
        %1700 = vmatprep.subr.mxu0 0.0
        %1701 = vmatpush1.msra.mxu0 %v1659
        %1702 = vmatprep.subr.mxu0 0.0
        %1703 = vmatpush1.msra.mxu0 %v1658
        %1704 = vmatprep.subr.mxu0 0.0
        %1705 = vmatpush1.msra.mxu0 %v1657
        %1706 = vmatprep.subr.mxu0 0.0
        %1707 = vmatpush1.msra.mxu0 %v1656
        %1708 = vmatprep.subr.mxu0 0.0
        %1709 = vmatpush2.msra.mxu0 0.0
        %1710 = vmatprep.subr.mxu0 0.0
        %1711 = vmatpush2.msra.mxu0 0.0
        %1712 = vmatprep.subr.mxu0 0.0
        %1713 = vmatpush2.msra.mxu0 0.0
        %1714 = vmatprep.subr.mxu0 0.0
        %1715 = vmatpush2.msra.mxu0 0.0
        %1716 = vmatprep.subr.mxu0 0.0
        %1717 = vmatpush2.msra.mxu0 0.0
        %1718 = vmatprep.subr.mxu0 0.0
        %1719 = vmatpush2.msra.mxu0 0.0
        %1720 = vmatprep.subr.mxu0 0.0
        %1721 = vmatpush2.msra.mxu0 0.0
        %1722 = vmatprep.subr.mxu0 0.0
        %1723 = vmatpush2.msra.mxu0 0.0
        %1724 = vmatprep.subr.mxu0 0.0
        %1725 = vmatpush2.msra.mxu0 0.0
        %1726 = vmatprep.subr.mxu0 0.0
        %1727 = vmatpush2.msra.mxu0 0.0
        %1728 = vmatprep.subr.mxu0 0.0
        %1729 = vmatpush2.msra.mxu0 0.0
        %1730 = vmatprep.subr.mxu0 0.0
        %1731 = vmatpush2.msra.mxu0 0.0
        %1732 = vmatprep.subr.mxu0 0.0
        %1733 = vmatpush2.msra.mxu0 0.0
        %1734 = vmatprep.subr.mxu0 0.0
        %1735 = vmatpush2.msra.mxu0 0.0
        %1736 = vmatprep.subr.mxu0 0.0
        %1737 = vmatpush2.msra.mxu0 0.0
        %1738 = vmatprep.subr.mxu0 0.0
        %1739 = vmatpush2.msra.mxu0 0.0
        %1740 = vmatprep.mubr.f32.mxu0 0.0
        %1741 = vmatmul.mubr.f32.gmra.mxu0 %v1665
        %v1742 = vpop.f32.mrf.mxu0
        %v1743 = vadd.f32 0.0, %v1742
        %v1744 = vpop.f32.mrf.mxu0
        %1745 = vmatprep.mubr.f32.mxu0 0.0
        %1746 = vmatmul.mubr.f32.gmra.mxu0 %v1668
        %v1747 = vpop.f32.mrf.mxu0
        %v1748 = vadd.f32 0.0, %v1747
        %v1749 = vpop.f32.mrf.mxu0
        %1750 = vmatprep.mubr.f32.mxu0 0.0
        %1751 = vmatmul.mubr.f32.gmra.mxu0 %v1671
        %v1752 = vpop.f32.mrf.mxu0
        %v1753 = vadd.f32 0.0, %v1752
        %v1754 = vpop.f32.mrf.mxu0
        %1755 = vmatprep.mubr.f32.mxu0 0.0
        %1756 = vmatmul.mubr.f32.gmra.mxu0 %v1674
        %v1757 = vpop.f32.mrf.mxu0
        %v1758 = vadd.f32 0.0, %v1757
        %v1759 = vpop.f32.mrf.mxu0
        %1760 = vdwg.mxu0
        %v1762 = vsel %vm580, %v1622, 0
        %v1765 = vsel %vm580, %v1623, 0
        %v1768 = vsel %vm580, %v1624, 0
        %v1771 = vsel %vm580, %v1625, 0
        %1773 = vmatprep.subr.mxu0 0.0
        %1774 = vmatpush1.msra.mxu0 0.0
        %1775 = vmatprep.subr.mxu0 0.0
        %1776 = vmatpush1.msra.mxu0 0.0
        %1777 = vmatprep.subr.mxu0 0.0
        %1778 = vmatpush1.msra.mxu0 0.0
        %1779 = vmatprep.subr.mxu0 0.0
        %1780 = vmatpush1.msra.mxu0 0.0
        %1781 = vmatprep.subr.mxu0 0.0
        %1782 = vmatpush1.msra.mxu0 0.0
        %1783 = vmatprep.subr.mxu0 0.0
        %1784 = vmatpush1.msra.mxu0 0.0
        %1785 = vmatprep.subr.mxu0 0.0
        %1786 = vmatpush1.msra.mxu0 0.0
        %1787 = vmatprep.subr.mxu0 0.0
        %1788 = vmatpush1.msra.mxu0 0.0
        %1789 = vmatprep.subr.mxu0 0.0
        %1790 = vmatpush1.msra.mxu0 0.0
        %1791 = vmatprep.subr.mxu0 0.0
        %1792 = vmatpush1.msra.mxu0 0.0
        %1793 = vmatprep.subr.mxu0 0.0
        %1794 = vmatpush1.msra.mxu0 0.0
        %1795 = vmatprep.subr.mxu0 0.0
        %1796 = vmatpush1.msra.mxu0 0.0
        %1797 = vmatprep.subr.mxu0 0.0
        %1798 = vmatpush1.msra.mxu0 %v1616
        %1799 = vmatprep.subr.mxu0 0.0
        %1800 = vmatpush1.msra.mxu0 %v1615
        %1801 = vmatprep.subr.mxu0 0.0
        %1802 = vmatpush1.msra.mxu0 %v1614
        %1803 = vmatprep.subr.mxu0 0.0
        %1804 = vmatpush1.msra.mxu0 %v1613
        %1805 = vmatprep.subr.mxu0 0.0
        %1806 = vmatpush2.msra.mxu0 0.0
        %1807 = vmatprep.subr.mxu0 0.0
        %1808 = vmatpush2.msra.mxu0 0.0
        %1809 = vmatprep.subr.mxu0 0.0
        %1810 = vmatpush2.msra.mxu0 0.0
        %1811 = vmatprep.subr.mxu0 0.0
        %1812 = vmatpush2.msra.mxu0 0.0
        %1813 = vmatprep.subr.mxu0 0.0
        %1814 = vmatpush2.msra.mxu0 0.0
        %1815 = vmatprep.subr.mxu0 0.0
        %1816 = vmatpush2.msra.mxu0 0.0
        %1817 = vmatprep.subr.mxu0 0.0
        %1818 = vmatpush2.msra.mxu0 0.0
        %1819 = vmatprep.subr.mxu0 0.0
        %1820 = vmatpush2.msra.mxu0 0.0
        %1821 = vmatprep.subr.mxu0 0.0
        %1822 = vmatpush2.msra.mxu0 0.0
        %1823 = vmatprep.subr.mxu0 0.0
        %1824 = vmatpush2.msra.mxu0 0.0
        %1825 = vmatprep.subr.mxu0 0.0
        %1826 = vmatpush2.msra.mxu0 0.0
        %1827 = vmatprep.subr.mxu0 0.0
        %1828 = vmatpush2.msra.mxu0 0.0
        %1829 = vmatprep.subr.mxu0 0.0
        %1830 = vmatpush2.msra.mxu0 0.0
        %1831 = vmatprep.subr.mxu0 0.0
        %1832 = vmatpush2.msra.mxu0 0.0
        %1833 = vmatprep.subr.mxu0 0.0
        %1834 = vmatpush2.msra.mxu0 0.0
        %1835 = vmatprep.subr.mxu0 0.0
        %1836 = vmatpush2.msra.mxu0 0.0
        %1837 = vmatprep.mubr.f32.mxu0 0.0
        %1838 = vmatmul.mubr.f32.gmra.mxu0 %v1762
        %v1839 = vpop.f32.mrf.mxu0
        %v1840 = vadd.f32 %v1743, %v1839
        %v1841 = vpop.f32.mrf.mxu0
        %1842 = vmatprep.mubr.f32.mxu0 0.0
        %1843 = vmatmul.mubr.f32.gmra.mxu0 %v1765
        %v1844 = vpop.f32.mrf.mxu0
        %v1845 = vadd.f32 %v1748, %v1844
        %v1846 = vpop.f32.mrf.mxu0
        %1847 = vmatprep.mubr.f32.mxu0 0.0
        %1848 = vmatmul.mubr.f32.gmra.mxu0 %v1768
        %v1849 = vpop.f32.mrf.mxu0
        %v1850 = vadd.f32 %v1753, %v1849
        %v1851 = vpop.f32.mrf.mxu0
        %1852 = vmatprep.mubr.f32.mxu0 0.0
        %1853 = vmatmul.mubr.f32.gmra.mxu0 %v1771
        %v1854 = vpop.f32.mrf.mxu0
        %v1855 = vadd.f32 %v1758, %v1854
        %v1856 = vpop.f32.mrf.mxu0
        %1857 = vdwg.mxu0
        %s1858 = scalar_lea.vmem [#allocation4], 256
        %v1859 = vld [vmem:[%s1858] sm:$0xff]
        %v1860 = vld [vmem:[%s1858 + $0x8] sm:$0xff]
        %v1861 = vld [vmem:[%s1858 + $0x10] sm:$0xff]
        %v1862 = vld [vmem:[%s1858 + $0x18] sm:$0xff]
        %1863 = vrot.lane.b32.xlu0 %v1613, 124
        %v1864 = vpop.permute.xlu0 %1863
        %1865 = vrot.lane.b32.xlu0 %v1614, 124
        %v1866 = vpop.permute.xlu0 %1865
        %1867 = vrot.lane.b32.xlu0 %v1615, 124
        %v1868 = vpop.permute.xlu0 %1867
        %1869 = vrot.lane.b32.xlu0 %v1616, 124
        %v1870 = vpop.permute.xlu0 %1869
        %v1876 = vsel %vm580, %v1859, 0
        %v1879 = vsel %vm580, %v1860, 0
        %v1882 = vsel %vm580, %v1861, 0
        %v1885 = vsel %vm580, %v1862, 0
        %1887 = vmatprep.subr.mxu0 0.0
        %1888 = vmatpush1.msra.mxu0 0.0
        %1889 = vmatprep.subr.mxu0 0.0
        %1890 = vmatpush1.msra.mxu0 0.0
        %1891 = vmatprep.subr.mxu0 0.0
        %1892 = vmatpush1.msra.mxu0 0.0
        %1893 = vmatprep.subr.mxu0 0.0
        %1894 = vmatpush1.msra.mxu0 0.0
        %1895 = vmatprep.subr.mxu0 0.0
        %1896 = vmatpush1.msra.mxu0 0.0
        %1897 = vmatprep.subr.mxu0 0.0
        %1898 = vmatpush1.msra.mxu0 0.0
        %1899 = vmatprep.subr.mxu0 0.0
        %1900 = vmatpush1.msra.mxu0 0.0
        %1901 = vmatprep.subr.mxu0 0.0
        %1902 = vmatpush1.msra.mxu0 0.0
        %1903 = vmatprep.subr.mxu0 0.0
        %1904 = vmatpush1.msra.mxu0 0.0
        %1905 = vmatprep.subr.mxu0 0.0
        %1906 = vmatpush1.msra.mxu0 0.0
        %1907 = vmatprep.subr.mxu0 0.0
        %1908 = vmatpush1.msra.mxu0 0.0
        %1909 = vmatprep.subr.mxu0 0.0
        %1910 = vmatpush1.msra.mxu0 0.0
        %1911 = vmatprep.subr.mxu0 0.0
        %1912 = vmatpush1.msra.mxu0 %v1870
        %1913 = vmatprep.subr.mxu0 0.0
        %1914 = vmatpush1.msra.mxu0 %v1868
        %1915 = vmatprep.subr.mxu0 0.0
        %1916 = vmatpush1.msra.mxu0 %v1866
        %1917 = vmatprep.subr.mxu0 0.0
        %1918 = vmatpush1.msra.mxu0 %v1864
        %1919 = vmatprep.subr.mxu0 0.0
        %1920 = vmatpush2.msra.mxu0 0.0
        %1921 = vmatprep.subr.mxu0 0.0
        %1922 = vmatpush2.msra.mxu0 0.0
        %1923 = vmatprep.subr.mxu0 0.0
        %1924 = vmatpush2.msra.mxu0 0.0
        %1925 = vmatprep.subr.mxu0 0.0
        %1926 = vmatpush2.msra.mxu0 0.0
        %1927 = vmatprep.subr.mxu0 0.0
        %1928 = vmatpush2.msra.mxu0 0.0
        %1929 = vmatprep.subr.mxu0 0.0
        %1930 = vmatpush2.msra.mxu0 0.0
        %1931 = vmatprep.subr.mxu0 0.0
        %1932 = vmatpush2.msra.mxu0 0.0
        %1933 = vmatprep.subr.mxu0 0.0
        %1934 = vmatpush2.msra.mxu0 0.0
        %1935 = vmatprep.subr.mxu0 0.0
        %1936 = vmatpush2.msra.mxu0 0.0
        %1937 = vmatprep.subr.mxu0 0.0
        %1938 = vmatpush2.msra.mxu0 0.0
        %1939 = vmatprep.subr.mxu0 0.0
        %1940 = vmatpush2.msra.mxu0 0.0
        %1941 = vmatprep.subr.mxu0 0.0
        %1942 = vmatpush2.msra.mxu0 0.0
        %1943 = vmatprep.subr.mxu0 0.0
        %1944 = vmatpush2.msra.mxu0 0.0
        %1945 = vmatprep.subr.mxu0 0.0
        %1946 = vmatpush2.msra.mxu0 0.0
        %1947 = vmatprep.subr.mxu0 0.0
        %1948 = vmatpush2.msra.mxu0 0.0
        %1949 = vmatprep.subr.mxu0 0.0
        %1950 = vmatpush2.msra.mxu0 0.0
        %1951 = vmatprep.mubr.f32.mxu0 0.0
        %1952 = vmatmul.mubr.f32.gmra.mxu0 %v1876
        %v1953 = vpop.f32.mrf.mxu0
        %v1954 = vadd.f32 0.0, %v1953
        %v1955 = vpop.f32.mrf.mxu0
        %1956 = vmatprep.mubr.f32.mxu0 0.0
        %1957 = vmatmul.mubr.f32.gmra.mxu0 %v1879
        %v1958 = vpop.f32.mrf.mxu0
        %v1959 = vadd.f32 0.0, %v1958
        %v1960 = vpop.f32.mrf.mxu0
        %1961 = vmatprep.mubr.f32.mxu0 0.0
        %1962 = vmatmul.mubr.f32.gmra.mxu0 %v1882
        %v1963 = vpop.f32.mrf.mxu0
        %v1964 = vadd.f32 0.0, %v1963
        %v1965 = vpop.f32.mrf.mxu0
        %1966 = vmatprep.mubr.f32.mxu0 0.0
        %1967 = vmatmul.mubr.f32.gmra.mxu0 %v1885
        %v1968 = vpop.f32.mrf.mxu0
        %v1969 = vadd.f32 0.0, %v1968
        %v1970 = vpop.f32.mrf.mxu0
        %1971 = vdwg.mxu0
        %v1972 = vadd.f32 %v1840, %v1954
        %v1973 = vadd.f32 %v1845, %v1959
        %v1974 = vadd.f32 %v1850, %v1964
        %v1975 = vadd.f32 %v1855, %v1969
        %s1976 = scalar_lea.vmem %s5, 64
        %v1977 = vld [vmem:[%s1976] sm:$0xff]
        %v1978 = vld [vmem:[%s1976 + $0x8] sm:$0xff]
        %v1979 = vld [vmem:[%s1976 + $0x10] sm:$0xff]
        %v1980 = vld [vmem:[%s1976 + $0x18] sm:$0xff]
        %1982 = vset.pattern.permute.xlu0 0
        %1983 = vperm.xlu0 %1982, %v1977
        %v1984 = vpop.permute.xlu0 %1983
        %1987 = vset.pattern.permute.xlu0 0
        %1988 = vperm.xlu0 %1987, %v1978
        %v1989 = vpop.permute.xlu0 %1988
        %1992 = vset.pattern.permute.xlu0 0
        %1993 = vperm.xlu0 %1992, %v1979
        %v1994 = vpop.permute.xlu0 %1993
        %1997 = vset.pattern.permute.xlu0 0
        %1998 = vperm.xlu0 %1997, %v1980
        %v1999 = vpop.permute.xlu0 %1998
        %v2001 = vadd.f32 %v1972, %v1984
        %v2002 = vadd.f32 %v1973, %v1989
        %v2003 = vadd.f32 %v1974, %v1994
        %v2004 = vadd.f32 %v1975, %v1999
        %v2005 = vmax.f32 %v2001, 0.0
        %v2006 = vmax.f32 %v2002, 0.0
        %v2007 = vmax.f32 %v2003, 0.0
        %v2008 = vmax.f32 %v2004, 0.0
        %s2009 = scalar_lea.vmem %s6, 64
        %v2010 = vld [vmem:[%s2009] sm:$0xff]
        %v2011 = vld [vmem:[%s2009 + $0x8] sm:$0xff]
        %v2012 = vld [vmem:[%s2009 + $0x10] sm:$0xff]
        %v2013 = vld [vmem:[%s2009 + $0x18] sm:$0xff]
        %s2014 = scalar_lea.vmem %s7, 64
        %v2015 = vld [vmem:[%s2014] sm:$0xff]
        %v2016 = vld [vmem:[%s2014 + $0x8] sm:$0xff]
        %v2017 = vld [vmem:[%s2014 + $0x10] sm:$0xff]
        %v2018 = vld [vmem:[%s2014 + $0x18] sm:$0xff]
        %2020 = vset.pattern.permute.xlu0 0
        %2021 = vperm.xlu0 %2020, %v2015
        %v2022 = vpop.permute.xlu0 %2021
        %2025 = vset.pattern.permute.xlu0 0
        %2026 = vperm.xlu0 %2025, %v2016
        %v2027 = vpop.permute.xlu0 %2026
        %2030 = vset.pattern.permute.xlu0 0
        %2031 = vperm.xlu0 %2030, %v2017
        %v2032 = vpop.permute.xlu0 %2031
        %2035 = vset.pattern.permute.xlu0 0
        %2036 = vperm.xlu0 %2035, %v2018
        %v2037 = vpop.permute.xlu0 %2036
        %v2040 = vsel %vm580, %v2010, 0
        %v2043 = vsel %vm580, %v2011, 0
        %v2046 = vsel %vm580, %v2012, 0
        %v2049 = vsel %vm580, %v2013, 0
        %2051 = vmatprep.subr.mxu0 0.0
        %2052 = vmatpush1.msra.mxu0 0.0
        %2053 = vmatprep.subr.mxu0 0.0
        %2054 = vmatpush1.msra.mxu0 0.0
        %2055 = vmatprep.subr.mxu0 0.0
        %2056 = vmatpush1.msra.mxu0 0.0
        %2057 = vmatprep.subr.mxu0 0.0
        %2058 = vmatpush1.msra.mxu0 0.0
        %2059 = vmatprep.subr.mxu0 0.0
        %2060 = vmatpush1.msra.mxu0 0.0
        %2061 = vmatprep.subr.mxu0 0.0
        %2062 = vmatpush1.msra.mxu0 0.0
        %2063 = vmatprep.subr.mxu0 0.0
        %2064 = vmatpush1.msra.mxu0 0.0
        %2065 = vmatprep.subr.mxu0 0.0
        %2066 = vmatpush1.msra.mxu0 0.0
        %2067 = vmatprep.subr.mxu0 0.0
        %2068 = vmatpush1.msra.mxu0 0.0
        %2069 = vmatprep.subr.mxu0 0.0
        %2070 = vmatpush1.msra.mxu0 0.0
        %2071 = vmatprep.subr.mxu0 0.0
        %2072 = vmatpush1.msra.mxu0 0.0
        %2073 = vmatprep.subr.mxu0 0.0
        %2074 = vmatpush1.msra.mxu0 0.0
        %2075 = vmatprep.subr.mxu0 0.0
        %2076 = vmatpush1.msra.mxu0 %v2008
        %2077 = vmatprep.subr.mxu0 0.0
        %2078 = vmatpush1.msra.mxu0 %v2007
        %2079 = vmatprep.subr.mxu0 0.0
        %2080 = vmatpush1.msra.mxu0 %v2006
        %2081 = vmatprep.subr.mxu0 0.0
        %2082 = vmatpush1.msra.mxu0 %v2005
        %2083 = vmatprep.subr.mxu0 0.0
        %2084 = vmatpush2.msra.mxu0 0.0
        %2085 = vmatprep.subr.mxu0 0.0
        %2086 = vmatpush2.msra.mxu0 0.0
        %2087 = vmatprep.subr.mxu0 0.0
        %2088 = vmatpush2.msra.mxu0 0.0
        %2089 = vmatprep.subr.mxu0 0.0
        %2090 = vmatpush2.msra.mxu0 0.0
        %2091 = vmatprep.subr.mxu0 0.0
        %2092 = vmatpush2.msra.mxu0 0.0
        %2093 = vmatprep.subr.mxu0 0.0
        %2094 = vmatpush2.msra.mxu0 0.0
        %2095 = vmatprep.subr.mxu0 0.0
        %2096 = vmatpush2.msra.mxu0 0.0
        %2097 = vmatprep.subr.mxu0 0.0
        %2098 = vmatpush2.msra.mxu0 0.0
        %2099 = vmatprep.subr.mxu0 0.0
        %2100 = vmatpush2.msra.mxu0 0.0
        %2101 = vmatprep.subr.mxu0 0.0
        %2102 = vmatpush2.msra.mxu0 0.0
        %2103 = vmatprep.subr.mxu0 0.0
        %2104 = vmatpush2.msra.mxu0 0.0
        %2105 = vmatprep.subr.mxu0 0.0
        %2106 = vmatpush2.msra.mxu0 0.0
        %2107 = vmatprep.subr.mxu0 0.0
        %2108 = vmatpush2.msra.mxu0 0.0
        %2109 = vmatprep.subr.mxu0 0.0
        %2110 = vmatpush2.msra.mxu0 0.0
        %2111 = vmatprep.subr.mxu0 0.0
        %2112 = vmatpush2.msra.mxu0 0.0
        %2113 = vmatprep.subr.mxu0 0.0
        %2114 = vmatpush2.msra.mxu0 0.0
        %2115 = vmatprep.mubr.f32.mxu0 0.0
        %2116 = vmatmul.mubr.f32.gmra.mxu0 %v2040
        %v2117 = vpop.f32.mrf.mxu0
        %v2118 = vadd.f32 %v2022, %v2117
        %v2119 = vpop.f32.mrf.mxu0
        %2120 = vmatprep.mubr.f32.mxu0 0.0
        %2121 = vmatmul.mubr.f32.gmra.mxu0 %v2043
        %v2122 = vpop.f32.mrf.mxu0
        %v2123 = vadd.f32 %v2027, %v2122
        %v2124 = vpop.f32.mrf.mxu0
        %2125 = vmatprep.mubr.f32.mxu0 0.0
        %2126 = vmatmul.mubr.f32.gmra.mxu0 %v2046
        %v2127 = vpop.f32.mrf.mxu0
        %v2128 = vadd.f32 %v2032, %v2127
        %v2129 = vpop.f32.mrf.mxu0
        %2130 = vmatprep.mubr.f32.mxu0 0.0
        %2131 = vmatmul.mubr.f32.gmra.mxu0 %v2049
        %v2132 = vpop.f32.mrf.mxu0
        %v2133 = vadd.f32 %v2037, %v2132
        %v2134 = vpop.f32.mrf.mxu0
        %2135 = vdwg.mxu0
        %v2136 = vld [vmem:[#allocation3] sm:$0xff]
        %v2137 = vld [vmem:[#allocation3 + $0x8] sm:$0xff]
        %v2138 = vld [vmem:[#allocation3 + $0x10] sm:$0xff]
        %v2139 = vld [vmem:[#allocation3 + $0x18] sm:$0xff]
        %v2140 = vadd.f32 %v2136, %v2118
        %v2141 = vadd.f32 %v2137, %v2123
        %v2142 = vadd.f32 %v2138, %v2128
        %v2143 = vadd.f32 %v2139, %v2133
        %2144 = vst.msk [vmem:[#allocation3] sm:$0xff] %vm521, %v2140
        %2145 = vst.msk [vmem:[#allocation3 + $0x8] sm:$0xff] %vm521, %v2141
        %2146 = vst.msk [vmem:[#allocation3 + $0x10] sm:$0xff] %vm521, %v2142
        %2147 = vst.msk [vmem:[#allocation3 + $0x18] sm:$0xff] %vm521, %v2143
        %v2148 = vld [vmem:[#allocation3] sm:$0xff]
        %v2149 = vld [vmem:[#allocation3 + $0x8] sm:$0xff]
        %v2150 = vld [vmem:[#allocation3 + $0x10] sm:$0xff]
        %v2151 = vld [vmem:[#allocation3 + $0x18] sm:$0xff]
        %v2152 = vld [vmem:[%s8] sm:$0x3f]
        %v2153 = vld [vmem:[%s9] sm:$0x3f]
        %2155 = vset.pattern.permute.xlu0 0
        %2156 = vperm.xlu0 %2155, %v2153
        %v2157 = vpop.permute.xlu0 %2156
        %v2160 = vsel %vm580, %v2152, 0
        %2162 = vmatprep.subr.mxu0 0.0
        %2163 = vmatpush1.msra.mxu0 0.0
        %2164 = vmatprep.subr.mxu0 0.0
        %2165 = vmatpush1.msra.mxu0 0.0
        %2166 = vmatprep.subr.mxu0 0.0
        %2167 = vmatpush1.msra.mxu0 0.0
        %2168 = vmatprep.subr.mxu0 0.0
        %2169 = vmatpush1.msra.mxu0 0.0
        %2170 = vmatprep.subr.mxu0 0.0
        %2171 = vmatpush1.msra.mxu0 0.0
        %2172 = vmatprep.subr.mxu0 0.0
        %2173 = vmatpush1.msra.mxu0 0.0
        %2174 = vmatprep.subr.mxu0 0.0
        %2175 = vmatpush1.msra.mxu0 0.0
        %2176 = vmatprep.subr.mxu0 0.0
        %2177 = vmatpush1.msra.mxu0 0.0
        %2178 = vmatprep.subr.mxu0 0.0
        %2179 = vmatpush1.msra.mxu0 0.0
        %2180 = vmatprep.subr.mxu0 0.0
        %2181 = vmatpush1.msra.mxu0 0.0
        %2182 = vmatprep.subr.mxu0 0.0
        %2183 = vmatpush1.msra.mxu0 0.0
        %2184 = vmatprep.subr.mxu0 0.0
        %2185 = vmatpush1.msra.mxu0 0.0
        %2186 = vmatprep.subr.mxu0 0.0
        %2187 = vmatpush1.msra.mxu0 %v2151
        %2188 = vmatprep.subr.mxu0 0.0
        %2189 = vmatpush1.msra.mxu0 %v2150
        %2190 = vmatprep.subr.mxu0 0.0
        %2191 = vmatpush1.msra.mxu0 %v2149
        %2192 = vmatprep.subr.mxu0 0.0
        %2193 = vmatpush1.msra.mxu0 %v2148
        %2194 = vmatprep.subr.mxu0 0.0
        %2195 = vmatpush2.msra.mxu0 0.0
        %2196 = vmatprep.subr.mxu0 0.0
        %2197 = vmatpush2.msra.mxu0 0.0
        %2198 = vmatprep.subr.mxu0 0.0
        %2199 = vmatpush2.msra.mxu0 0.0
        %2200 = vmatprep.subr.mxu0 0.0
        %2201 = vmatpush2.msra.mxu0 0.0
        %2202 = vmatprep.subr.mxu0 0.0
        %2203 = vmatpush2.msra.mxu0 0.0
        %2204 = vmatprep.subr.mxu0 0.0
        %2205 = vmatpush2.msra.mxu0 0.0
        %2206 = vmatprep.subr.mxu0 0.0
        %2207 = vmatpush2.msra.mxu0 0.0
        %2208 = vmatprep.subr.mxu0 0.0
        %2209 = vmatpush2.msra.mxu0 0.0
        %2210 = vmatprep.subr.mxu0 0.0
        %2211 = vmatpush2.msra.mxu0 0.0
        %2212 = vmatprep.subr.mxu0 0.0
        %2213 = vmatpush2.msra.mxu0 0.0
        %2214 = vmatprep.subr.mxu0 0.0
        %2215 = vmatpush2.msra.mxu0 0.0
        %2216 = vmatprep.subr.mxu0 0.0
        %2217 = vmatpush2.msra.mxu0 0.0
        %2218 = vmatprep.subr.mxu0 0.0
        %2219 = vmatpush2.msra.mxu0 0.0
        %2220 = vmatprep.subr.mxu0 0.0
        %2221 = vmatpush2.msra.mxu0 0.0
        %2222 = vmatprep.subr.mxu0 0.0
        %2223 = vmatpush2.msra.mxu0 0.0
        %2224 = vmatprep.subr.mxu0 0.0
        %2225 = vmatpush2.msra.mxu0 0.0
        %2226 = vmatprep.mubr.f32.mxu0 0.0
        %2227 = vmatmul.mubr.f32.gmra.mxu0 %v2160
        %v2228 = vpop.f32.mrf.mxu0
        %v2229 = vadd.f32 %v2157, %v2228
        %v2230 = vpop.f32.mrf.mxu0
        %2231 = vdwg.mxu0
        %v2232 = vld [vmem:[%s379] sm:$0x1]
        %v2234 = vlaneseq
        %v2235 = vshrl.u32 %v2234, 7
        %v2236 = vsub.s32 0, %v2235
        %v2237 = vrot.slane %v2232, %v2236
        %v2239 = vmul.f32 %v2229, %v2237
        %vm2240 = vcmask 128000
        %2241 = vst.msk [vmem:[%s383] sm:$0x3f] %vm2240, %v2239
        %p2242 = scmp.lt.s32.totalorder %s22, 1
        %s2243 = scalar_select %p2242, %s22, 1
        %s2244 = smul.addr %s2243, 8
        %s2245 = scalar_lea.vmem %s10, %s2244
        // Predicated region
        $region65: #{tpu_custom_call.1} parent=59 // pred_check
          %p2246 = pneg %p260
        $region66: #{tpu_custom_call.1} parent=59 // pred_check_branch
          %2248 = sbr.rel (%p2246) target = $region68
        $region67: #{tpu_custom_call.1} parent=59 // pred_region
          _
        $region68: #{tpu_custom_call.1} parent=59 // pred_fallthru
          _
      $region60: #{tpu_custom_call.1} parent=5 // pred_fallthru
        _
      %p2249 = scmp.le.s32.totalorder 2, %s17
      // Predicated region
      $region69: #{tpu_custom_call.1} parent=5 // pred_check
        %p2250 = pneg %p2249
      $region70: #{tpu_custom_call.1} parent=5 // pred_check_branch
        %2252 = sbr.rel (%p2250) target = $region72
      $region71: #{tpu_custom_call.1} parent=5 // pred_region
        %s2253 = ssub.s32 %s17, 2
        // Predicated region
        $region73: #{tpu_custom_call.1} parent=71 // pred_check
          %p2254 = pneg %p266
        $region74: #{tpu_custom_call.1} parent=71 // pred_check_branch
          %2256 = sbr.rel (%p2254) target = $region76
        $region75: #{tpu_custom_call.1} parent=71 // pred_region
          %p2257 = scmp.lt.s32.totalorder %s23, 1
          %s2258 = scalar_select %p2257, %s23, 1
          %s2259 = smul.addr %s2258, 8
          %s2260 = scalar_lea.vmem %s10, %s2259
        $region76: #{tpu_custom_call.1} parent=71 // pred_fallthru
          _
      $region72: #{tpu_custom_call.1} parent=5 // pred_fallthru
        _
    $region6: #{tpu_custom_call.1} parent=1 // loop_footer
      %s21 = sadd.s32 1, %s17
    $region7: #{tpu_custom_call.1} parent=1 // loop_footer_branch
      %16 = sbr.rel target = $region3
    $region8: #{tpu_custom_call.1} parent=1 // loop_exit
      _
    %2261 = vsyncpa [#allocation5], 1
    %s2262 = scalar_lea.sflag [#allocation5], 1
    %2263 = vsyncpa %s2262, 1

</llo_original>
